<compile_context>
chip_gen: v7x
topology: tpu7x:2x2x1
jax: 0.10.0
libtpu: 0.0.40
codegen_flags: <defaults>
</compile_context>

<pallas_src>
import functools

import numpy as np
import jax
import jax.numpy as jnp
from jax.experimental import pallas as pl
from jax.experimental.pallas import tpu as pltpu


# ----------------------------------------------------------------------------
# One-time host-side parameter repacking (K-concatenated Toeplitz conv
# weights, pooled-layout biases, permuted / lane-padded fc weights).
# ----------------------------------------------------------------------------
def _conv1_weight(w1):
    """w1 (5,5,1,6) HWIO -> (160, 168) K-concatenated width-Toeplitz matrix.

    Row index     = kh*32 + (input column j + kw)   (the kernel feeds an LHS
                    whose lane chunk kh holds the image rows shifted up by kh).
    Output column = (j % 2)*84 + c*14 + (j // 2), so the 2x2 width pool is
    max(cols[:84], cols[84:]) and the pooled lanes land in (channel, width)
    order, which is exactly conv2's expected input layout.
    """
    w = np.asarray(w1, np.float32)
    t = np.zeros((5 * 32, 2 * 6 * 14), np.float32)
    for kh in range(5):
        for j in range(28):
            col0 = (j % 2) * 84 + (j // 2)
            for kw in range(5):
                for c in range(6):
                    t[kh * 32 + j + kw, col0 + c * 14] = w[kh, kw, 0, c]
    return jnp.asarray(t)


def _conv2_weight(w2):
    """w2 (5,5,6,16) HWIO -> (420, 160); input lanes (within each kh chunk of
    84) are ci*14 + w, output column = (j % 2)*80 + co*5 + (j // 2)."""
    w = np.asarray(w2, np.float32)
    t = np.zeros((5 * 84, 2 * 16 * 5), np.float32)
    for kh in range(5):
        for j in range(10):
            col0 = (j % 2) * 80 + (j // 2)
            for kw in range(5):
                for ci in range(6):
                    for co in range(16):
                        t[kh * 84 + ci * 14 + j + kw, col0 + co * 5] = w[kh, kw, ci, co]
    return jnp.asarray(t)


def _pooled_bias(b, pooled_width):
    """Per-channel bias broadcast to the pooled channel-major lane layout."""
    return jnp.asarray(
        np.repeat(np.asarray(b, np.float32).reshape(-1), pooled_width)[None, :])


def _pad2(a, rows, cols):
    a = np.asarray(a, np.float32)
    out = np.zeros((rows, cols), np.float32)
    out[: a.shape[0], : a.shape[1]] = a
    return jnp.asarray(out)


def prepare_lenet_params(params):
    """Repack torch-layout params into the kernel layout (call once, not jitted)."""
    nc = params["fw3"].shape[1]
    ncp = ((nc + 127) // 128) * 128

    # torch flattens the (B,16,5,5) NCHW feature as (c,h,w); the kernel builds
    # its feature row as (h,c,w) -> permute fc1's rows once here (free at init).
    fw1 = np.asarray(params["fw1"], np.float32)            # (400, 120), (c,h,w) rows
    perm = np.zeros(400, np.int32)
    for h in range(5):
        for c in range(16):
            for w in range(5):
                perm[h * 80 + c * 5 + w] = c * 25 + h * 5 + w
    fw1_perm = fw1[perm]

    return {
        "w1c": _conv1_weight(params["w1"]),       # (160, 168)
        "b1h": _pooled_bias(params["b1"], 14),    # (1, 84)
        "w2c": _conv2_weight(params["w2"]),       # (420, 160)
        "b2h": _pooled_bias(params["b2"], 5),     # (1, 80)
        "fw1p": _pad2(fw1_perm, 400, 128),        # zero-padded 120 -> 128 lanes
        "fb1p": _pad2(params["fb1"], 1, 128),
        "fw2p": _pad2(params["fw2"], 128, 128),   # zero rows kill the pad lanes
        "fb2p": _pad2(params["fb2"], 1, 128),
        "fw3p": _pad2(params["fw3"], 128, ncp),
        "fb3p": _pad2(params["fb3"], 1, ncp),
    }


# ----------------------------------------------------------------------------
# Fused kernel
# ----------------------------------------------------------------------------
def _sigmoid(x):
    # Single EUP op (tanh) per element; exact sigmoid identity.
    return 0.5 * jnp.tanh(0.5 * x) + 0.5


def _shift_rows_up(x, k):
    """shift_rows_up(x, k)[r] = x[r + k]; rows past the end become zeros.

    Used to build the height-im2col K chunks.  The zero / wrapped rows only
    ever feed conv output rows that the valid-row bookkeeping discards.
    """
    if k == 0:
        return x
    return jnp.concatenate(
        [x[k:, :], jnp.zeros((k, x.shape[1]), x.dtype)], axis=0)


def _lenet_fused_kernel(x_ref, w1_ref, b1_ref, w2_ref, b2_ref,
                        fw1_ref, fb1_ref, fw2_ref, fb2_ref, fw3_ref, fb3_ref,
                        o_ref, y1_ref, y2_ref):
    """Full LeNet forward for one block of `bb` images, stage-batched.

    x_ref  : (bb*32, 32)  stacked input rows (Cin==1 squeezed)
    w1_ref : (160, 168)   conv1 K-concat Toeplitz weights   b1_ref: (1, 84)
    w2_ref : (420, 160)   conv2 K-concat Toeplitz weights   b2_ref: (1, 80)
    fw*/fb*: fc weights/biases, zero-padded to 128 lanes
    o_ref  : (bb, ncp)    logits block (lane- and sublane-dense store)
    y1_ref : (bb*32, 84)  VMEM scratch, conv1 width-pooled pre-activation
    y2_ref : (bb*16, 80)  VMEM scratch, conv2 width-pooled pre-activation
    """
    rows1 = x_ref.shape[0]            # bb * 32
    bb = rows1 // 32
    rows2 = bb * 16

    x = x_ref[...]                                                    # (bb*32, 32)

    # ---- conv1 (5x5, 1->6): ONE MXU matmul, K = 5*32 = 160 ------------------
    lhs1 = jnp.concatenate([_shift_rows_up(x, kh) for kh in range(5)], axis=1)
    acc1 = jnp.dot(lhs1, w1_ref[...],
                   preferred_element_type=jnp.float32)                # (bb*32, 168)
    # valid conv rows per image: 0..27 (rows 28..31 are discarded below)

    # ---- 2x2 max-pool BEFORE bias+sigmoid -----------------------------------
    # width pool: the two halves of the 168 lanes are the even/odd columns.
    y1_ref[...] = jnp.maximum(acc1[:, 0:84], acc1[:, 84:168])
    # height pool: stride-2 sublane reads (rows never cross an image boundary).
    hmax1 = jnp.maximum(y1_ref[pl.ds(0, rows2, stride=2), :],
                        y1_ref[pl.ds(1, rows2, stride=2), :])         # (bb*16, 84)
    a1 = _sigmoid(hmax1 + b1_ref[...])     # (bb*16, 84); rows 14,15/img garbage

    # ---- conv2 (5x5, 6->16): ONE MXU matmul, K = 5*84 = 420 -----------------
    lhs2 = jnp.concatenate([_shift_rows_up(a1, kh) for kh in range(5)], axis=1)
    acc2 = jnp.dot(lhs2, w2_ref[...],
                   preferred_element_type=jnp.float32)                # (bb*16, 160)
    # valid conv rows per image: 0..9

    y2_ref[...] = jnp.maximum(acc2[:, 0:80], acc2[:, 80:160])         # width pool

    # ---- height pool + feature gather + sigmoid (valid rows only) -----------
    # For pooled row h (0..4) take conv rows 2h, 2h+1 of every image via a
    # stride-16 read across the block; concat over h gives the (h, c, w)
    # ordering that fw1p's rows were permuted to match.
    feats = []
    for h in range(5):
        ph = jnp.maximum(y2_ref[pl.ds(2 * h, bb, stride=16), :],
                         y2_ref[pl.ds(2 * h + 1, bb, stride=16), :])  # (bb, 80)
        feats.append(_sigmoid(ph + b2_ref[...]))
    feat = jnp.concatenate(feats, axis=1)                             # (bb, 400)

    # ---- fc stack, batched over the whole block (M = bb) --------------------
    z = _sigmoid(jnp.dot(feat, fw1_ref[...],
                         preferred_element_type=jnp.float32) + fb1_ref[...])
    z = _sigmoid(jnp.dot(z, fw2_ref[...],
                         preferred_element_type=jnp.float32) + fb2_ref[...])
    o_ref[...] = (jnp.dot(z, fw3_ref[...],
                          preferred_element_type=jnp.float32) + fb3_ref[...])


def _choose_block(batch):
    """Images per grid block and the zero-padded batch size.

    Blocks are multiples of 8 (dense sublane output stores and (8,128)-legal
    BlockSpecs), capped at 32 to bound VMEM temporaries (well under the 32 MiB
    scoped default on every generation).  Keep >= 2 grid blocks once the batch
    is large enough so v7x can shard the parallel axis across its two TCs.
    """
    if batch <= 8:
        bb = 8
    elif batch <= 64:
        bb = 8 * ((batch + 15) // 16)        # ~2 blocks, rounded to mult. of 8
    else:
        bb = 32
    padded = ((batch + bb - 1) // bb) * bb
    return bb, padded


@functools.partial(jax.jit, static_argnums=(2,))
def lenet_forward(kparams, img, num_classes):
    """img: (B, 1, 32, 32) NCHW float32, like the PyTorch module."""
    batch = img.shape[0]
    bb, padded = _choose_block(batch)

    x = img.reshape(batch, 32, 32)             # Cin == 1: drop the channel dim
    if padded != batch:                        # pad ragged batches with zeros
        x = jnp.concatenate(
            [x, jnp.zeros((padded - batch, 32, 32), x.dtype)], axis=0)
    x = x.reshape(padded * 32, 32)             # stacked image rows

    grid = (padded // bb,)
    ncp = kparams["fw3p"].shape[1]

    out = pl.pallas_call(
        _lenet_fused_kernel,
        out_shape=jax.ShapeDtypeStruct((padded, ncp), jnp.float32),
        grid_spec=pltpu.PrefetchScalarGridSpec(
            num_scalar_prefetch=0,
            grid=grid,
            in_specs=[
                pl.BlockSpec((bb * 32, 32), lambda g: (g, 0)),
                pl.BlockSpec((160, 168), lambda g: (0, 0)),
                pl.BlockSpec((1, 84), lambda g: (0, 0)),
                pl.BlockSpec((420, 160), lambda g: (0, 0)),
                pl.BlockSpec((1, 80), lambda g: (0, 0)),
                pl.BlockSpec((400, 128), lambda g: (0, 0)),
                pl.BlockSpec((1, 128), lambda g: (0, 0)),
                pl.BlockSpec((128, 128), lambda g: (0, 0)),
                pl.BlockSpec((1, 128), lambda g: (0, 0)),
                pl.BlockSpec((128, ncp), lambda g: (0, 0)),
                pl.BlockSpec((1, ncp), lambda g: (0, 0)),
            ],
            out_specs=pl.BlockSpec((bb, ncp), lambda g: (g, 0)),
            scratch_shapes=[
                pltpu.VMEM((bb * 32, 84), jnp.float32),
                pltpu.VMEM((bb * 16, 80), jnp.float32),
            ],
        ),
        compiler_params=pltpu.CompilerParams(
            dimension_semantics=("parallel",)),
    )(x, kparams["w1c"], kparams["b1h"], kparams["w2c"], kparams["b2h"],
      kparams["fw1p"], kparams["fb1p"], kparams["fw2p"], kparams["fb2p"],
      kparams["fw3p"], kparams["fb3p"])

    return out[:batch, :num_classes]


# ----------------------------------------------------------------------------
# Parameters (torch-equivalent layout) and pure-JAX reference
# ----------------------------------------------------------------------------
def init_lenet_params(key, num_classes):
    ks = jax.random.split(key, 10)

    def u(k, shape, fan_in):
        bound = 1.0 / (fan_in ** 0.5)
        return jax.random.uniform(k, shape, jnp.float32, -bound, bound)

    return {
        # conv weights HWIO; fc1 rows ordered like torch's NCHW flatten (c,h,w)
        "w1": u(ks[0], (5, 5, 1, 6), 1 * 5 * 5),
        "b1": u(ks[1], (1, 6), 1 * 5 * 5),
        "w2": u(ks[2], (5, 5, 6, 16), 6 * 5 * 5),
        "b2": u(ks[3], (1, 16), 6 * 5 * 5),
        "fw1": u(ks[4], (16 * 5 * 5, 120), 16 * 5 * 5),
        "fb1": u(ks[5], (1, 120), 16 * 5 * 5),
        "fw2": u(ks[6], (120, 84), 120),
        "fb2": u(ks[7], (1, 84), 120),
        "fw3": u(ks[8], (84, num_classes), 84),
        "fb3": u(ks[9], (1, num_classes), 84),
    }


def lenet_reference(params, img):
    """Pure-JAX reference matching the PyTorch module semantics."""
    x = jnp.transpose(img, (0, 2, 3, 1))

    def conv_block(x, w, b):
        y = jax.lax.conv_general_dilated(
            x, w, window_strides=(1, 1), padding="VALID",
            dimension_numbers=("NHWC", "HWIO", "NHWC"),
            precision=jax.lax.Precision.HIGHEST) + b
        y = jax.nn.sigmoid(y)
        return jax.lax.reduce_window(y, -jnp.inf, jax.lax.max,
                                     (1, 2, 2, 1), (1, 2, 2, 1), "VALID")

    x = conv_block(x, params["w1"], params["b1"])
    x = conv_block(x, params["w2"], params["b2"])
    feat = jnp.transpose(x, (0, 3, 1, 2)).reshape(img.shape[0], -1)
    h = jax.nn.sigmoid(feat @ params["fw1"] + params["fb1"])
    h = jax.nn.sigmoid(h @ params["fw2"] + params["fb2"])
    return h @ params["fw3"] + params["fb3"]


if __name__ == "__main__":
    num_classes = 10
    batch = 2
    key = jax.random.PRNGKey(0)
    pkey, xkey = jax.random.split(key)

    params = init_lenet_params(pkey, num_classes)
    kparams = prepare_lenet_params(params)       # one-time host-side repack
    img = jax.random.normal(xkey, (batch, 1, 32, 32), jnp.float32)  # LeNet_32

    out = jax.block_until_ready(lenet_forward(kparams, img, num_classes))
    ref = jax.block_until_ready(lenet_reference(params, img))

    assert out.shape == (batch, num_classes), out.shape
    max_err = float(jnp.max(jnp.abs(out - ref)))
    # exact tanh-based sigmoid: only matmul-reassociation level differences
    assert max_err < 1e-3, max_err
    print("KERNEL_OK")
</pallas_src>

<mosaic_0001>
module attributes {stable_mosaic.version = 11 : i64} {
  func.func @_lenet_fused_kernel(%arg0: i32, %arg1: memref<256x32xf32, #tpu.memory_space<vmem>>, %arg2: memref<160x168xf32, #tpu.memory_space<vmem>>, %arg3: memref<1x84xf32, #tpu.memory_space<vmem>>, %arg4: memref<420x160xf32, #tpu.memory_space<vmem>>, %arg5: memref<1x80xf32, #tpu.memory_space<vmem>>, %arg6: memref<400x128xf32, #tpu.memory_space<vmem>>, %arg7: memref<1x128xf32, #tpu.memory_space<vmem>>, %arg8: memref<128x128xf32, #tpu.memory_space<vmem>>, %arg9: memref<1x128xf32, #tpu.memory_space<vmem>>, %arg10: memref<128x128xf32, #tpu.memory_space<vmem>>, %arg11: memref<1x128xf32, #tpu.memory_space<vmem>>, %arg12: memref<8x128xf32, #tpu.memory_space<vmem>>, %arg13: memref<256x84xf32, #tpu.memory_space<vmem>>, %arg14: memref<128x80xf32, #tpu.memory_space<vmem>>) attributes {dimension_semantics = [#tpu.dimension_semantics<parallel>], iteration_bounds = array<i64: 1>, scalar_prefetch = 0 : i64, scratch_operands = 2 : i64, tpu.core_type = #tpu.core_type<tc>, window_params = [{transform_indices = @transform_0, window_bounds = array<i64: 256, 32>}, {pipeline_mode = #tpu.pipeline_mode<synchronous>, transform_indices = @transform_1, window_bounds = array<i64: 160, 168>}, {pipeline_mode = #tpu.pipeline_mode<synchronous>, transform_indices = @transform_2, window_bounds = array<i64: 1, 84>}, {pipeline_mode = #tpu.pipeline_mode<synchronous>, transform_indices = @transform_3, window_bounds = array<i64: 420, 160>}, {pipeline_mode = #tpu.pipeline_mode<synchronous>, transform_indices = @transform_4, window_bounds = array<i64: 1, 80>}, {pipeline_mode = #tpu.pipeline_mode<synchronous>, transform_indices = @transform_5, window_bounds = array<i64: 400, 128>}, {pipeline_mode = #tpu.pipeline_mode<synchronous>, transform_indices = @transform_6, window_bounds = array<i64: 1, 128>}, {pipeline_mode = #tpu.pipeline_mode<synchronous>, transform_indices = @transform_7, window_bounds = array<i64: 128, 128>}, {pipeline_mode = #tpu.pipeline_mode<synchronous>, transform_indices = @transform_8, window_bounds = array<i64: 1, 128>}, {pipeline_mode = #tpu.pipeline_mode<synchronous>, transform_indices = @transform_9, window_bounds = array<i64: 128, 128>}, {pipeline_mode = #tpu.pipeline_mode<synchronous>, transform_indices = @transform_10, window_bounds = array<i64: 1, 128>}, {transform_indices = @transform_11, window_bounds = array<i64: 8, 128>}]} {
    %c0 = arith.constant 0 : index
    %c0_0 = arith.constant 0 : index
    %0 = vector.load %arg1[%c0, %c0_0] : memref<256x32xf32, #tpu.memory_space<vmem>>, vector<256x32xf32>
    %1 = vector.extract_strided_slice %0 {offsets = [1, 0], sizes = [255, 32], strides = [1, 1]} : vector<256x32xf32> to vector<255x32xf32>
    %cst = arith.constant 0.000000e+00 : f32
    %2 = vector.broadcast %cst : f32 to vector<1x32xf32>
    %3 = tpu.concatenate %1, %2 in 0 : vector<255x32xf32>, vector<1x32xf32> -> vector<256x32xf32>
    %4 = vector.extract_strided_slice %0 {offsets = [2, 0], sizes = [254, 32], strides = [1, 1]} : vector<256x32xf32> to vector<254x32xf32>
    %cst_1 = arith.constant 0.000000e+00 : f32
    %5 = vector.broadcast %cst_1 : f32 to vector<2x32xf32>
    %6 = tpu.concatenate %4, %5 in 0 : vector<254x32xf32>, vector<2x32xf32> -> vector<256x32xf32>
    %7 = vector.extract_strided_slice %0 {offsets = [3, 0], sizes = [253, 32], strides = [1, 1]} : vector<256x32xf32> to vector<253x32xf32>
    %cst_2 = arith.constant 0.000000e+00 : f32
    %8 = vector.broadcast %cst_2 : f32 to vector<3x32xf32>
    %9 = tpu.concatenate %7, %8 in 0 : vector<253x32xf32>, vector<3x32xf32> -> vector<256x32xf32>
    %10 = vector.extract_strided_slice %0 {offsets = [4, 0], sizes = [252, 32], strides = [1, 1]} : vector<256x32xf32> to vector<252x32xf32>
    %cst_3 = arith.constant 0.000000e+00 : f32
    %11 = vector.broadcast %cst_3 : f32 to vector<4x32xf32>
    %12 = tpu.concatenate %10, %11 in 0 : vector<252x32xf32>, vector<4x32xf32> -> vector<256x32xf32>
    %13 = tpu.concatenate %0, %3, %6, %9, %12 in 1 : vector<256x32xf32>, vector<256x32xf32>, vector<256x32xf32>, vector<256x32xf32>, vector<256x32xf32> -> vector<256x160xf32>
    %c0_4 = arith.constant 0 : index
    %c0_5 = arith.constant 0 : index
    %14 = vector.load %arg2[%c0_4, %c0_5] : memref<160x168xf32, #tpu.memory_space<vmem>>, vector<160x168xf32>
    %cst_6 = arith.constant dense<0.000000e+00> : vector<256x168xf32>
    %15 = tpu.matmul %13, %14, %cst_6 {dimension_numbers = #tpu.dot_dimension_numbers<[1], [0], [0], [1], [0, 0, 1, 1], [], []>} : vector<256x160xf32>, vector<160x168xf32>, vector<256x168xf32> -> vector<256x168xf32>
    %16 = vector.extract_strided_slice %15 {offsets = [0, 0], sizes = [256, 84], strides = [1, 1]} : vector<256x168xf32> to vector<256x84xf32>
    %17 = vector.extract_strided_slice %15 {offsets = [0, 84], sizes = [256, 84], strides = [1, 1]} : vector<256x168xf32> to vector<256x84xf32>
    %18 = arith.maximumf %16, %17 : vector<256x84xf32>
    %c0_7 = arith.constant 0 : index
    %c0_8 = arith.constant 0 : index
    %19 = vector.load %arg13[%c0_7, %c0_8] : memref<256x84xf32, #tpu.memory_space<vmem>>, vector<256x84xf32>
    tpu.vector_store %arg13[%c0_7, %c0_8], %18 {strides = array<i32>} : memref<256x84xf32, #tpu.memory_space<vmem>>, vector<256x84xf32>,
    %c0_9 = arith.constant 0 : index
    %c0_10 = arith.constant 0 : index
    %20 = tpu.strided_load %arg13[%c0_9, %c0_10] {strides = array<i32: 2, 1>} : memref<256x84xf32, #tpu.memory_space<vmem>>, vector<128x84xf32>
    %c1 = arith.constant 1 : index
    %c0_11 = arith.constant 0 : index
    %21 = tpu.strided_load %arg13[%c1, %c0_11] {strides = array<i32: 2, 1>} : memref<256x84xf32, #tpu.memory_space<vmem>>, vector<128x84xf32>
    %22 = arith.maximumf %20, %21 : vector<128x84xf32>
    %c0_12 = arith.constant 0 : index
    %c0_13 = arith.constant 0 : index
    %23 = vector.load %arg3[%c0_12, %c0_13] : memref<1x84xf32, #tpu.memory_space<vmem>>, vector<1x84xf32>
    %24 = vector.broadcast %23 : vector<1x84xf32> to vector<128x84xf32>
    %25 = arith.addf %22, %24 : vector<128x84xf32>
    %cst_14 = arith.constant 5.000000e-01 : f32
    %26 = vector.broadcast %cst_14 : f32 to vector<128x84xf32>
    %27 = arith.mulf %26, %25 : vector<128x84xf32>
    %28 = math.tanh %27 : vector<128x84xf32>
    %cst_15 = arith.constant 5.000000e-01 : f32
    %29 = vector.broadcast %cst_15 : f32 to vector<128x84xf32>
    %30 = arith.mulf %29, %28 : vector<128x84xf32>
    %cst_16 = arith.constant 5.000000e-01 : f32
    %31 = vector.broadcast %cst_16 : f32 to vector<128x84xf32>
    %32 = arith.addf %30, %31 : vector<128x84xf32>
    %33 = vector.extract_strided_slice %32 {offsets = [1, 0], sizes = [127, 84], strides = [1, 1]} : vector<128x84xf32> to vector<127x84xf32>
    %cst_17 = arith.constant 0.000000e+00 : f32
    %34 = vector.broadcast %cst_17 : f32 to vector<1x84xf32>
    %35 = tpu.concatenate %33, %34 in 0 : vector<127x84xf32>, vector<1x84xf32> -> vector<128x84xf32>
    %36 = vector.extract_strided_slice %32 {offsets = [2, 0], sizes = [126, 84], strides = [1, 1]} : vector<128x84xf32> to vector<126x84xf32>
    %cst_18 = arith.constant 0.000000e+00 : f32
    %37 = vector.broadcast %cst_18 : f32 to vector<2x84xf32>
    %38 = tpu.concatenate %36, %37 in 0 : vector<126x84xf32>, vector<2x84xf32> -> vector<128x84xf32>
    %39 = vector.extract_strided_slice %32 {offsets = [3, 0], sizes = [125, 84], strides = [1, 1]} : vector<128x84xf32> to vector<125x84xf32>
    %cst_19 = arith.constant 0.000000e+00 : f32
    %40 = vector.broadcast %cst_19 : f32 to vector<3x84xf32>
    %41 = tpu.concatenate %39, %40 in 0 : vector<125x84xf32>, vector<3x84xf32> -> vector<128x84xf32>
    %42 = vector.extract_strided_slice %32 {offsets = [4, 0], sizes = [124, 84], strides = [1, 1]} : vector<128x84xf32> to vector<124x84xf32>
    %cst_20 = arith.constant 0.000000e+00 : f32
    %43 = vector.broadcast %cst_20 : f32 to vector<4x84xf32>
    %44 = tpu.concatenate %42, %43 in 0 : vector<124x84xf32>, vector<4x84xf32> -> vector<128x84xf32>
    %45 = tpu.concatenate %32, %35, %38, %41, %44 in 1 : vector<128x84xf32>, vector<128x84xf32>, vector<128x84xf32>, vector<128x84xf32>, vector<128x84xf32> -> vector<128x420xf32>
    %c0_21 = arith.constant 0 : index
    %c0_22 = arith.constant 0 : index
    %46 = vector.load %arg4[%c0_21, %c0_22] : memref<420x160xf32, #tpu.memory_space<vmem>>, vector<420x160xf32>
    %cst_23 = arith.constant dense<0.000000e+00> : vector<128x160xf32>
    %47 = tpu.matmul %45, %46, %cst_23 {dimension_numbers = #tpu.dot_dimension_numbers<[1], [0], [0], [1], [0, 0, 1, 1], [], []>} : vector<128x420xf32>, vector<420x160xf32>, vector<128x160xf32> -> vector<128x160xf32>
    %48 = vector.extract_strided_slice %47 {offsets = [0, 0], sizes = [128, 80], strides = [1, 1]} : vector<128x160xf32> to vector<128x80xf32>
    %49 = vector.extract_strided_slice %47 {offsets = [0, 80], sizes = [128, 80], strides = [1, 1]} : vector<128x160xf32> to vector<128x80xf32>
    %50 = arith.maximumf %48, %49 : vector<128x80xf32>
    %c0_24 = arith.constant 0 : index
    %c0_25 = arith.constant 0 : index
    %51 = vector.load %arg14[%c0_24, %c0_25] : memref<128x80xf32, #tpu.memory_space<vmem>>, vector<128x80xf32>
    tpu.vector_store %arg14[%c0_24, %c0_25], %50 {strides = array<i32>} : memref<128x80xf32, #tpu.memory_space<vmem>>, vector<128x80xf32>,
    %c0_26 = arith.constant 0 : index
    %c0_27 = arith.constant 0 : index
    %52 = tpu.strided_load %arg14[%c0_26, %c0_27] {strides = array<i32: 16, 1>} : memref<128x80xf32, #tpu.memory_space<vmem>>, vector<8x80xf32>
    %c1_28 = arith.constant 1 : index
    %c0_29 = arith.constant 0 : index
    %53 = tpu.strided_load %arg14[%c1_28, %c0_29] {strides = array<i32: 16, 1>} : memref<128x80xf32, #tpu.memory_space<vmem>>, vector<8x80xf32>
    %54 = arith.maximumf %52, %53 : vector<8x80xf32>
    %c0_30 = arith.constant 0 : index
    %c0_31 = arith.constant 0 : index
    %55 = vector.load %arg5[%c0_30, %c0_31] : memref<1x80xf32, #tpu.memory_space<vmem>>, vector<1x80xf32>
    %56 = vector.broadcast %55 : vector<1x80xf32> to vector<8x80xf32>
    %57 = arith.addf %54, %56 : vector<8x80xf32>
    %cst_32 = arith.constant 5.000000e-01 : f32
    %58 = vector.broadcast %cst_32 : f32 to vector<8x80xf32>
    %59 = arith.mulf %58, %57 : vector<8x80xf32>
    %60 = math.tanh %59 : vector<8x80xf32>
    %cst_33 = arith.constant 5.000000e-01 : f32
    %61 = vector.broadcast %cst_33 : f32 to vector<8x80xf32>
    %62 = arith.mulf %61, %60 : vector<8x80xf32>
    %cst_34 = arith.constant 5.000000e-01 : f32
    %63 = vector.broadcast %cst_34 : f32 to vector<8x80xf32>
    %64 = arith.addf %62, %63 : vector<8x80xf32>
    %c2 = arith.constant 2 : index
    %c0_35 = arith.constant 0 : index
    %65 = tpu.strided_load %arg14[%c2, %c0_35] {strides = array<i32: 16, 1>} : memref<128x80xf32, #tpu.memory_space<vmem>>, vector<8x80xf32>
    %c3 = arith.constant 3 : index
    %c0_36 = arith.constant 0 : index
    %66 = tpu.strided_load %arg14[%c3, %c0_36] {strides = array<i32: 16, 1>} : memref<128x80xf32, #tpu.memory_space<vmem>>, vector<8x80xf32>
    %67 = arith.maximumf %65, %66 : vector<8x80xf32>
    %c0_37 = arith.constant 0 : index
    %c0_38 = arith.constant 0 : index
    %68 = vector.load %arg5[%c0_37, %c0_38] : memref<1x80xf32, #tpu.memory_space<vmem>>, vector<1x80xf32>
    %69 = vector.broadcast %68 : vector<1x80xf32> to vector<8x80xf32>
    %70 = arith.addf %67, %69 : vector<8x80xf32>
    %cst_39 = arith.constant 5.000000e-01 : f32
    %71 = vector.broadcast %cst_39 : f32 to vector<8x80xf32>
    %72 = arith.mulf %71, %70 : vector<8x80xf32>
    %73 = math.tanh %72 : vector<8x80xf32>
    %cst_40 = arith.constant 5.000000e-01 : f32
    %74 = vector.broadcast %cst_40 : f32 to vector<8x80xf32>
    %75 = arith.mulf %74, %73 : vector<8x80xf32>
    %cst_41 = arith.constant 5.000000e-01 : f32
    %76 = vector.broadcast %cst_41 : f32 to vector<8x80xf32>
    %77 = arith.addf %75, %76 : vector<8x80xf32>
    %c4 = arith.constant 4 : index
    %c0_42 = arith.constant 0 : index
    %78 = tpu.strided_load %arg14[%c4, %c0_42] {strides = array<i32: 16, 1>} : memref<128x80xf32, #tpu.memory_space<vmem>>, vector<8x80xf32>
    %c5 = arith.constant 5 : index
    %c0_43 = arith.constant 0 : index
    %79 = tpu.strided_load %arg14[%c5, %c0_43] {strides = array<i32: 16, 1>} : memref<128x80xf32, #tpu.memory_space<vmem>>, vector<8x80xf32>
    %80 = arith.maximumf %78, %79 : vector<8x80xf32>
    %c0_44 = arith.constant 0 : index
    %c0_45 = arith.constant 0 : index
    %81 = vector.load %arg5[%c0_44, %c0_45] : memref<1x80xf32, #tpu.memory_space<vmem>>, vector<1x80xf32>
    %82 = vector.broadcast %81 : vector<1x80xf32> to vector<8x80xf32>
    %83 = arith.addf %80, %82 : vector<8x80xf32>
    %cst_46 = arith.constant 5.000000e-01 : f32
    %84 = vector.broadcast %cst_46 : f32 to vector<8x80xf32>
    %85 = arith.mulf %84, %83 : vector<8x80xf32>
    %86 = math.tanh %85 : vector<8x80xf32>
    %cst_47 = arith.constant 5.000000e-01 : f32
    %87 = vector.broadcast %cst_47 : f32 to vector<8x80xf32>
    %88 = arith.mulf %87, %86 : vector<8x80xf32>
    %cst_48 = arith.constant 5.000000e-01 : f32
    %89 = vector.broadcast %cst_48 : f32 to vector<8x80xf32>
    %90 = arith.addf %88, %89 : vector<8x80xf32>
    %c6 = arith.constant 6 : index
    %c0_49 = arith.constant 0 : index
    %91 = tpu.strided_load %arg14[%c6, %c0_49] {strides = array<i32: 16, 1>} : memref<128x80xf32, #tpu.memory_space<vmem>>, vector<8x80xf32>
    %c7 = arith.constant 7 : index
    %c0_50 = arith.constant 0 : index
    %92 = tpu.strided_load %arg14[%c7, %c0_50] {strides = array<i32: 16, 1>} : memref<128x80xf32, #tpu.memory_space<vmem>>, vector<8x80xf32>
    %93 = arith.maximumf %91, %92 : vector<8x80xf32>
    %c0_51 = arith.constant 0 : index
    %c0_52 = arith.constant 0 : index
    %94 = vector.load %arg5[%c0_51, %c0_52] : memref<1x80xf32, #tpu.memory_space<vmem>>, vector<1x80xf32>
    %95 = vector.broadcast %94 : vector<1x80xf32> to vector<8x80xf32>
    %96 = arith.addf %93, %95 : vector<8x80xf32>
    %cst_53 = arith.constant 5.000000e-01 : f32
    %97 = vector.broadcast %cst_53 : f32 to vector<8x80xf32>
    %98 = arith.mulf %97, %96 : vector<8x80xf32>
    %99 = math.tanh %98 : vector<8x80xf32>
    %cst_54 = arith.constant 5.000000e-01 : f32
    %100 = vector.broadcast %cst_54 : f32 to vector<8x80xf32>
    %101 = arith.mulf %100, %99 : vector<8x80xf32>
    %cst_55 = arith.constant 5.000000e-01 : f32
    %102 = vector.broadcast %cst_55 : f32 to vector<8x80xf32>
    %103 = arith.addf %101, %102 : vector<8x80xf32>
    %c8 = arith.constant 8 : index
    %c0_56 = arith.constant 0 : index
    %104 = tpu.strided_load %arg14[%c8, %c0_56] {strides = array<i32: 16, 1>} : memref<128x80xf32, #tpu.memory_space<vmem>>, vector<8x80xf32>
    %c9 = arith.constant 9 : index
    %c0_57 = arith.constant 0 : index
    %105 = tpu.strided_load %arg14[%c9, %c0_57] {strides = array<i32: 16, 1>} : memref<128x80xf32, #tpu.memory_space<vmem>>, vector<8x80xf32>
    %106 = arith.maximumf %104, %105 : vector<8x80xf32>
    %c0_58 = arith.constant 0 : index
    %c0_59 = arith.constant 0 : index
    %107 = vector.load %arg5[%c0_58, %c0_59] : memref<1x80xf32, #tpu.memory_space<vmem>>, vector<1x80xf32>
    %108 = vector.broadcast %107 : vector<1x80xf32> to vector<8x80xf32>
    %109 = arith.addf %106, %108 : vector<8x80xf32>
    %cst_60 = arith.constant 5.000000e-01 : f32
    %110 = vector.broadcast %cst_60 : f32 to vector<8x80xf32>
    %111 = arith.mulf %110, %109 : vector<8x80xf32>
    %112 = math.tanh %111 : vector<8x80xf32>
    %cst_61 = arith.constant 5.000000e-01 : f32
    %113 = vector.broadcast %cst_61 : f32 to vector<8x80xf32>
    %114 = arith.mulf %113, %112 : vector<8x80xf32>
    %cst_62 = arith.constant 5.000000e-01 : f32
    %115 = vector.broadcast %cst_62 : f32 to vector<8x80xf32>
    %116 = arith.addf %114, %115 : vector<8x80xf32>
    %117 = tpu.concatenate %64, %77, %90, %103, %116 in 1 : vector<8x80xf32>, vector<8x80xf32>, vector<8x80xf32>, vector<8x80xf32>, vector<8x80xf32> -> vector<8x400xf32>
    %c0_63 = arith.constant 0 : index
    %c0_64 = arith.constant 0 : index
    %118 = vector.load %arg6[%c0_63, %c0_64] : memref<400x128xf32, #tpu.memory_space<vmem>>, vector<400x128xf32>
    %cst_65 = arith.constant dense<0.000000e+00> : vector<8x128xf32>
    %119 = tpu.matmul %117, %118, %cst_65 {dimension_numbers = #tpu.dot_dimension_numbers<[1], [0], [0], [1], [0, 0, 1, 1], [], []>} : vector<8x400xf32>, vector<400x128xf32>, vector<8x128xf32> -> vector<8x128xf32>
    %c0_66 = arith.constant 0 : index
    %c0_67 = arith.constant 0 : index
    %120 = vector.load %arg7[%c0_66, %c0_67] : memref<1x128xf32, #tpu.memory_space<vmem>>, vector<1x128xf32>
    %121 = vector.broadcast %120 : vector<1x128xf32> to vector<8x128xf32>
    %122 = arith.addf %119, %121 : vector<8x128xf32>
    %cst_68 = arith.constant 5.000000e-01 : f32
    %123 = vector.broadcast %cst_68 : f32 to vector<8x128xf32>
    %124 = arith.mulf %123, %122 : vector<8x128xf32>
    %125 = math.tanh %124 : vector<8x128xf32>
    %cst_69 = arith.constant 5.000000e-01 : f32
    %126 = vector.broadcast %cst_69 : f32 to vector<8x128xf32>
    %127 = arith.mulf %126, %125 : vector<8x128xf32>
    %cst_70 = arith.constant 5.000000e-01 : f32
    %128 = vector.broadcast %cst_70 : f32 to vector<8x128xf32>
    %129 = arith.addf %127, %128 : vector<8x128xf32>
    %c0_71 = arith.constant 0 : index
    %c0_72 = arith.constant 0 : index
    %130 = vector.load %arg8[%c0_71, %c0_72] : memref<128x128xf32, #tpu.memory_space<vmem>>, vector<128x128xf32>
    %cst_73 = arith.constant dense<0.000000e+00> : vector<8x128xf32>
    %131 = tpu.matmul %129, %130, %cst_73 {dimension_numbers = #tpu.dot_dimension_numbers<[1], [0], [0], [1], [0, 0, 1, 1], [], []>} : vector<8x128xf32>, vector<128x128xf32>, vector<8x128xf32> -> vector<8x128xf32>
    %c0_74 = arith.constant 0 : index
    %c0_75 = arith.constant 0 : index
    %132 = vector.load %arg9[%c0_74, %c0_75] : memref<1x128xf32, #tpu.memory_space<vmem>>, vector<1x128xf32>
    %133 = vector.broadcast %132 : vector<1x128xf32> to vector<8x128xf32>
    %134 = arith.addf %131, %133 : vector<8x128xf32>
    %cst_76 = arith.constant 5.000000e-01 : f32
    %135 = vector.broadcast %cst_76 : f32 to vector<8x128xf32>
    %136 = arith.mulf %135, %134 : vector<8x128xf32>
    %137 = math.tanh %136 : vector<8x128xf32>
    %cst_77 = arith.constant 5.000000e-01 : f32
    %138 = vector.broadcast %cst_77 : f32 to vector<8x128xf32>
    %139 = arith.mulf %138, %137 : vector<8x128xf32>
    %cst_78 = arith.constant 5.000000e-01 : f32
    %140 = vector.broadcast %cst_78 : f32 to vector<8x128xf32>
    %141 = arith.addf %139, %140 : vector<8x128xf32>
    %c0_79 = arith.constant 0 : index
    %c0_80 = arith.constant 0 : index
    %142 = vector.load %arg10[%c0_79, %c0_80] : memref<128x128xf32, #tpu.memory_space<vmem>>, vector<128x128xf32>
    %cst_81 = arith.constant dense<0.000000e+00> : vector<8x128xf32>
    %143 = tpu.matmul %141, %142, %cst_81 {dimension_numbers = #tpu.dot_dimension_numbers<[1], [0], [0], [1], [0, 0, 1, 1], [], []>} : vector<8x128xf32>, vector<128x128xf32>, vector<8x128xf32> -> vector<8x128xf32>
    %c0_82 = arith.constant 0 : index
    %c0_83 = arith.constant 0 : index
    %144 = vector.load %arg11[%c0_82, %c0_83] : memref<1x128xf32, #tpu.memory_space<vmem>>, vector<1x128xf32>
    %145 = vector.broadcast %144 : vector<1x128xf32> to vector<8x128xf32>
    %146 = arith.addf %143, %145 : vector<8x128xf32>
    %c0_84 = arith.constant 0 : index
    %c0_85 = arith.constant 0 : index
    %147 = vector.load %arg12[%c0_84, %c0_85] : memref<8x128xf32, #tpu.memory_space<vmem>>, vector<8x128xf32>
    tpu.vector_store %arg12[%c0_84, %c0_85], %146 {strides = array<i32>} : memref<8x128xf32, #tpu.memory_space<vmem>>, vector<8x128xf32>,
    return
  }
  func.func @transform_0(%arg0: i32) -> (i32, i32) {
    %c0_i32 = arith.constant 0 : i32
    %c0_i32_0 = arith.constant 0 : i32
    return %arg0, %c0_i32 : i32, i32
  }
  func.func @transform_1(%arg0: i32) -> (i32, i32) {
    %c0_i32 = arith.constant 0 : i32
    %c0_i32_0 = arith.constant 0 : i32
    %c0_i32_1 = arith.constant 0 : i32
    return %c0_i32, %c0_i32_0 : i32, i32
  }
  func.func @transform_2(%arg0: i32) -> (i32, i32) {
    %c0_i32 = arith.constant 0 : i32
    %c0_i32_0 = arith.constant 0 : i32
    %c0_i32_1 = arith.constant 0 : i32
    return %c0_i32, %c0_i32_0 : i32, i32
  }
  func.func @transform_3(%arg0: i32) -> (i32, i32) {
    %c0_i32 = arith.constant 0 : i32
    %c0_i32_0 = arith.constant 0 : i32
    %c0_i32_1 = arith.constant 0 : i32
    return %c0_i32, %c0_i32_0 : i32, i32
  }
  func.func @transform_4(%arg0: i32) -> (i32, i32) {
    %c0_i32 = arith.constant 0 : i32
    %c0_i32_0 = arith.constant 0 : i32
    %c0_i32_1 = arith.constant 0 : i32
    return %c0_i32, %c0_i32_0 : i32, i32
  }
  func.func @transform_5(%arg0: i32) -> (i32, i32) {
    %c0_i32 = arith.constant 0 : i32
    %c0_i32_0 = arith.constant 0 : i32
    %c0_i32_1 = arith.constant 0 : i32
    return %c0_i32, %c0_i32_0 : i32, i32
  }
  func.func @transform_6(%arg0: i32) -> (i32, i32) {
    %c0_i32 = arith.constant 0 : i32
    %c0_i32_0 = arith.constant 0 : i32
    %c0_i32_1 = arith.constant 0 : i32
    return %c0_i32, %c0_i32_0 : i32, i32
  }
  func.func @transform_7(%arg0: i32) -> (i32, i32) {
    %c0_i32 = arith.constant 0 : i32
    %c0_i32_0 = arith.constant 0 : i32
    %c0_i32_1 = arith.constant 0 : i32
    return %c0_i32, %c0_i32_0 : i32, i32
  }
  func.func @transform_8(%arg0: i32) -> (i32, i32) {
    %c0_i32 = arith.constant 0 : i32
    %c0_i32_0 = arith.constant 0 : i32
    %c0_i32_1 = arith.constant 0 : i32
    return %c0_i32, %c0_i32_0 : i32, i32
  }
  func.func @transform_9(%arg0: i32) -> (i32, i32) {
    %c0_i32 = arith.constant 0 : i32
    %c0_i32_0 = arith.constant 0 : i32
    %c0_i32_1 = arith.constant 0 : i32
    return %c0_i32, %c0_i32_0 : i32, i32
  }
  func.func @transform_10(%arg0: i32) -> (i32, i32) {
    %c0_i32 = arith.constant 0 : i32
    %c0_i32_0 = arith.constant 0 : i32
    %c0_i32_1 = arith.constant 0 : i32
    return %c0_i32, %c0_i32_0 : i32, i32
  }
  func.func @transform_11(%arg0: i32) -> (i32, i32) {
    %c0_i32 = arith.constant 0 : i32
    %c0_i32_0 = arith.constant 0 : i32
    return %arg0, %c0_i32 : i32, i32
  }
}

</mosaic_0001>

<llo_original>
// kernel: lenet_forward.1
$region0: #{lenet_forward.1}
  #allocation0 [shape = 'u32[]', space=smem, size = 0x4, offset = 0x4, fixed_abs, tag = 'smem constant byte address 0x4 - core index']
  #allocation1 [shape = 'u32[144,128]{1,0:T(1,128)}', space=vmem, size = 0x12000, scoped, tag = 'internal scratch']
  #allocation2 [shape = 'f32[256,84]{1,0:T(8,128)}', space=vmem, size = 0x20000, scoped, tag = 'scratch operand']
  #allocation3 [shape = 'f32[128,80]{1,0:T(8,128)}', space=vmem, size = 0x10000, scoped, tag = 'scratch operand']
  %s0 = inlined_call_operand.vmem [shape: f32[256,32], index: 0, kind: input, shape index: {}]
  %s1 = inlined_call_operand.vmem [shape: f32[160,168], index: 1, kind: input, shape index: {}]
  %s2 = inlined_call_operand.vmem [shape: f32[1,84], index: 2, kind: input, shape index: {}]
  %s3 = inlined_call_operand.vmem [shape: f32[420,160], index: 3, kind: input, shape index: {}]
  %s4 = inlined_call_operand.vmem [shape: f32[1,80], index: 4, kind: input, shape index: {}]
  %s5 = inlined_call_operand.vmem [shape: f32[400,128], index: 5, kind: input, shape index: {}]
  %s6 = inlined_call_operand.vmem [shape: f32[1,128], index: 6, kind: input, shape index: {}]
  %s7 = inlined_call_operand.vmem [shape: f32[128,128], index: 7, kind: input, shape index: {}]
  %s8 = inlined_call_operand.vmem [shape: f32[1,128], index: 8, kind: input, shape index: {}]
  %s9 = inlined_call_operand.vmem [shape: f32[128,128], index: 9, kind: input, shape index: {}]
  %s10 = inlined_call_operand.vmem [shape: f32[1,128], index: 10, kind: input, shape index: {}]
  %s11 = inlined_call_operand.vmem [shape: f32[8,128], index: 11, kind: output, shape index: {}]
  %s12 = sld [smem:[#allocation0]]
  $region54: #{lenet_forward.1} parent=0
    _
  %s14 = ssub.s32 1, %s12
  %s15 = scalar_select 0, %s14, %s12
  // Predicated region
  $region2: #{lenet_forward.1} parent=0 // pred_check
    _
  $region3: #{lenet_forward.1} parent=0 // pred_check_branch
    %17 = sbr.rel (0) target = $region5
  $region4: #{lenet_forward.1} parent=0 // pred_region
    _
  $region5: #{lenet_forward.1} parent=0 // pred_fallthru
    _
  // Predicated region
  $region6: #{lenet_forward.1} parent=0 // pred_check
    _
  $region7: #{lenet_forward.1} parent=0 // pred_check_branch
    %19 = sbr.rel (0) target = $region9
  $region8: #{lenet_forward.1} parent=0 // pred_region
    _
  $region9: #{lenet_forward.1} parent=0 // pred_fallthru
    _
  // Predicated region
  $region10: #{lenet_forward.1} parent=0 // pred_check
    _
  $region11: #{lenet_forward.1} parent=0 // pred_check_branch
    %21 = sbr.rel (0) target = $region13
  $region12: #{lenet_forward.1} parent=0 // pred_region
    _
  $region13: #{lenet_forward.1} parent=0 // pred_fallthru
    _
  // Predicated region
  $region14: #{lenet_forward.1} parent=0 // pred_check
    _
  $region15: #{lenet_forward.1} parent=0 // pred_check_branch
    %23 = sbr.rel (0) target = $region17
  $region16: #{lenet_forward.1} parent=0 // pred_region
    _
  $region17: #{lenet_forward.1} parent=0 // pred_fallthru
    _
  // Predicated region
  $region18: #{lenet_forward.1} parent=0 // pred_check
    _
  $region19: #{lenet_forward.1} parent=0 // pred_check_branch
    %25 = sbr.rel (0) target = $region21
  $region20: #{lenet_forward.1} parent=0 // pred_region
    _
  $region21: #{lenet_forward.1} parent=0 // pred_fallthru
    _
  // Predicated region
  $region22: #{lenet_forward.1} parent=0 // pred_check
    _
  $region23: #{lenet_forward.1} parent=0 // pred_check_branch
    %27 = sbr.rel (0) target = $region25
  $region24: #{lenet_forward.1} parent=0 // pred_region
    _
  $region25: #{lenet_forward.1} parent=0 // pred_fallthru
    _
  // Predicated region
  $region26: #{lenet_forward.1} parent=0 // pred_check
    _
  $region27: #{lenet_forward.1} parent=0 // pred_check_branch
    %29 = sbr.rel (0) target = $region29
  $region28: #{lenet_forward.1} parent=0 // pred_region
    _
  $region29: #{lenet_forward.1} parent=0 // pred_fallthru
    _
  // Predicated region
  $region30: #{lenet_forward.1} parent=0 // pred_check
    _
  $region31: #{lenet_forward.1} parent=0 // pred_check_branch
    %31 = sbr.rel (0) target = $region33
  $region32: #{lenet_forward.1} parent=0 // pred_region
    _
  $region33: #{lenet_forward.1} parent=0 // pred_fallthru
    _
  // Predicated region
  $region34: #{lenet_forward.1} parent=0 // pred_check
    _
  $region35: #{lenet_forward.1} parent=0 // pred_check_branch
    %33 = sbr.rel (0) target = $region37
  $region36: #{lenet_forward.1} parent=0 // pred_region
    _
  $region37: #{lenet_forward.1} parent=0 // pred_fallthru
    _
  // Predicated region
  $region38: #{lenet_forward.1} parent=0 // pred_check
    _
  $region39: #{lenet_forward.1} parent=0 // pred_check_branch
    %35 = sbr.rel (0) target = $region41
  $region40: #{lenet_forward.1} parent=0 // pred_region
    _
  $region41: #{lenet_forward.1} parent=0 // pred_fallthru
    _
  // Predicated region
  $region42: #{lenet_forward.1} parent=0 // pred_check
    _
  $region43: #{lenet_forward.1} parent=0 // pred_check_branch
    %37 = sbr.rel (0) target = $region45
  $region44: #{lenet_forward.1} parent=0 // pred_region
    _
  $region45: #{lenet_forward.1} parent=0 // pred_fallthru
    _
  %v38 = vld [vmem:[%s0] sm:$0xff]
  %v39 = vld [vmem:[%s0 + $0x8] sm:$0xff]
  %v40 = vld [vmem:[%s0 + $0x10] sm:$0xff]
  %v41 = vld [vmem:[%s0 + $0x18] sm:$0xff]
  %v42 = vld [vmem:[%s0 + $0x20] sm:$0xff]
  %v43 = vld [vmem:[%s0 + $0x28] sm:$0xff]
  %v44 = vld [vmem:[%s0 + $0x30] sm:$0xff]
  %v45 = vld [vmem:[%s0 + $0x38] sm:$0xff]
  %v46 = vld [vmem:[%s0 + $0x40] sm:$0xff]
  %v47 = vld [vmem:[%s0 + $0x48] sm:$0xff]
  %v48 = vld [vmem:[%s0 + $0x50] sm:$0xff]
  %v49 = vld [vmem:[%s0 + $0x58] sm:$0xff]
  %v50 = vld [vmem:[%s0 + $0x60] sm:$0xff]
  %v51 = vld [vmem:[%s0 + $0x68] sm:$0xff]
  %v52 = vld [vmem:[%s0 + $0x70] sm:$0xff]
  %v53 = vld [vmem:[%s0 + $0x78] sm:$0xff]
  %v54 = vld [vmem:[%s0 + $0x80] sm:$0xff]
  %v55 = vld [vmem:[%s0 + $0x88] sm:$0xff]
  %v56 = vld [vmem:[%s0 + $0x90] sm:$0xff]
  %v57 = vld [vmem:[%s0 + $0x98] sm:$0xff]
  %v58 = vld [vmem:[%s0 + $0xa0] sm:$0xff]
  %v59 = vld [vmem:[%s0 + $0xa8] sm:$0xff]
  %v60 = vld [vmem:[%s0 + $0xb0] sm:$0xff]
  %v61 = vld [vmem:[%s0 + $0xb8] sm:$0xff]
  %v62 = vld [vmem:[%s0 + $0xc0] sm:$0xff]
  %v63 = vld [vmem:[%s0 + $0xc8] sm:$0xff]
  %v64 = vld [vmem:[%s0 + $0xd0] sm:$0xff]
  %v65 = vld [vmem:[%s0 + $0xd8] sm:$0xff]
  %v66 = vld [vmem:[%s0 + $0xe0] sm:$0xff]
  %v67 = vld [vmem:[%s0 + $0xe8] sm:$0xff]
  %v68 = vld [vmem:[%s0 + $0xf0] sm:$0xff]
  %v69 = vld [vmem:[%s0 + $0xf8] sm:$0xff]
  %vm102 = vcmask 1046528
  %v103 = vrot.slane %v38, 1
  %v104 = vrot.slane %v39, 1
  %v105 = vsel %vm102, %v103, %v104
  %v106 = vrot.slane %v40, 1
  %v107 = vsel %vm102, %v104, %v106
  %v108 = vrot.slane %v41, 1
  %v109 = vsel %vm102, %v106, %v108
  %v110 = vrot.slane %v42, 1
  %v111 = vsel %vm102, %v108, %v110
  %v112 = vrot.slane %v43, 1
  %v113 = vsel %vm102, %v110, %v112
  %v114 = vrot.slane %v44, 1
  %v115 = vsel %vm102, %v112, %v114
  %v116 = vrot.slane %v45, 1
  %v117 = vsel %vm102, %v114, %v116
  %v118 = vrot.slane %v46, 1
  %v119 = vsel %vm102, %v116, %v118
  %v120 = vrot.slane %v47, 1
  %v121 = vsel %vm102, %v118, %v120
  %v122 = vrot.slane %v48, 1
  %v123 = vsel %vm102, %v120, %v122
  %v124 = vrot.slane %v49, 1
  %v125 = vsel %vm102, %v122, %v124
  %v126 = vrot.slane %v50, 1
  %v127 = vsel %vm102, %v124, %v126
  %v128 = vrot.slane %v51, 1
  %v129 = vsel %vm102, %v126, %v128
  %v130 = vrot.slane %v52, 1
  %v131 = vsel %vm102, %v128, %v130
  %v132 = vrot.slane %v53, 1
  %v133 = vsel %vm102, %v130, %v132
  %v134 = vrot.slane %v54, 1
  %v135 = vsel %vm102, %v132, %v134
  %v136 = vrot.slane %v55, 1
  %v137 = vsel %vm102, %v134, %v136
  %v138 = vrot.slane %v56, 1
  %v139 = vsel %vm102, %v136, %v138
  %v140 = vrot.slane %v57, 1
  %v141 = vsel %vm102, %v138, %v140
  %v142 = vrot.slane %v58, 1
  %v143 = vsel %vm102, %v140, %v142
  %v144 = vrot.slane %v59, 1
  %v145 = vsel %vm102, %v142, %v144
  %v146 = vrot.slane %v60, 1
  %v147 = vsel %vm102, %v144, %v146
  %v148 = vrot.slane %v61, 1
  %v149 = vsel %vm102, %v146, %v148
  %v150 = vrot.slane %v62, 1
  %v151 = vsel %vm102, %v148, %v150
  %v152 = vrot.slane %v63, 1
  %v153 = vsel %vm102, %v150, %v152
  %v154 = vrot.slane %v64, 1
  %v155 = vsel %vm102, %v152, %v154
  %v156 = vrot.slane %v65, 1
  %v157 = vsel %vm102, %v154, %v156
  %v158 = vrot.slane %v66, 1
  %v159 = vsel %vm102, %v156, %v158
  %v160 = vrot.slane %v67, 1
  %v161 = vsel %vm102, %v158, %v160
  %v162 = vrot.slane %v68, 1
  %v163 = vsel %vm102, %v160, %v162
  %v164 = vrot.slane %v69, 1
  %v165 = vsel %vm102, %v162, %v164
  %v167 = vsel %vm102, %v164, 0.0
  %vm168 = vcmask 1045504
  %v169 = vrot.slane %v38, 2
  %v170 = vrot.slane %v39, 2
  %v171 = vsel %vm168, %v169, %v170
  %v172 = vrot.slane %v40, 2
  %v173 = vsel %vm168, %v170, %v172
  %v174 = vrot.slane %v41, 2
  %v175 = vsel %vm168, %v172, %v174
  %v176 = vrot.slane %v42, 2
  %v177 = vsel %vm168, %v174, %v176
  %v178 = vrot.slane %v43, 2
  %v179 = vsel %vm168, %v176, %v178
  %v180 = vrot.slane %v44, 2
  %v181 = vsel %vm168, %v178, %v180
  %v182 = vrot.slane %v45, 2
  %v183 = vsel %vm168, %v180, %v182
  %v184 = vrot.slane %v46, 2
  %v185 = vsel %vm168, %v182, %v184
  %v186 = vrot.slane %v47, 2
  %v187 = vsel %vm168, %v184, %v186
  %v188 = vrot.slane %v48, 2
  %v189 = vsel %vm168, %v186, %v188
  %v190 = vrot.slane %v49, 2
  %v191 = vsel %vm168, %v188, %v190
  %v192 = vrot.slane %v50, 2
  %v193 = vsel %vm168, %v190, %v192
  %v194 = vrot.slane %v51, 2
  %v195 = vsel %vm168, %v192, %v194
  %v196 = vrot.slane %v52, 2
  %v197 = vsel %vm168, %v194, %v196
  %v198 = vrot.slane %v53, 2
  %v199 = vsel %vm168, %v196, %v198
  %v200 = vrot.slane %v54, 2
  %v201 = vsel %vm168, %v198, %v200
  %v202 = vrot.slane %v55, 2
  %v203 = vsel %vm168, %v200, %v202
  %v204 = vrot.slane %v56, 2
  %v205 = vsel %vm168, %v202, %v204
  %v206 = vrot.slane %v57, 2
  %v207 = vsel %vm168, %v204, %v206
  %v208 = vrot.slane %v58, 2
  %v209 = vsel %vm168, %v206, %v208
  %v210 = vrot.slane %v59, 2
  %v211 = vsel %vm168, %v208, %v210
  %v212 = vrot.slane %v60, 2
  %v213 = vsel %vm168, %v210, %v212
  %v214 = vrot.slane %v61, 2
  %v215 = vsel %vm168, %v212, %v214
  %v216 = vrot.slane %v62, 2
  %v217 = vsel %vm168, %v214, %v216
  %v218 = vrot.slane %v63, 2
  %v219 = vsel %vm168, %v216, %v218
  %v220 = vrot.slane %v64, 2
  %v221 = vsel %vm168, %v218, %v220
  %v222 = vrot.slane %v65, 2
  %v223 = vsel %vm168, %v220, %v222
  %v224 = vrot.slane %v66, 2
  %v225 = vsel %vm168, %v222, %v224
  %v226 = vrot.slane %v67, 2
  %v227 = vsel %vm168, %v224, %v226
  %v228 = vrot.slane %v68, 2
  %v229 = vsel %vm168, %v226, %v228
  %v230 = vrot.slane %v69, 2
  %v231 = vsel %vm168, %v228, %v230
  %v233 = vsel %vm168, %v230, 0.0
  %vm234 = vcmask 1044480
  %v235 = vrot.slane %v38, 3
  %v236 = vrot.slane %v39, 3
  %v237 = vsel %vm234, %v235, %v236
  %v238 = vrot.slane %v40, 3
  %v239 = vsel %vm234, %v236, %v238
  %v240 = vrot.slane %v41, 3
  %v241 = vsel %vm234, %v238, %v240
  %v242 = vrot.slane %v42, 3
  %v243 = vsel %vm234, %v240, %v242
  %v244 = vrot.slane %v43, 3
  %v245 = vsel %vm234, %v242, %v244
  %v246 = vrot.slane %v44, 3
  %v247 = vsel %vm234, %v244, %v246
  %v248 = vrot.slane %v45, 3
  %v249 = vsel %vm234, %v246, %v248
  %v250 = vrot.slane %v46, 3
  %v251 = vsel %vm234, %v248, %v250
  %v252 = vrot.slane %v47, 3
  %v253 = vsel %vm234, %v250, %v252
  %v254 = vrot.slane %v48, 3
  %v255 = vsel %vm234, %v252, %v254
  %v256 = vrot.slane %v49, 3
  %v257 = vsel %vm234, %v254, %v256
  %v258 = vrot.slane %v50, 3
  %v259 = vsel %vm234, %v256, %v258
  %v260 = vrot.slane %v51, 3
  %v261 = vsel %vm234, %v258, %v260
  %v262 = vrot.slane %v52, 3
  %v263 = vsel %vm234, %v260, %v262
  %v264 = vrot.slane %v53, 3
  %v265 = vsel %vm234, %v262, %v264
  %v266 = vrot.slane %v54, 3
  %v267 = vsel %vm234, %v264, %v266
  %v268 = vrot.slane %v55, 3
  %v269 = vsel %vm234, %v266, %v268
  %v270 = vrot.slane %v56, 3
  %v271 = vsel %vm234, %v268, %v270
  %v272 = vrot.slane %v57, 3
  %v273 = vsel %vm234, %v270, %v272
  %v274 = vrot.slane %v58, 3
  %v275 = vsel %vm234, %v272, %v274
  %v276 = vrot.slane %v59, 3
  %v277 = vsel %vm234, %v274, %v276
  %v278 = vrot.slane %v60, 3
  %v279 = vsel %vm234, %v276, %v278
  %v280 = vrot.slane %v61, 3
  %v281 = vsel %vm234, %v278, %v280
  %v282 = vrot.slane %v62, 3
  %v283 = vsel %vm234, %v280, %v282
  %v284 = vrot.slane %v63, 3
  %v285 = vsel %vm234, %v282, %v284
  %v286 = vrot.slane %v64, 3
  %v287 = vsel %vm234, %v284, %v286
  %v288 = vrot.slane %v65, 3
  %v289 = vsel %vm234, %v286, %v288
  %v290 = vrot.slane %v66, 3
  %v291 = vsel %vm234, %v288, %v290
  %v292 = vrot.slane %v67, 3
  %v293 = vsel %vm234, %v290, %v292
  %v294 = vrot.slane %v68, 3
  %v295 = vsel %vm234, %v292, %v294
  %v296 = vrot.slane %v69, 3
  %v297 = vsel %vm234, %v294, %v296
  %v299 = vsel %vm234, %v296, 0.0
  %vm300 = vcmask 1043456
  %v301 = vrot.slane %v38, 4
  %v302 = vrot.slane %v39, 4
  %v303 = vsel %vm300, %v301, %v302
  %v304 = vrot.slane %v40, 4
  %v305 = vsel %vm300, %v302, %v304
  %v306 = vrot.slane %v41, 4
  %v307 = vsel %vm300, %v304, %v306
  %v308 = vrot.slane %v42, 4
  %v309 = vsel %vm300, %v306, %v308
  %v310 = vrot.slane %v43, 4
  %v311 = vsel %vm300, %v308, %v310
  %v312 = vrot.slane %v44, 4
  %v313 = vsel %vm300, %v310, %v312
  %v314 = vrot.slane %v45, 4
  %v315 = vsel %vm300, %v312, %v314
  %v316 = vrot.slane %v46, 4
  %v317 = vsel %vm300, %v314, %v316
  %v318 = vrot.slane %v47, 4
  %v319 = vsel %vm300, %v316, %v318
  %v320 = vrot.slane %v48, 4
  %v321 = vsel %vm300, %v318, %v320
  %v322 = vrot.slane %v49, 4
  %v323 = vsel %vm300, %v320, %v322
  %v324 = vrot.slane %v50, 4
  %v325 = vsel %vm300, %v322, %v324
  %v326 = vrot.slane %v51, 4
  %v327 = vsel %vm300, %v324, %v326
  %v328 = vrot.slane %v52, 4
  %v329 = vsel %vm300, %v326, %v328
  %v330 = vrot.slane %v53, 4
  %v331 = vsel %vm300, %v328, %v330
  %v332 = vrot.slane %v54, 4
  %v333 = vsel %vm300, %v330, %v332
  %v334 = vrot.slane %v55, 4
  %v335 = vsel %vm300, %v332, %v334
  %v336 = vrot.slane %v56, 4
  %v337 = vsel %vm300, %v334, %v336
  %v338 = vrot.slane %v57, 4
  %v339 = vsel %vm300, %v336, %v338
  %v340 = vrot.slane %v58, 4
  %v341 = vsel %vm300, %v338, %v340
  %v342 = vrot.slane %v59, 4
  %v343 = vsel %vm300, %v340, %v342
  %v344 = vrot.slane %v60, 4
  %v345 = vsel %vm300, %v342, %v344
  %v346 = vrot.slane %v61, 4
  %v347 = vsel %vm300, %v344, %v346
  %v348 = vrot.slane %v62, 4
  %v349 = vsel %vm300, %v346, %v348
  %v350 = vrot.slane %v63, 4
  %v351 = vsel %vm300, %v348, %v350
  %v352 = vrot.slane %v64, 4
  %v353 = vsel %vm300, %v350, %v352
  %v354 = vrot.slane %v65, 4
  %v355 = vsel %vm300, %v352, %v354
  %v356 = vrot.slane %v66, 4
  %v357 = vsel %vm300, %v354, %v356
  %v358 = vrot.slane %v67, 4
  %v359 = vsel %vm300, %v356, %v358
  %v360 = vrot.slane %v68, 4
  %v361 = vsel %vm300, %v358, %v360
  %v362 = vrot.slane %v69, 4
  %v363 = vsel %vm300, %v360, %v362
  %v365 = vsel %vm300, %v362, 0.0
  %367 = vrot.lane.b32.xlu0 %v105, 32
  %v368 = vpop.permute.xlu0 %367
  %369 = vrot.lane.b32.xlu0 %v107, 32
  %v370 = vpop.permute.xlu0 %369
  %371 = vrot.lane.b32.xlu0 %v109, 32
  %v372 = vpop.permute.xlu0 %371
  %373 = vrot.lane.b32.xlu0 %v111, 32
  %v374 = vpop.permute.xlu0 %373
  %375 = vrot.lane.b32.xlu0 %v113, 32
  %v376 = vpop.permute.xlu0 %375
  %377 = vrot.lane.b32.xlu0 %v115, 32
  %v378 = vpop.permute.xlu0 %377
  %379 = vrot.lane.b32.xlu0 %v117, 32
  %v380 = vpop.permute.xlu0 %379
  %381 = vrot.lane.b32.xlu0 %v119, 32
  %v382 = vpop.permute.xlu0 %381
  %383 = vrot.lane.b32.xlu0 %v121, 32
  %v384 = vpop.permute.xlu0 %383
  %385 = vrot.lane.b32.xlu0 %v123, 32
  %v386 = vpop.permute.xlu0 %385
  %387 = vrot.lane.b32.xlu0 %v125, 32
  %v388 = vpop.permute.xlu0 %387
  %389 = vrot.lane.b32.xlu0 %v127, 32
  %v390 = vpop.permute.xlu0 %389
  %391 = vrot.lane.b32.xlu0 %v129, 32
  %v392 = vpop.permute.xlu0 %391
  %393 = vrot.lane.b32.xlu0 %v131, 32
  %v394 = vpop.permute.xlu0 %393
  %395 = vrot.lane.b32.xlu0 %v133, 32
  %v396 = vpop.permute.xlu0 %395
  %397 = vrot.lane.b32.xlu0 %v135, 32
  %v398 = vpop.permute.xlu0 %397
  %399 = vrot.lane.b32.xlu0 %v137, 32
  %v400 = vpop.permute.xlu0 %399
  %401 = vrot.lane.b32.xlu0 %v139, 32
  %v402 = vpop.permute.xlu0 %401
  %403 = vrot.lane.b32.xlu0 %v141, 32
  %v404 = vpop.permute.xlu0 %403
  %405 = vrot.lane.b32.xlu0 %v143, 32
  %v406 = vpop.permute.xlu0 %405
  %407 = vrot.lane.b32.xlu0 %v145, 32
  %v408 = vpop.permute.xlu0 %407
  %409 = vrot.lane.b32.xlu0 %v147, 32
  %v410 = vpop.permute.xlu0 %409
  %411 = vrot.lane.b32.xlu0 %v149, 32
  %v412 = vpop.permute.xlu0 %411
  %413 = vrot.lane.b32.xlu0 %v151, 32
  %v414 = vpop.permute.xlu0 %413
  %415 = vrot.lane.b32.xlu0 %v153, 32
  %v416 = vpop.permute.xlu0 %415
  %417 = vrot.lane.b32.xlu0 %v155, 32
  %v418 = vpop.permute.xlu0 %417
  %419 = vrot.lane.b32.xlu0 %v157, 32
  %v420 = vpop.permute.xlu0 %419
  %421 = vrot.lane.b32.xlu0 %v159, 32
  %v422 = vpop.permute.xlu0 %421
  %423 = vrot.lane.b32.xlu0 %v161, 32
  %v424 = vpop.permute.xlu0 %423
  %425 = vrot.lane.b32.xlu0 %v163, 32
  %v426 = vpop.permute.xlu0 %425
  %427 = vrot.lane.b32.xlu0 %v165, 32
  %v428 = vpop.permute.xlu0 %427
  %429 = vrot.lane.b32.xlu0 %v167, 32
  %v430 = vpop.permute.xlu0 %429
  %464 = vrot.lane.b32.xlu0 %v171, 64
  %v465 = vpop.permute.xlu0 %464
  %466 = vrot.lane.b32.xlu0 %v173, 64
  %v467 = vpop.permute.xlu0 %466
  %468 = vrot.lane.b32.xlu0 %v175, 64
  %v469 = vpop.permute.xlu0 %468
  %470 = vrot.lane.b32.xlu0 %v177, 64
  %v471 = vpop.permute.xlu0 %470
  %472 = vrot.lane.b32.xlu0 %v179, 64
  %v473 = vpop.permute.xlu0 %472
  %474 = vrot.lane.b32.xlu0 %v181, 64
  %v475 = vpop.permute.xlu0 %474
  %476 = vrot.lane.b32.xlu0 %v183, 64
  %v477 = vpop.permute.xlu0 %476
  %478 = vrot.lane.b32.xlu0 %v185, 64
  %v479 = vpop.permute.xlu0 %478
  %480 = vrot.lane.b32.xlu0 %v187, 64
  %v481 = vpop.permute.xlu0 %480
  %482 = vrot.lane.b32.xlu0 %v189, 64
  %v483 = vpop.permute.xlu0 %482
  %484 = vrot.lane.b32.xlu0 %v191, 64
  %v485 = vpop.permute.xlu0 %484
  %486 = vrot.lane.b32.xlu0 %v193, 64
  %v487 = vpop.permute.xlu0 %486
  %488 = vrot.lane.b32.xlu0 %v195, 64
  %v489 = vpop.permute.xlu0 %488
  %490 = vrot.lane.b32.xlu0 %v197, 64
  %v491 = vpop.permute.xlu0 %490
  %492 = vrot.lane.b32.xlu0 %v199, 64
  %v493 = vpop.permute.xlu0 %492
  %494 = vrot.lane.b32.xlu0 %v201, 64
  %v495 = vpop.permute.xlu0 %494
  %496 = vrot.lane.b32.xlu0 %v203, 64
  %v497 = vpop.permute.xlu0 %496
  %498 = vrot.lane.b32.xlu0 %v205, 64
  %v499 = vpop.permute.xlu0 %498
  %500 = vrot.lane.b32.xlu0 %v207, 64
  %v501 = vpop.permute.xlu0 %500
  %502 = vrot.lane.b32.xlu0 %v209, 64
  %v503 = vpop.permute.xlu0 %502
  %504 = vrot.lane.b32.xlu0 %v211, 64
  %v505 = vpop.permute.xlu0 %504
  %506 = vrot.lane.b32.xlu0 %v213, 64
  %v507 = vpop.permute.xlu0 %506
  %508 = vrot.lane.b32.xlu0 %v215, 64
  %v509 = vpop.permute.xlu0 %508
  %510 = vrot.lane.b32.xlu0 %v217, 64
  %v511 = vpop.permute.xlu0 %510
  %512 = vrot.lane.b32.xlu0 %v219, 64
  %v513 = vpop.permute.xlu0 %512
  %514 = vrot.lane.b32.xlu0 %v221, 64
  %v515 = vpop.permute.xlu0 %514
  %516 = vrot.lane.b32.xlu0 %v223, 64
  %v517 = vpop.permute.xlu0 %516
  %518 = vrot.lane.b32.xlu0 %v225, 64
  %v519 = vpop.permute.xlu0 %518
  %520 = vrot.lane.b32.xlu0 %v227, 64
  %v521 = vpop.permute.xlu0 %520
  %522 = vrot.lane.b32.xlu0 %v229, 64
  %v523 = vpop.permute.xlu0 %522
  %524 = vrot.lane.b32.xlu0 %v231, 64
  %v525 = vpop.permute.xlu0 %524
  %526 = vrot.lane.b32.xlu0 %v233, 64
  %v527 = vpop.permute.xlu0 %526
  %561 = vrot.lane.b32.xlu0 %v237, 96
  %v562 = vpop.permute.xlu0 %561
  %563 = vrot.lane.b32.xlu0 %v239, 96
  %v564 = vpop.permute.xlu0 %563
  %565 = vrot.lane.b32.xlu0 %v241, 96
  %v566 = vpop.permute.xlu0 %565
  %567 = vrot.lane.b32.xlu0 %v243, 96
  %v568 = vpop.permute.xlu0 %567
  %569 = vrot.lane.b32.xlu0 %v245, 96
  %v570 = vpop.permute.xlu0 %569
  %571 = vrot.lane.b32.xlu0 %v247, 96
  %v572 = vpop.permute.xlu0 %571
  %573 = vrot.lane.b32.xlu0 %v249, 96
  %v574 = vpop.permute.xlu0 %573
  %575 = vrot.lane.b32.xlu0 %v251, 96
  %v576 = vpop.permute.xlu0 %575
  %577 = vrot.lane.b32.xlu0 %v253, 96
  %v578 = vpop.permute.xlu0 %577
  %579 = vrot.lane.b32.xlu0 %v255, 96
  %v580 = vpop.permute.xlu0 %579
  %581 = vrot.lane.b32.xlu0 %v257, 96
  %v582 = vpop.permute.xlu0 %581
  %583 = vrot.lane.b32.xlu0 %v259, 96
  %v584 = vpop.permute.xlu0 %583
  %585 = vrot.lane.b32.xlu0 %v261, 96
  %v586 = vpop.permute.xlu0 %585
  %587 = vrot.lane.b32.xlu0 %v263, 96
  %v588 = vpop.permute.xlu0 %587
  %589 = vrot.lane.b32.xlu0 %v265, 96
  %v590 = vpop.permute.xlu0 %589
  %591 = vrot.lane.b32.xlu0 %v267, 96
  %v592 = vpop.permute.xlu0 %591
  %593 = vrot.lane.b32.xlu0 %v269, 96
  %v594 = vpop.permute.xlu0 %593
  %595 = vrot.lane.b32.xlu0 %v271, 96
  %v596 = vpop.permute.xlu0 %595
  %597 = vrot.lane.b32.xlu0 %v273, 96
  %v598 = vpop.permute.xlu0 %597
  %599 = vrot.lane.b32.xlu0 %v275, 96
  %v600 = vpop.permute.xlu0 %599
  %601 = vrot.lane.b32.xlu0 %v277, 96
  %v602 = vpop.permute.xlu0 %601
  %603 = vrot.lane.b32.xlu0 %v279, 96
  %v604 = vpop.permute.xlu0 %603
  %605 = vrot.lane.b32.xlu0 %v281, 96
  %v606 = vpop.permute.xlu0 %605
  %607 = vrot.lane.b32.xlu0 %v283, 96
  %v608 = vpop.permute.xlu0 %607
  %609 = vrot.lane.b32.xlu0 %v285, 96
  %v610 = vpop.permute.xlu0 %609
  %611 = vrot.lane.b32.xlu0 %v287, 96
  %v612 = vpop.permute.xlu0 %611
  %613 = vrot.lane.b32.xlu0 %v289, 96
  %v614 = vpop.permute.xlu0 %613
  %615 = vrot.lane.b32.xlu0 %v291, 96
  %v616 = vpop.permute.xlu0 %615
  %617 = vrot.lane.b32.xlu0 %v293, 96
  %v618 = vpop.permute.xlu0 %617
  %619 = vrot.lane.b32.xlu0 %v295, 96
  %v620 = vpop.permute.xlu0 %619
  %621 = vrot.lane.b32.xlu0 %v297, 96
  %v622 = vpop.permute.xlu0 %621
  %623 = vrot.lane.b32.xlu0 %v299, 96
  %v624 = vpop.permute.xlu0 %623
  %vm657 = vcmask 261120
  %v658 = vsel %vm657, %v38, %v368
  %v659 = vsel %vm657, %v39, %v370
  %v660 = vsel %vm657, %v40, %v372
  %v661 = vsel %vm657, %v41, %v374
  %v662 = vsel %vm657, %v42, %v376
  %v663 = vsel %vm657, %v43, %v378
  %v664 = vsel %vm657, %v44, %v380
  %v665 = vsel %vm657, %v45, %v382
  %v666 = vsel %vm657, %v46, %v384
  %v667 = vsel %vm657, %v47, %v386
  %v668 = vsel %vm657, %v48, %v388
  %v669 = vsel %vm657, %v49, %v390
  %v670 = vsel %vm657, %v50, %v392
  %v671 = vsel %vm657, %v51, %v394
  %v672 = vsel %vm657, %v52, %v396
  %v673 = vsel %vm657, %v53, %v398
  %v674 = vsel %vm657, %v54, %v400
  %v675 = vsel %vm657, %v55, %v402
  %v676 = vsel %vm657, %v56, %v404
  %v677 = vsel %vm657, %v57, %v406
  %v678 = vsel %vm657, %v58, %v408
  %v679 = vsel %vm657, %v59, %v410
  %v680 = vsel %vm657, %v60, %v412
  %v681 = vsel %vm657, %v61, %v414
  %v682 = vsel %vm657, %v62, %v416
  %v683 = vsel %vm657, %v63, %v418
  %v684 = vsel %vm657, %v64, %v420
  %v685 = vsel %vm657, %v65, %v422
  %v686 = vsel %vm657, %v66, %v424
  %v687 = vsel %vm657, %v67, %v426
  %v688 = vsel %vm657, %v68, %v428
  %v689 = vsel %vm657, %v69, %v430
  %vm690 = vcmask 523264
  %v691 = vsel %vm690, %v658, %v465
  %v692 = vsel %vm690, %v659, %v467
  %v693 = vsel %vm690, %v660, %v469
  %v694 = vsel %vm690, %v661, %v471
  %v695 = vsel %vm690, %v662, %v473
  %v696 = vsel %vm690, %v663, %v475
  %v697 = vsel %vm690, %v664, %v477
  %v698 = vsel %vm690, %v665, %v479
  %v699 = vsel %vm690, %v666, %v481
  %v700 = vsel %vm690, %v667, %v483
  %v701 = vsel %vm690, %v668, %v485
  %v702 = vsel %vm690, %v669, %v487
  %v703 = vsel %vm690, %v670, %v489
  %v704 = vsel %vm690, %v671, %v491
  %v705 = vsel %vm690, %v672, %v493
  %v706 = vsel %vm690, %v673, %v495
  %v707 = vsel %vm690, %v674, %v497
  %v708 = vsel %vm690, %v675, %v499
  %v709 = vsel %vm690, %v676, %v501
  %v710 = vsel %vm690, %v677, %v503
  %v711 = vsel %vm690, %v678, %v505
  %v712 = vsel %vm690, %v679, %v507
  %v713 = vsel %vm690, %v680, %v509
  %v714 = vsel %vm690, %v681, %v511
  %v715 = vsel %vm690, %v682, %v513
  %v716 = vsel %vm690, %v683, %v515
  %v717 = vsel %vm690, %v684, %v517
  %v718 = vsel %vm690, %v685, %v519
  %v719 = vsel %vm690, %v686, %v521
  %v720 = vsel %vm690, %v687, %v523
  %v721 = vsel %vm690, %v688, %v525
  %v722 = vsel %vm690, %v689, %v527
  %vm723 = vcmask 785408
  %v724 = vsel %vm723, %v691, %v562
  %v725 = vsel %vm723, %v692, %v564
  %v726 = vsel %vm723, %v693, %v566
  %v727 = vsel %vm723, %v694, %v568
  %v728 = vsel %vm723, %v695, %v570
  %v729 = vsel %vm723, %v696, %v572
  %v730 = vsel %vm723, %v697, %v574
  %v731 = vsel %vm723, %v698, %v576
  %v732 = vsel %vm723, %v699, %v578
  %v733 = vsel %vm723, %v700, %v580
  %v734 = vsel %vm723, %v701, %v582
  %v735 = vsel %vm723, %v702, %v584
  %v736 = vsel %vm723, %v703, %v586
  %v737 = vsel %vm723, %v704, %v588
  %v738 = vsel %vm723, %v705, %v590
  %v739 = vsel %vm723, %v706, %v592
  %v740 = vsel %vm723, %v707, %v594
  %v741 = vsel %vm723, %v708, %v596
  %v742 = vsel %vm723, %v709, %v598
  %v743 = vsel %vm723, %v710, %v600
  %v744 = vsel %vm723, %v711, %v602
  %v745 = vsel %vm723, %v712, %v604
  %v746 = vsel %vm723, %v713, %v606
  %v747 = vsel %vm723, %v714, %v608
  %v748 = vsel %vm723, %v715, %v610
  %v749 = vsel %vm723, %v716, %v612
  %v750 = vsel %vm723, %v717, %v614
  %v751 = vsel %vm723, %v718, %v616
  %v752 = vsel %vm723, %v719, %v618
  %v753 = vsel %vm723, %v720, %v620
  %v754 = vsel %vm723, %v721, %v622
  %v755 = vsel %vm723, %v722, %v624
  %v756 = vld [vmem:[%s1] sm:$0xff]
  %v757 = vld [vmem:[%s1 + $0x8] sm:$0xff]
  %v758 = vld [vmem:[%s1 + $0x10] sm:$0xff]
  %v759 = vld [vmem:[%s1 + $0x18] sm:$0xff]
  %v760 = vld [vmem:[%s1 + $0x20] sm:$0xff]
  %v761 = vld [vmem:[%s1 + $0x28] sm:$0xff]
  %v762 = vld [vmem:[%s1 + $0x30] sm:$0xff]
  %v763 = vld [vmem:[%s1 + $0x38] sm:$0xff]
  %v764 = vld [vmem:[%s1 + $0x40] sm:$0xff]
  %v765 = vld [vmem:[%s1 + $0x48] sm:$0xff]
  %v766 = vld [vmem:[%s1 + $0x50] sm:$0xff]
  %v767 = vld [vmem:[%s1 + $0x58] sm:$0xff]
  %v768 = vld [vmem:[%s1 + $0x60] sm:$0xff]
  %v769 = vld [vmem:[%s1 + $0x68] sm:$0xff]
  %v770 = vld [vmem:[%s1 + $0x70] sm:$0xff]
  %v771 = vld [vmem:[%s1 + $0x78] sm:$0xff]
  %v772 = vld [vmem:[%s1 + $0x80] sm:$0xff]
  %v773 = vld [vmem:[%s1 + $0x88] sm:$0xff]
  %v774 = vld [vmem:[%s1 + $0x90] sm:$0xff]
  %v775 = vld [vmem:[%s1 + $0x98] sm:$0xff]
  %v776 = vld [vmem:[%s1 + $0xa0] sm:$0xff]
  %v777 = vld [vmem:[%s1 + $0xa8] sm:$0xff]
  %v778 = vld [vmem:[%s1 + $0xb0] sm:$0xff]
  %v779 = vld [vmem:[%s1 + $0xb8] sm:$0xff]
  %v780 = vld [vmem:[%s1 + $0xc0] sm:$0xff]
  %v781 = vld [vmem:[%s1 + $0xc8] sm:$0xff]
  %v782 = vld [vmem:[%s1 + $0xd0] sm:$0xff]
  %v783 = vld [vmem:[%s1 + $0xd8] sm:$0xff]
  %v784 = vld [vmem:[%s1 + $0xe0] sm:$0xff]
  %v785 = vld [vmem:[%s1 + $0xe8] sm:$0xff]
  %v786 = vld [vmem:[%s1 + $0xf0] sm:$0xff]
  %v787 = vld [vmem:[%s1 + $0xf8] sm:$0xff]
  %v788 = vld [vmem:[%s1 + $0x100] sm:$0xff]
  %v789 = vld [vmem:[%s1 + $0x108] sm:$0xff]
  %v790 = vld [vmem:[%s1 + $0x110] sm:$0xff]
  %v791 = vld [vmem:[%s1 + $0x118] sm:$0xff]
  %v792 = vld [vmem:[%s1 + $0x120] sm:$0xff]
  %v793 = vld [vmem:[%s1 + $0x128] sm:$0xff]
  %v794 = vld [vmem:[%s1 + $0x130] sm:$0xff]
  %v795 = vld [vmem:[%s1 + $0x138] sm:$0xff]
  %v796 = vsel %vm657, %v303, 0
  %v798 = vsel %vm657, %v305, 0
  %v800 = vsel %vm657, %v307, 0
  %v802 = vsel %vm657, %v309, 0
  %v804 = vsel %vm657, %v311, 0
  %v806 = vsel %vm657, %v313, 0
  %v808 = vsel %vm657, %v315, 0
  %v810 = vsel %vm657, %v317, 0
  %v812 = vsel %vm657, %v319, 0
  %v814 = vsel %vm657, %v321, 0
  %v816 = vsel %vm657, %v323, 0
  %v818 = vsel %vm657, %v325, 0
  %v820 = vsel %vm657, %v327, 0
  %v822 = vsel %vm657, %v329, 0
  %v824 = vsel %vm657, %v331, 0
  %v826 = vsel %vm657, %v333, 0
  %v828 = vsel %vm657, %v335, 0
  %v830 = vsel %vm657, %v337, 0
  %v832 = vsel %vm657, %v339, 0
  %v834 = vsel %vm657, %v341, 0
  %v836 = vsel %vm657, %v343, 0
  %v838 = vsel %vm657, %v345, 0
  %v840 = vsel %vm657, %v347, 0
  %v842 = vsel %vm657, %v349, 0
  %v844 = vsel %vm657, %v351, 0
  %v846 = vsel %vm657, %v353, 0
  %v848 = vsel %vm657, %v355, 0
  %v850 = vsel %vm657, %v357, 0
  %v852 = vsel %vm657, %v359, 0
  %v854 = vsel %vm657, %v361, 0
  %v856 = vsel %vm657, %v363, 0
  %v859 = vsel %vm657, %v365, 0
  %861 = vmatprep.subr.mxu0 %v757
  %862 = vmatpush1.msra.mxu0 %v756
  %863 = vmatprep.subr.mxu0 %v759
  %864 = vmatpush1.msra.mxu0 %v758
  %865 = vmatprep.subr.mxu0 %v761
  %866 = vmatpush1.msra.mxu0 %v760
  %867 = vmatprep.subr.mxu0 %v763
  %868 = vmatpush1.msra.mxu0 %v762
  %869 = vmatprep.subr.mxu0 %v765
  %870 = vmatpush1.msra.mxu0 %v764
  %871 = vmatprep.subr.mxu0 %v767
  %872 = vmatpush1.msra.mxu0 %v766
  %873 = vmatprep.subr.mxu0 %v769
  %874 = vmatpush1.msra.mxu0 %v768
  %875 = vmatprep.subr.mxu0 %v771
  %876 = vmatpush1.msra.mxu0 %v770
  %877 = vmatprep.subr.mxu0 %v773
  %878 = vmatpush1.msra.mxu0 %v772
  %879 = vmatprep.subr.mxu0 %v775
  %880 = vmatpush1.msra.mxu0 %v774
  %881 = vmatprep.subr.mxu0 %v777
  %882 = vmatpush1.msra.mxu0 %v776
  %883 = vmatprep.subr.mxu0 %v779
  %884 = vmatpush1.msra.mxu0 %v778
  %885 = vmatprep.subr.mxu0 %v781
  %886 = vmatpush1.msra.mxu0 %v780
  %887 = vmatprep.subr.mxu0 %v783
  %888 = vmatpush1.msra.mxu0 %v782
  %889 = vmatprep.subr.mxu0 %v785
  %890 = vmatpush1.msra.mxu0 %v784
  %891 = vmatprep.subr.mxu0 %v787
  %892 = vmatpush1.msra.mxu0 %v786
  %893 = vmatprep.subr.mxu0 %v789
  %894 = vmatpush1.msra.mxu0 %v788
  %895 = vmatprep.subr.mxu0 %v791
  %896 = vmatpush1.msra.mxu0 %v790
  %897 = vmatprep.subr.mxu0 %v793
  %898 = vmatpush1.msra.mxu0 %v792
  %899 = vmatprep.subr.mxu0 %v795
  %900 = vmatpush1.msra.mxu0 %v794
  %901 = vmatprep.subr.mxu0 0.0
  %902 = vmatpush1.msra.mxu0 0.0
  %903 = vmatprep.subr.mxu0 0.0
  %904 = vmatpush1.msra.mxu0 0.0
  %905 = vmatprep.subr.mxu0 0.0
  %906 = vmatpush1.msra.mxu0 0.0
  %907 = vmatprep.subr.mxu0 0.0
  %908 = vmatpush1.msra.mxu0 0.0
  %909 = vmatprep.subr.mxu0 0.0
  %910 = vmatpush1.msra.mxu0 0.0
  %911 = vmatprep.subr.mxu0 0.0
  %912 = vmatpush1.msra.mxu0 0.0
  %913 = vmatprep.subr.mxu0 0.0
  %914 = vmatpush1.msra.mxu0 0.0
  %915 = vmatprep.subr.mxu0 0.0
  %916 = vmatpush1.msra.mxu0 0.0
  %917 = vmatprep.subr.mxu0 0.0
  %918 = vmatpush1.msra.mxu0 0.0
  %919 = vmatprep.subr.mxu0 0.0
  %920 = vmatpush1.msra.mxu0 0.0
  %921 = vmatprep.subr.mxu0 0.0
  %922 = vmatpush1.msra.mxu0 0.0
  %923 = vmatprep.subr.mxu0 0.0
  %924 = vmatpush1.msra.mxu0 0.0
  %925 = vmatprep.mubr.f32.mxu0 %v796
  %926 = vmatmul.mubr.f32.gmra.mrb[0].mxu0 %v724
  %v927 = vpop.f32.mrb[0].mxu0
  %v928 = vadd.f32 0.0, %v927
  %v929 = vpop.f32.mrb[0].mxu0
  %v930 = vadd.f32 0.0, %v929
  %931 = vmatprep.mubr.f32.mxu0 %v798
  %932 = vmatmul.mubr.f32.gmra.mrb[0].mxu0 %v725
  %v933 = vpop.f32.mrb[0].mxu0
  %v934 = vadd.f32 0.0, %v933
  %v935 = vpop.f32.mrb[0].mxu0
  %v936 = vadd.f32 0.0, %v935
  %937 = vmatprep.mubr.f32.mxu0 %v800
  %938 = vmatmul.mubr.f32.gmra.mrb[0].mxu0 %v726
  %v939 = vpop.f32.mrb[0].mxu0
  %v940 = vadd.f32 0.0, %v939
  %v941 = vpop.f32.mrb[0].mxu0
  %v942 = vadd.f32 0.0, %v941
  %943 = vmatprep.mubr.f32.mxu0 %v802
  %944 = vmatmul.mubr.f32.gmra.mrb[0].mxu0 %v727
  %v945 = vpop.f32.mrb[0].mxu0
  %v946 = vadd.f32 0.0, %v945
  %v947 = vpop.f32.mrb[0].mxu0
  %v948 = vadd.f32 0.0, %v947
  %949 = vmatprep.mubr.f32.mxu0 %v804
  %950 = vmatmul.mubr.f32.gmra.mrb[0].mxu0 %v728
  %v951 = vpop.f32.mrb[0].mxu0
  %v952 = vadd.f32 0.0, %v951
  %v953 = vpop.f32.mrb[0].mxu0
  %v954 = vadd.f32 0.0, %v953
  %955 = vmatprep.mubr.f32.mxu0 %v806
  %956 = vmatmul.mubr.f32.gmra.mrb[0].mxu0 %v729
  %v957 = vpop.f32.mrb[0].mxu0
  %v958 = vadd.f32 0.0, %v957
  %v959 = vpop.f32.mrb[0].mxu0
  %v960 = vadd.f32 0.0, %v959
  %961 = vmatprep.mubr.f32.mxu0 %v808
  %962 = vmatmul.mubr.f32.gmra.mrb[0].mxu0 %v730
  %v963 = vpop.f32.mrb[0].mxu0
  %v964 = vadd.f32 0.0, %v963
  %v965 = vpop.f32.mrb[0].mxu0
  %v966 = vadd.f32 0.0, %v965
  %967 = vmatprep.mubr.f32.mxu0 %v810
  %968 = vmatmul.mubr.f32.gmra.mrb[0].mxu0 %v731
  %v969 = vpop.f32.mrb[0].mxu0
  %v970 = vadd.f32 0.0, %v969
  %v971 = vpop.f32.mrb[0].mxu0
  %v972 = vadd.f32 0.0, %v971
  %973 = vmatprep.mubr.f32.mxu0 %v812
  %974 = vmatmul.mubr.f32.gmra.mrb[0].mxu0 %v732
  %v975 = vpop.f32.mrb[0].mxu0
  %v976 = vadd.f32 0.0, %v975
  %v977 = vpop.f32.mrb[0].mxu0
  %v978 = vadd.f32 0.0, %v977
  %979 = vmatprep.mubr.f32.mxu0 %v814
  %980 = vmatmul.mubr.f32.gmra.mrb[0].mxu0 %v733
  %v981 = vpop.f32.mrb[0].mxu0
  %v982 = vadd.f32 0.0, %v981
  %v983 = vpop.f32.mrb[0].mxu0
  %v984 = vadd.f32 0.0, %v983
  %985 = vmatprep.mubr.f32.mxu0 %v816
  %986 = vmatmul.mubr.f32.gmra.mrb[0].mxu0 %v734
  %v987 = vpop.f32.mrb[0].mxu0
  %v988 = vadd.f32 0.0, %v987
  %v989 = vpop.f32.mrb[0].mxu0
  %v990 = vadd.f32 0.0, %v989
  %991 = vmatprep.mubr.f32.mxu0 %v818
  %992 = vmatmul.mubr.f32.gmra.mrb[0].mxu0 %v735
  %v993 = vpop.f32.mrb[0].mxu0
  %v994 = vadd.f32 0.0, %v993
  %v995 = vpop.f32.mrb[0].mxu0
  %v996 = vadd.f32 0.0, %v995
  %997 = vmatprep.mubr.f32.mxu0 %v820
  %998 = vmatmul.mubr.f32.gmra.mrb[0].mxu0 %v736
  %v999 = vpop.f32.mrb[0].mxu0
  %v1000 = vadd.f32 0.0, %v999
  %v1001 = vpop.f32.mrb[0].mxu0
  %v1002 = vadd.f32 0.0, %v1001
  %1003 = vmatprep.mubr.f32.mxu0 %v822
  %1004 = vmatmul.mubr.f32.gmra.mrb[0].mxu0 %v737
  %v1005 = vpop.f32.mrb[0].mxu0
  %v1006 = vadd.f32 0.0, %v1005
  %v1007 = vpop.f32.mrb[0].mxu0
  %v1008 = vadd.f32 0.0, %v1007
  %1009 = vmatprep.mubr.f32.mxu0 %v824
  %1010 = vmatmul.mubr.f32.gmra.mrb[0].mxu0 %v738
  %v1011 = vpop.f32.mrb[0].mxu0
  %v1012 = vadd.f32 0.0, %v1011
  %v1013 = vpop.f32.mrb[0].mxu0
  %v1014 = vadd.f32 0.0, %v1013
  %1015 = vmatprep.mubr.f32.mxu0 %v826
  %1016 = vmatmul.mubr.f32.gmra.mrb[0].mxu0 %v739
  %v1017 = vpop.f32.mrb[0].mxu0
  %v1018 = vadd.f32 0.0, %v1017
  %v1019 = vpop.f32.mrb[0].mxu0
  %v1020 = vadd.f32 0.0, %v1019
  %1021 = vmatprep.mubr.f32.mxu0 %v828
  %1022 = vmatmul.mubr.f32.gmra.mrb[0].mxu0 %v740
  %v1023 = vpop.f32.mrb[0].mxu0
  %v1024 = vadd.f32 0.0, %v1023
  %v1025 = vpop.f32.mrb[0].mxu0
  %v1026 = vadd.f32 0.0, %v1025
  %1027 = vmatprep.mubr.f32.mxu0 %v830
  %1028 = vmatmul.mubr.f32.gmra.mrb[0].mxu0 %v741
  %v1029 = vpop.f32.mrb[0].mxu0
  %v1030 = vadd.f32 0.0, %v1029
  %v1031 = vpop.f32.mrb[0].mxu0
  %v1032 = vadd.f32 0.0, %v1031
  %1033 = vmatprep.mubr.f32.mxu0 %v832
  %1034 = vmatmul.mubr.f32.gmra.mrb[0].mxu0 %v742
  %v1035 = vpop.f32.mrb[0].mxu0
  %v1036 = vadd.f32 0.0, %v1035
  %v1037 = vpop.f32.mrb[0].mxu0
  %v1038 = vadd.f32 0.0, %v1037
  %1039 = vmatprep.mubr.f32.mxu0 %v834
  %1040 = vmatmul.mubr.f32.gmra.mrb[0].mxu0 %v743
  %v1041 = vpop.f32.mrb[0].mxu0
  %v1042 = vadd.f32 0.0, %v1041
  %v1043 = vpop.f32.mrb[0].mxu0
  %v1044 = vadd.f32 0.0, %v1043
  %1045 = vmatprep.mubr.f32.mxu0 %v836
  %1046 = vmatmul.mubr.f32.gmra.mrb[0].mxu0 %v744
  %v1047 = vpop.f32.mrb[0].mxu0
  %v1048 = vadd.f32 0.0, %v1047
  %v1049 = vpop.f32.mrb[0].mxu0
  %v1050 = vadd.f32 0.0, %v1049
  %1051 = vmatprep.mubr.f32.mxu0 %v838
  %1052 = vmatmul.mubr.f32.gmra.mrb[0].mxu0 %v745
  %v1053 = vpop.f32.mrb[0].mxu0
  %v1054 = vadd.f32 0.0, %v1053
  %v1055 = vpop.f32.mrb[0].mxu0
  %v1056 = vadd.f32 0.0, %v1055
  %1057 = vmatprep.mubr.f32.mxu0 %v840
  %1058 = vmatmul.mubr.f32.gmra.mrb[0].mxu0 %v746
  %v1059 = vpop.f32.mrb[0].mxu0
  %v1060 = vadd.f32 0.0, %v1059
  %v1061 = vpop.f32.mrb[0].mxu0
  %v1062 = vadd.f32 0.0, %v1061
  %1063 = vmatprep.mubr.f32.mxu0 %v842
  %1064 = vmatmul.mubr.f32.gmra.mrb[0].mxu0 %v747
  %v1065 = vpop.f32.mrb[0].mxu0
  %v1066 = vadd.f32 0.0, %v1065
  %v1067 = vpop.f32.mrb[0].mxu0
  %v1068 = vadd.f32 0.0, %v1067
  %1069 = vmatprep.mubr.f32.mxu0 %v844
  %1070 = vmatmul.mubr.f32.gmra.mrb[0].mxu0 %v748
  %v1071 = vpop.f32.mrb[0].mxu0
  %v1072 = vadd.f32 0.0, %v1071
  %v1073 = vpop.f32.mrb[0].mxu0
  %v1074 = vadd.f32 0.0, %v1073
  %1075 = vmatprep.mubr.f32.mxu0 %v846
  %1076 = vmatmul.mubr.f32.gmra.mrb[0].mxu0 %v749
  %v1077 = vpop.f32.mrb[0].mxu0
  %v1078 = vadd.f32 0.0, %v1077
  %v1079 = vpop.f32.mrb[0].mxu0
  %v1080 = vadd.f32 0.0, %v1079
  %1081 = vmatprep.mubr.f32.mxu0 %v848
  %1082 = vmatmul.mubr.f32.gmra.mrb[0].mxu0 %v750
  %v1083 = vpop.f32.mrb[0].mxu0
  %v1084 = vadd.f32 0.0, %v1083
  %v1085 = vpop.f32.mrb[0].mxu0
  %v1086 = vadd.f32 0.0, %v1085
  %1087 = vmatprep.mubr.f32.mxu0 %v850
  %1088 = vmatmul.mubr.f32.gmra.mrb[0].mxu0 %v751
  %v1089 = vpop.f32.mrb[0].mxu0
  %v1090 = vadd.f32 0.0, %v1089
  %v1091 = vpop.f32.mrb[0].mxu0
  %v1092 = vadd.f32 0.0, %v1091
  %1093 = vmatprep.mubr.f32.mxu0 %v852
  %1094 = vmatmul.mubr.f32.gmra.mrb[0].mxu0 %v752
  %v1095 = vpop.f32.mrb[0].mxu0
  %v1096 = vadd.f32 0.0, %v1095
  %v1097 = vpop.f32.mrb[0].mxu0
  %v1098 = vadd.f32 0.0, %v1097
  %1099 = vmatprep.mubr.f32.mxu0 %v854
  %1100 = vmatmul.mubr.f32.gmra.mrb[0].mxu0 %v753
  %v1101 = vpop.f32.mrb[0].mxu0
  %v1102 = vadd.f32 0.0, %v1101
  %v1103 = vpop.f32.mrb[0].mxu0
  %v1104 = vadd.f32 0.0, %v1103
  %1105 = vmatprep.mubr.f32.mxu0 %v856
  %1106 = vmatmul.mubr.f32.gmra.mrb[0].mxu0 %v754
  %v1107 = vpop.f32.mrb[0].mxu0
  %v1108 = vadd.f32 0.0, %v1107
  %v1109 = vpop.f32.mrb[0].mxu0
  %v1110 = vadd.f32 0.0, %v1109
  %1111 = vmatprep.mubr.f32.mxu0 %v859
  %1112 = vmatmul.mubr.f32.gmra.mrb[0].mxu0 %v755
  %v1113 = vpop.f32.mrb[0].mxu0
  %v1114 = vadd.f32 0.0, %v1113
  %v1115 = vpop.f32.mrb[0].mxu0
  %v1116 = vadd.f32 0.0, %v1115
  %1117 = vdwg.mxu0
  %1182 = vrot.lane.b32.xlu0 %v928, 44
  %v1183 = vpop.permute.xlu0 %1182
  %1184 = vrot.lane.b32.xlu0 %v930, 44
  %v1185 = vpop.permute.xlu0 %1184
  %1186 = vrot.lane.b32.xlu0 %v934, 44
  %v1187 = vpop.permute.xlu0 %1186
  %1188 = vrot.lane.b32.xlu0 %v936, 44
  %v1189 = vpop.permute.xlu0 %1188
  %1190 = vrot.lane.b32.xlu0 %v940, 44
  %v1191 = vpop.permute.xlu0 %1190
  %1192 = vrot.lane.b32.xlu0 %v942, 44
  %v1193 = vpop.permute.xlu0 %1192
  %1194 = vrot.lane.b32.xlu0 %v946, 44
  %v1195 = vpop.permute.xlu0 %1194
  %1196 = vrot.lane.b32.xlu0 %v948, 44
  %v1197 = vpop.permute.xlu0 %1196
  %1198 = vrot.lane.b32.xlu0 %v952, 44
  %v1199 = vpop.permute.xlu0 %1198
  %1200 = vrot.lane.b32.xlu0 %v954, 44
  %v1201 = vpop.permute.xlu0 %1200
  %1202 = vrot.lane.b32.xlu0 %v958, 44
  %v1203 = vpop.permute.xlu0 %1202
  %1204 = vrot.lane.b32.xlu0 %v960, 44
  %v1205 = vpop.permute.xlu0 %1204
  %1206 = vrot.lane.b32.xlu0 %v964, 44
  %v1207 = vpop.permute.xlu0 %1206
  %1208 = vrot.lane.b32.xlu0 %v966, 44
  %v1209 = vpop.permute.xlu0 %1208
  %1210 = vrot.lane.b32.xlu0 %v970, 44
  %v1211 = vpop.permute.xlu0 %1210
  %1212 = vrot.lane.b32.xlu0 %v972, 44
  %v1213 = vpop.permute.xlu0 %1212
  %1214 = vrot.lane.b32.xlu0 %v976, 44
  %v1215 = vpop.permute.xlu0 %1214
  %1216 = vrot.lane.b32.xlu0 %v978, 44
  %v1217 = vpop.permute.xlu0 %1216
  %1218 = vrot.lane.b32.xlu0 %v982, 44
  %v1219 = vpop.permute.xlu0 %1218
  %1220 = vrot.lane.b32.xlu0 %v984, 44
  %v1221 = vpop.permute.xlu0 %1220
  %1222 = vrot.lane.b32.xlu0 %v988, 44
  %v1223 = vpop.permute.xlu0 %1222
  %1224 = vrot.lane.b32.xlu0 %v990, 44
  %v1225 = vpop.permute.xlu0 %1224
  %1226 = vrot.lane.b32.xlu0 %v994, 44
  %v1227 = vpop.permute.xlu0 %1226
  %1228 = vrot.lane.b32.xlu0 %v996, 44
  %v1229 = vpop.permute.xlu0 %1228
  %1230 = vrot.lane.b32.xlu0 %v1000, 44
  %v1231 = vpop.permute.xlu0 %1230
  %1232 = vrot.lane.b32.xlu0 %v1002, 44
  %v1233 = vpop.permute.xlu0 %1232
  %1234 = vrot.lane.b32.xlu0 %v1006, 44
  %v1235 = vpop.permute.xlu0 %1234
  %1236 = vrot.lane.b32.xlu0 %v1008, 44
  %v1237 = vpop.permute.xlu0 %1236
  %1238 = vrot.lane.b32.xlu0 %v1012, 44
  %v1239 = vpop.permute.xlu0 %1238
  %1240 = vrot.lane.b32.xlu0 %v1014, 44
  %v1241 = vpop.permute.xlu0 %1240
  %1242 = vrot.lane.b32.xlu0 %v1018, 44
  %v1243 = vpop.permute.xlu0 %1242
  %1244 = vrot.lane.b32.xlu0 %v1020, 44
  %v1245 = vpop.permute.xlu0 %1244
  %1246 = vrot.lane.b32.xlu0 %v1024, 44
  %v1247 = vpop.permute.xlu0 %1246
  %1248 = vrot.lane.b32.xlu0 %v1026, 44
  %v1249 = vpop.permute.xlu0 %1248
  %1250 = vrot.lane.b32.xlu0 %v1030, 44
  %v1251 = vpop.permute.xlu0 %1250
  %1252 = vrot.lane.b32.xlu0 %v1032, 44
  %v1253 = vpop.permute.xlu0 %1252
  %1254 = vrot.lane.b32.xlu0 %v1036, 44
  %v1255 = vpop.permute.xlu0 %1254
  %1256 = vrot.lane.b32.xlu0 %v1038, 44
  %v1257 = vpop.permute.xlu0 %1256
  %1258 = vrot.lane.b32.xlu0 %v1042, 44
  %v1259 = vpop.permute.xlu0 %1258
  %1260 = vrot.lane.b32.xlu0 %v1044, 44
  %v1261 = vpop.permute.xlu0 %1260
  %1262 = vrot.lane.b32.xlu0 %v1048, 44
  %v1263 = vpop.permute.xlu0 %1262
  %1264 = vrot.lane.b32.xlu0 %v1050, 44
  %v1265 = vpop.permute.xlu0 %1264
  %1266 = vrot.lane.b32.xlu0 %v1054, 44
  %v1267 = vpop.permute.xlu0 %1266
  %1268 = vrot.lane.b32.xlu0 %v1056, 44
  %v1269 = vpop.permute.xlu0 %1268
  %1270 = vrot.lane.b32.xlu0 %v1060, 44
  %v1271 = vpop.permute.xlu0 %1270
  %1272 = vrot.lane.b32.xlu0 %v1062, 44
  %v1273 = vpop.permute.xlu0 %1272
  %1274 = vrot.lane.b32.xlu0 %v1066, 44
  %v1275 = vpop.permute.xlu0 %1274
  %1276 = vrot.lane.b32.xlu0 %v1068, 44
  %v1277 = vpop.permute.xlu0 %1276
  %1278 = vrot.lane.b32.xlu0 %v1072, 44
  %v1279 = vpop.permute.xlu0 %1278
  %1280 = vrot.lane.b32.xlu0 %v1074, 44
  %v1281 = vpop.permute.xlu0 %1280
  %1282 = vrot.lane.b32.xlu0 %v1078, 44
  %v1283 = vpop.permute.xlu0 %1282
  %1284 = vrot.lane.b32.xlu0 %v1080, 44
  %v1285 = vpop.permute.xlu0 %1284
  %1286 = vrot.lane.b32.xlu0 %v1084, 44
  %v1287 = vpop.permute.xlu0 %1286
  %1288 = vrot.lane.b32.xlu0 %v1086, 44
  %v1289 = vpop.permute.xlu0 %1288
  %1290 = vrot.lane.b32.xlu0 %v1090, 44
  %v1291 = vpop.permute.xlu0 %1290
  %1292 = vrot.lane.b32.xlu0 %v1092, 44
  %v1293 = vpop.permute.xlu0 %1292
  %1294 = vrot.lane.b32.xlu0 %v1096, 44
  %v1295 = vpop.permute.xlu0 %1294
  %1296 = vrot.lane.b32.xlu0 %v1098, 44
  %v1297 = vpop.permute.xlu0 %1296
  %1298 = vrot.lane.b32.xlu0 %v1102, 44
  %v1299 = vpop.permute.xlu0 %1298
  %1300 = vrot.lane.b32.xlu0 %v1104, 44
  %v1301 = vpop.permute.xlu0 %1300
  %1302 = vrot.lane.b32.xlu0 %v1108, 44
  %v1303 = vpop.permute.xlu0 %1302
  %1304 = vrot.lane.b32.xlu0 %v1110, 44
  %v1305 = vpop.permute.xlu0 %1304
  %1306 = vrot.lane.b32.xlu0 %v1114, 44
  %v1307 = vpop.permute.xlu0 %1306
  %1308 = vrot.lane.b32.xlu0 %v1116, 44
  %v1309 = vpop.permute.xlu0 %1308
  %vm1310 = vcmask 359424
  %v1311 = vsel %vm1310, %v1183, %v1185
  %v1312 = vsel %vm1310, %v1187, %v1189
  %v1313 = vsel %vm1310, %v1191, %v1193
  %v1314 = vsel %vm1310, %v1195, %v1197
  %v1315 = vsel %vm1310, %v1199, %v1201
  %v1316 = vsel %vm1310, %v1203, %v1205
  %v1317 = vsel %vm1310, %v1207, %v1209
  %v1318 = vsel %vm1310, %v1211, %v1213
  %v1319 = vsel %vm1310, %v1215, %v1217
  %v1320 = vsel %vm1310, %v1219, %v1221
  %v1321 = vsel %vm1310, %v1223, %v1225
  %v1322 = vsel %vm1310, %v1227, %v1229
  %v1323 = vsel %vm1310, %v1231, %v1233
  %v1324 = vsel %vm1310, %v1235, %v1237
  %v1325 = vsel %vm1310, %v1239, %v1241
  %v1326 = vsel %vm1310, %v1243, %v1245
  %v1327 = vsel %vm1310, %v1247, %v1249
  %v1328 = vsel %vm1310, %v1251, %v1253
  %v1329 = vsel %vm1310, %v1255, %v1257
  %v1330 = vsel %vm1310, %v1259, %v1261
  %v1331 = vsel %vm1310, %v1263, %v1265
  %v1332 = vsel %vm1310, %v1267, %v1269
  %v1333 = vsel %vm1310, %v1271, %v1273
  %v1334 = vsel %vm1310, %v1275, %v1277
  %v1335 = vsel %vm1310, %v1279, %v1281
  %v1336 = vsel %vm1310, %v1283, %v1285
  %v1337 = vsel %vm1310, %v1287, %v1289
  %v1338 = vsel %vm1310, %v1291, %v1293
  %v1339 = vsel %vm1310, %v1295, %v1297
  %v1340 = vsel %vm1310, %v1299, %v1301
  %v1341 = vsel %vm1310, %v1303, %v1305
  %v1342 = vsel %vm1310, %v1307, %v1309
  %v1375 = vmax.f32 %v928, %v1311
  %v1376 = vmax.f32 %v934, %v1312
  %v1377 = vmax.f32 %v940, %v1313
  %v1378 = vmax.f32 %v946, %v1314
  %v1379 = vmax.f32 %v952, %v1315
  %v1380 = vmax.f32 %v958, %v1316
  %v1381 = vmax.f32 %v964, %v1317
  %v1382 = vmax.f32 %v970, %v1318
  %v1383 = vmax.f32 %v976, %v1319
  %v1384 = vmax.f32 %v982, %v1320
  %v1385 = vmax.f32 %v988, %v1321
  %v1386 = vmax.f32 %v994, %v1322
  %v1387 = vmax.f32 %v1000, %v1323
  %v1388 = vmax.f32 %v1006, %v1324
  %v1389 = vmax.f32 %v1012, %v1325
  %v1390 = vmax.f32 %v1018, %v1326
  %v1391 = vmax.f32 %v1024, %v1327
  %v1392 = vmax.f32 %v1030, %v1328
  %v1393 = vmax.f32 %v1036, %v1329
  %v1394 = vmax.f32 %v1042, %v1330
  %v1395 = vmax.f32 %v1048, %v1331
  %v1396 = vmax.f32 %v1054, %v1332
  %v1397 = vmax.f32 %v1060, %v1333
  %v1398 = vmax.f32 %v1066, %v1334
  %v1399 = vmax.f32 %v1072, %v1335
  %v1400 = vmax.f32 %v1078, %v1336
  %v1401 = vmax.f32 %v1084, %v1337
  %v1402 = vmax.f32 %v1090, %v1338
  %v1403 = vmax.f32 %v1096, %v1339
  %v1404 = vmax.f32 %v1102, %v1340
  %v1405 = vmax.f32 %v1108, %v1341
  %v1406 = vmax.f32 %v1114, %v1342
  %vm1407 = vcmask 687104
  %1408 = vst.msk [vmem:[#allocation2] sm:$0xff] %vm1407, %v1375
  %1409 = vst.msk [vmem:[#allocation2 + $0x8] sm:$0xff] %vm1407, %v1376
  %1410 = vst.msk [vmem:[#allocation2 + $0x10] sm:$0xff] %vm1407, %v1377
  %1411 = vst.msk [vmem:[#allocation2 + $0x18] sm:$0xff] %vm1407, %v1378
  %1412 = vst.msk [vmem:[#allocation2 + $0x20] sm:$0xff] %vm1407, %v1379
  %1413 = vst.msk [vmem:[#allocation2 + $0x28] sm:$0xff] %vm1407, %v1380
  %1414 = vst.msk [vmem:[#allocation2 + $0x30] sm:$0xff] %vm1407, %v1381
  %1415 = vst.msk [vmem:[#allocation2 + $0x38] sm:$0xff] %vm1407, %v1382
  %1416 = vst.msk [vmem:[#allocation2 + $0x40] sm:$0xff] %vm1407, %v1383
  %1417 = vst.msk [vmem:[#allocation2 + $0x48] sm:$0xff] %vm1407, %v1384
  %1418 = vst.msk [vmem:[#allocation2 + $0x50] sm:$0xff] %vm1407, %v1385
  %1419 = vst.msk [vmem:[#allocation2 + $0x58] sm:$0xff] %vm1407, %v1386
  %1420 = vst.msk [vmem:[#allocation2 + $0x60] sm:$0xff] %vm1407, %v1387
  %1421 = vst.msk [vmem:[#allocation2 + $0x68] sm:$0xff] %vm1407, %v1388
  %1422 = vst.msk [vmem:[#allocation2 + $0x70] sm:$0xff] %vm1407, %v1389
  %1423 = vst.msk [vmem:[#allocation2 + $0x78] sm:$0xff] %vm1407, %v1390
  %1424 = vst.msk [vmem:[#allocation2 + $0x80] sm:$0xff] %vm1407, %v1391
  %1425 = vst.msk [vmem:[#allocation2 + $0x88] sm:$0xff] %vm1407, %v1392
  %1426 = vst.msk [vmem:[#allocation2 + $0x90] sm:$0xff] %vm1407, %v1393
  %1427 = vst.msk [vmem:[#allocation2 + $0x98] sm:$0xff] %vm1407, %v1394
  %1428 = vst.msk [vmem:[#allocation2 + $0xa0] sm:$0xff] %vm1407, %v1395
  %1429 = vst.msk [vmem:[#allocation2 + $0xa8] sm:$0xff] %vm1407, %v1396
  %1430 = vst.msk [vmem:[#allocation2 + $0xb0] sm:$0xff] %vm1407, %v1397
  %1431 = vst.msk [vmem:[#allocation2 + $0xb8] sm:$0xff] %vm1407, %v1398
  %1432 = vst.msk [vmem:[#allocation2 + $0xc0] sm:$0xff] %vm1407, %v1399
  %1433 = vst.msk [vmem:[#allocation2 + $0xc8] sm:$0xff] %vm1407, %v1400
  %1434 = vst.msk [vmem:[#allocation2 + $0xd0] sm:$0xff] %vm1407, %v1401
  %1435 = vst.msk [vmem:[#allocation2 + $0xd8] sm:$0xff] %vm1407, %v1402
  %1436 = vst.msk [vmem:[#allocation2 + $0xe0] sm:$0xff] %vm1407, %v1403
  %1437 = vst.msk [vmem:[#allocation2 + $0xe8] sm:$0xff] %vm1407, %v1404
  %1438 = vst.msk [vmem:[#allocation2 + $0xf0] sm:$0xff] %vm1407, %v1405
  %1439 = vst.msk [vmem:[#allocation2 + $0xf8] sm:$0xff] %vm1407, %v1406
  %v1440 = vld [vmem:[#allocation2] ss:$2 sm:$0xff]
  %s1441 = scalar_lea.vmem [#allocation2], 16
  %v1442 = vld [vmem:[%s1441] ss:$2 sm:$0xff]
  %s1443 = scalar_lea.vmem [#allocation2], 32
  %v1444 = vld [vmem:[%s1443] ss:$2 sm:$0xff]
  %s1445 = scalar_lea.vmem [#allocation2], 48
  %v1446 = vld [vmem:[%s1445] ss:$2 sm:$0xff]
  %s1447 = scalar_lea.vmem [#allocation2], 64
  %v1448 = vld [vmem:[%s1447] ss:$2 sm:$0xff]
  %s1449 = scalar_lea.vmem [#allocation2], 80
  %v1450 = vld [vmem:[%s1449] ss:$2 sm:$0xff]
  %s1451 = scalar_lea.vmem [#allocation2], 96
  %v1452 = vld [vmem:[%s1451] ss:$2 sm:$0xff]
  %s1453 = scalar_lea.vmem [#allocation2], 112
  %v1454 = vld [vmem:[%s1453] ss:$2 sm:$0xff]
  %s1455 = scalar_lea.vmem [#allocation2], 128
  %v1456 = vld [vmem:[%s1455] ss:$2 sm:$0xff]
  %s1457 = scalar_lea.vmem [#allocation2], 144
  %v1458 = vld [vmem:[%s1457] ss:$2 sm:$0xff]
  %s1459 = scalar_lea.vmem [#allocation2], 160
  %v1460 = vld [vmem:[%s1459] ss:$2 sm:$0xff]
  %s1461 = scalar_lea.vmem [#allocation2], 176
  %v1462 = vld [vmem:[%s1461] ss:$2 sm:$0xff]
  %s1463 = scalar_lea.vmem [#allocation2], 192
  %v1464 = vld [vmem:[%s1463] ss:$2 sm:$0xff]
  %s1465 = scalar_lea.vmem [#allocation2], 208
  %v1466 = vld [vmem:[%s1465] ss:$2 sm:$0xff]
  %s1467 = scalar_lea.vmem [#allocation2], 224
  %v1468 = vld [vmem:[%s1467] ss:$2 sm:$0xff]
  %s1469 = scalar_lea.vmem [#allocation2], 240
  %v1470 = vld [vmem:[%s1469] ss:$2 sm:$0xff]
  %s1471 = scalar_lea.vmem [#allocation2], 1
  %v1472 = vld [vmem:[%s1471] ss:$2 sm:$0xff]
  %s1473 = scalar_lea.vmem [#allocation2], 17
  %v1474 = vld [vmem:[%s1473] ss:$2 sm:$0xff]
  %s1475 = scalar_lea.vmem [#allocation2], 33
  %v1476 = vld [vmem:[%s1475] ss:$2 sm:$0xff]
  %s1477 = scalar_lea.vmem [#allocation2], 49
  %v1478 = vld [vmem:[%s1477] ss:$2 sm:$0xff]
  %s1479 = scalar_lea.vmem [#allocation2], 65
  %v1480 = vld [vmem:[%s1479] ss:$2 sm:$0xff]
  %s1481 = scalar_lea.vmem [#allocation2], 81
  %v1482 = vld [vmem:[%s1481] ss:$2 sm:$0xff]
  %s1483 = scalar_lea.vmem [#allocation2], 97
  %v1484 = vld [vmem:[%s1483] ss:$2 sm:$0xff]
  %s1485 = scalar_lea.vmem [#allocation2], 113
  %v1486 = vld [vmem:[%s1485] ss:$2 sm:$0xff]
  %s1487 = scalar_lea.vmem [#allocation2], 129
  %v1488 = vld [vmem:[%s1487] ss:$2 sm:$0xff]
  %s1489 = scalar_lea.vmem [#allocation2], 145
  %v1490 = vld [vmem:[%s1489] ss:$2 sm:$0xff]
  %s1491 = scalar_lea.vmem [#allocation2], 161
  %v1492 = vld [vmem:[%s1491] ss:$2 sm:$0xff]
  %s1493 = scalar_lea.vmem [#allocation2], 177
  %v1494 = vld [vmem:[%s1493] ss:$2 sm:$0xff]
  %s1495 = scalar_lea.vmem [#allocation2], 193
  %v1496 = vld [vmem:[%s1495] ss:$2 sm:$0xff]
  %s1497 = scalar_lea.vmem [#allocation2], 209
  %v1498 = vld [vmem:[%s1497] ss:$2 sm:$0xff]
  %s1499 = scalar_lea.vmem [#allocation2], 225
  %v1500 = vld [vmem:[%s1499] ss:$2 sm:$0xff]
  %s1501 = scalar_lea.vmem [#allocation2], 241
  %v1502 = vld [vmem:[%s1501] ss:$2 sm:$0xff]
  %v1503 = vmax.f32 %v1440, %v1472
  %v1504 = vmax.f32 %v1442, %v1474
  %v1505 = vmax.f32 %v1444, %v1476
  %v1506 = vmax.f32 %v1446, %v1478
  %v1507 = vmax.f32 %v1448, %v1480
  %v1508 = vmax.f32 %v1450, %v1482
  %v1509 = vmax.f32 %v1452, %v1484
  %v1510 = vmax.f32 %v1454, %v1486
  %v1511 = vmax.f32 %v1456, %v1488
  %v1512 = vmax.f32 %v1458, %v1490
  %v1513 = vmax.f32 %v1460, %v1492
  %v1514 = vmax.f32 %v1462, %v1494
  %v1515 = vmax.f32 %v1464, %v1496
  %v1516 = vmax.f32 %v1466, %v1498
  %v1517 = vmax.f32 %v1468, %v1500
  %v1518 = vmax.f32 %v1470, %v1502
  %v1519 = vld [vmem:[%s2] sm:$0x1]
  %v1521 = vlaneseq
  %v1522 = vshrl.u32 %v1521, 7
  %v1523 = vsub.s32 0, %v1522
  %v1524 = vrot.slane %v1519, %v1523
  %v1526 = vadd.f32 %v1503, %v1524
  %v1527 = vadd.f32 %v1504, %v1524
  %v1528 = vadd.f32 %v1505, %v1524
  %v1529 = vadd.f32 %v1506, %v1524
  %v1530 = vadd.f32 %v1507, %v1524
  %v1531 = vadd.f32 %v1508, %v1524
  %v1532 = vadd.f32 %v1509, %v1524
  %v1533 = vadd.f32 %v1510, %v1524
  %v1534 = vadd.f32 %v1511, %v1524
  %v1535 = vadd.f32 %v1512, %v1524
  %v1536 = vadd.f32 %v1513, %v1524
  %v1537 = vadd.f32 %v1514, %v1524
  %v1538 = vadd.f32 %v1515, %v1524
  %v1539 = vadd.f32 %v1516, %v1524
  %v1540 = vadd.f32 %v1517, %v1524
  %v1541 = vadd.f32 %v1518, %v1524
  %v1542 = vmul.f32 %v1526, 0.5
  %v1543 = vmul.f32 %v1527, 0.5
  %v1544 = vmul.f32 %v1528, 0.5
  %v1545 = vmul.f32 %v1529, 0.5
  %v1546 = vmul.f32 %v1530, 0.5
  %v1547 = vmul.f32 %v1531, 0.5
  %v1548 = vmul.f32 %v1532, 0.5
  %v1549 = vmul.f32 %v1533, 0.5
  %v1550 = vmul.f32 %v1534, 0.5
  %v1551 = vmul.f32 %v1535, 0.5
  %v1552 = vmul.f32 %v1536, 0.5
  %v1553 = vmul.f32 %v1537, 0.5
  %v1554 = vmul.f32 %v1538, 0.5
  %v1555 = vmul.f32 %v1539, 0.5
  %v1556 = vmul.f32 %v1540, 0.5
  %v1557 = vmul.f32 %v1541, 0.5
  %v1558 = vtanh.pop %v1542
  %v1559 = vtanh.pop %v1543
  %v1560 = vtanh.pop %v1544
  %v1561 = vtanh.pop %v1545
  %v1562 = vtanh.pop %v1546
  %v1563 = vtanh.pop %v1547
  %v1564 = vtanh.pop %v1548
  %v1565 = vtanh.pop %v1549
  %v1566 = vtanh.pop %v1550
  %v1567 = vtanh.pop %v1551
  %v1568 = vtanh.pop %v1552
  %v1569 = vtanh.pop %v1553
  %v1570 = vtanh.pop %v1554
  %v1571 = vtanh.pop %v1555
  %v1572 = vtanh.pop %v1556
  %v1573 = vtanh.pop %v1557
  %v1574 = vmul.f32 %v1558, 0.5
  %v1575 = vmul.f32 %v1559, 0.5
  %v1576 = vmul.f32 %v1560, 0.5
  %v1577 = vmul.f32 %v1561, 0.5
  %v1578 = vmul.f32 %v1562, 0.5
  %v1579 = vmul.f32 %v1563, 0.5
  %v1580 = vmul.f32 %v1564, 0.5
  %v1581 = vmul.f32 %v1565, 0.5
  %v1582 = vmul.f32 %v1566, 0.5
  %v1583 = vmul.f32 %v1567, 0.5
  %v1584 = vmul.f32 %v1568, 0.5
  %v1585 = vmul.f32 %v1569, 0.5
  %v1586 = vmul.f32 %v1570, 0.5
  %v1587 = vmul.f32 %v1571, 0.5
  %v1588 = vmul.f32 %v1572, 0.5
  %v1589 = vmul.f32 %v1573, 0.5
  %v1590 = vadd.f32 %v1574, 0.5
  %v1591 = vadd.f32 %v1575, 0.5
  %v1592 = vadd.f32 %v1576, 0.5
  %v1593 = vadd.f32 %v1577, 0.5
  %v1594 = vadd.f32 %v1578, 0.5
  %v1595 = vadd.f32 %v1579, 0.5
  %v1596 = vadd.f32 %v1580, 0.5
  %v1597 = vadd.f32 %v1581, 0.5
  %v1598 = vadd.f32 %v1582, 0.5
  %v1599 = vadd.f32 %v1583, 0.5
  %v1600 = vadd.f32 %v1584, 0.5
  %v1601 = vadd.f32 %v1585, 0.5
  %v1602 = vadd.f32 %v1586, 0.5
  %v1603 = vadd.f32 %v1587, 0.5
  %v1604 = vadd.f32 %v1588, 0.5
  %v1605 = vadd.f32 %v1589, 0.5
  %v1622 = vrot.slane %v1590, 1
  %v1623 = vrot.slane %v1591, 1
  %v1624 = vsel %vm102, %v1622, %v1623
  %v1625 = vrot.slane %v1592, 1
  %v1626 = vsel %vm102, %v1623, %v1625
  %v1627 = vrot.slane %v1593, 1
  %v1628 = vsel %vm102, %v1625, %v1627
  %v1629 = vrot.slane %v1594, 1
  %v1630 = vsel %vm102, %v1627, %v1629
  %v1631 = vrot.slane %v1595, 1
  %v1632 = vsel %vm102, %v1629, %v1631
  %v1633 = vrot.slane %v1596, 1
  %v1634 = vsel %vm102, %v1631, %v1633
  %v1635 = vrot.slane %v1597, 1
  %v1636 = vsel %vm102, %v1633, %v1635
  %v1637 = vrot.slane %v1598, 1
  %v1638 = vsel %vm102, %v1635, %v1637
  %v1639 = vrot.slane %v1599, 1
  %v1640 = vsel %vm102, %v1637, %v1639
  %v1641 = vrot.slane %v1600, 1
  %v1642 = vsel %vm102, %v1639, %v1641
  %v1643 = vrot.slane %v1601, 1
  %v1644 = vsel %vm102, %v1641, %v1643
  %v1645 = vrot.slane %v1602, 1
  %v1646 = vsel %vm102, %v1643, %v1645
  %v1647 = vrot.slane %v1603, 1
  %v1648 = vsel %vm102, %v1645, %v1647
  %v1649 = vrot.slane %v1604, 1
  %v1650 = vsel %vm102, %v1647, %v1649
  %v1651 = vrot.slane %v1605, 1
  %v1652 = vsel %vm102, %v1649, %v1651
  %v1654 = vsel %vm102, %v1651, 0.0
  %v1655 = vrot.slane %v1590, 2
  %v1656 = vrot.slane %v1591, 2
  %v1657 = vsel %vm168, %v1655, %v1656
  %v1658 = vrot.slane %v1592, 2
  %v1659 = vsel %vm168, %v1656, %v1658
  %v1660 = vrot.slane %v1593, 2
  %v1661 = vsel %vm168, %v1658, %v1660
  %v1662 = vrot.slane %v1594, 2
  %v1663 = vsel %vm168, %v1660, %v1662
  %v1664 = vrot.slane %v1595, 2
  %v1665 = vsel %vm168, %v1662, %v1664
  %v1666 = vrot.slane %v1596, 2
  %v1667 = vsel %vm168, %v1664, %v1666
  %v1668 = vrot.slane %v1597, 2
  %v1669 = vsel %vm168, %v1666, %v1668
  %v1670 = vrot.slane %v1598, 2
  %v1671 = vsel %vm168, %v1668, %v1670
  %v1672 = vrot.slane %v1599, 2
  %v1673 = vsel %vm168, %v1670, %v1672
  %v1674 = vrot.slane %v1600, 2
  %v1675 = vsel %vm168, %v1672, %v1674
  %v1676 = vrot.slane %v1601, 2
  %v1677 = vsel %vm168, %v1674, %v1676
  %v1678 = vrot.slane %v1602, 2
  %v1679 = vsel %vm168, %v1676, %v1678
  %v1680 = vrot.slane %v1603, 2
  %v1681 = vsel %vm168, %v1678, %v1680
  %v1682 = vrot.slane %v1604, 2
  %v1683 = vsel %vm168, %v1680, %v1682
  %v1684 = vrot.slane %v1605, 2
  %v1685 = vsel %vm168, %v1682, %v1684
  %v1687 = vsel %vm168, %v1684, 0.0
  %v1688 = vrot.slane %v1590, 3
  %v1689 = vrot.slane %v1591, 3
  %v1690 = vsel %vm234, %v1688, %v1689
  %v1691 = vrot.slane %v1592, 3
  %v1692 = vsel %vm234, %v1689, %v1691
  %v1693 = vrot.slane %v1593, 3
  %v1694 = vsel %vm234, %v1691, %v1693
  %v1695 = vrot.slane %v1594, 3
  %v1696 = vsel %vm234, %v1693, %v1695
  %v1697 = vrot.slane %v1595, 3
  %v1698 = vsel %vm234, %v1695, %v1697
  %v1699 = vrot.slane %v1596, 3
  %v1700 = vsel %vm234, %v1697, %v1699
  %v1701 = vrot.slane %v1597, 3
  %v1702 = vsel %vm234, %v1699, %v1701
  %v1703 = vrot.slane %v1598, 3
  %v1704 = vsel %vm234, %v1701, %v1703
  %v1705 = vrot.slane %v1599, 3
  %v1706 = vsel %vm234, %v1703, %v1705
  %v1707 = vrot.slane %v1600, 3
  %v1708 = vsel %vm234, %v1705, %v1707
  %v1709 = vrot.slane %v1601, 3
  %v1710 = vsel %vm234, %v1707, %v1709
  %v1711 = vrot.slane %v1602, 3
  %v1712 = vsel %vm234, %v1709, %v1711
  %v1713 = vrot.slane %v1603, 3
  %v1714 = vsel %vm234, %v1711, %v1713
  %v1715 = vrot.slane %v1604, 3
  %v1716 = vsel %vm234, %v1713, %v1715
  %v1717 = vrot.slane %v1605, 3
  %v1718 = vsel %vm234, %v1715, %v1717
  %v1720 = vsel %vm234, %v1717, 0.0
  %v1721 = vrot.slane %v1590, 4
  %v1722 = vrot.slane %v1591, 4
  %v1723 = vsel %vm300, %v1721, %v1722
  %v1724 = vrot.slane %v1592, 4
  %v1725 = vsel %vm300, %v1722, %v1724
  %v1726 = vrot.slane %v1593, 4
  %v1727 = vsel %vm300, %v1724, %v1726
  %v1728 = vrot.slane %v1594, 4
  %v1729 = vsel %vm300, %v1726, %v1728
  %v1730 = vrot.slane %v1595, 4
  %v1731 = vsel %vm300, %v1728, %v1730
  %v1732 = vrot.slane %v1596, 4
  %v1733 = vsel %vm300, %v1730, %v1732
  %v1734 = vrot.slane %v1597, 4
  %v1735 = vsel %vm300, %v1732, %v1734
  %v1736 = vrot.slane %v1598, 4
  %v1737 = vsel %vm300, %v1734, %v1736
  %v1738 = vrot.slane %v1599, 4
  %v1739 = vsel %vm300, %v1736, %v1738
  %v1740 = vrot.slane %v1600, 4
  %v1741 = vsel %vm300, %v1738, %v1740
  %v1742 = vrot.slane %v1601, 4
  %v1743 = vsel %vm300, %v1740, %v1742
  %v1744 = vrot.slane %v1602, 4
  %v1745 = vsel %vm300, %v1742, %v1744
  %v1746 = vrot.slane %v1603, 4
  %v1747 = vsel %vm300, %v1744, %v1746
  %v1748 = vrot.slane %v1604, 4
  %v1749 = vsel %vm300, %v1746, %v1748
  %v1750 = vrot.slane %v1605, 4
  %v1751 = vsel %vm300, %v1748, %v1750
  %v1753 = vsel %vm300, %v1750, 0.0
  %1755 = vrot.lane.b32.xlu0 %v1624, 84
  %v1756 = vpop.permute.xlu0 %1755
  %1757 = vrot.lane.b32.xlu0 %v1626, 84
  %v1758 = vpop.permute.xlu0 %1757
  %1759 = vrot.lane.b32.xlu0 %v1628, 84
  %v1760 = vpop.permute.xlu0 %1759
  %1761 = vrot.lane.b32.xlu0 %v1630, 84
  %v1762 = vpop.permute.xlu0 %1761
  %1763 = vrot.lane.b32.xlu0 %v1632, 84
  %v1764 = vpop.permute.xlu0 %1763
  %1765 = vrot.lane.b32.xlu0 %v1634, 84
  %v1766 = vpop.permute.xlu0 %1765
  %1767 = vrot.lane.b32.xlu0 %v1636, 84
  %v1768 = vpop.permute.xlu0 %1767
  %1769 = vrot.lane.b32.xlu0 %v1638, 84
  %v1770 = vpop.permute.xlu0 %1769
  %1771 = vrot.lane.b32.xlu0 %v1640, 84
  %v1772 = vpop.permute.xlu0 %1771
  %1773 = vrot.lane.b32.xlu0 %v1642, 84
  %v1774 = vpop.permute.xlu0 %1773
  %1775 = vrot.lane.b32.xlu0 %v1644, 84
  %v1776 = vpop.permute.xlu0 %1775
  %1777 = vrot.lane.b32.xlu0 %v1646, 84
  %v1778 = vpop.permute.xlu0 %1777
  %1779 = vrot.lane.b32.xlu0 %v1648, 84
  %v1780 = vpop.permute.xlu0 %1779
  %1781 = vrot.lane.b32.xlu0 %v1650, 84
  %v1782 = vpop.permute.xlu0 %1781
  %1783 = vrot.lane.b32.xlu0 %v1652, 84
  %v1784 = vpop.permute.xlu0 %1783
  %1785 = vrot.lane.b32.xlu0 %v1654, 84
  %v1786 = vpop.permute.xlu0 %1785
  %1804 = vrot.lane.b32.xlu0 %v1657, 40
  %v1805 = vpop.permute.xlu0 %1804
  %1806 = vrot.lane.b32.xlu0 %v1659, 40
  %v1807 = vpop.permute.xlu0 %1806
  %1808 = vrot.lane.b32.xlu0 %v1661, 40
  %v1809 = vpop.permute.xlu0 %1808
  %1810 = vrot.lane.b32.xlu0 %v1663, 40
  %v1811 = vpop.permute.xlu0 %1810
  %1812 = vrot.lane.b32.xlu0 %v1665, 40
  %v1813 = vpop.permute.xlu0 %1812
  %1814 = vrot.lane.b32.xlu0 %v1667, 40
  %v1815 = vpop.permute.xlu0 %1814
  %1816 = vrot.lane.b32.xlu0 %v1669, 40
  %v1817 = vpop.permute.xlu0 %1816
  %1818 = vrot.lane.b32.xlu0 %v1671, 40
  %v1819 = vpop.permute.xlu0 %1818
  %1820 = vrot.lane.b32.xlu0 %v1673, 40
  %v1821 = vpop.permute.xlu0 %1820
  %1822 = vrot.lane.b32.xlu0 %v1675, 40
  %v1823 = vpop.permute.xlu0 %1822
  %1824 = vrot.lane.b32.xlu0 %v1677, 40
  %v1825 = vpop.permute.xlu0 %1824
  %1826 = vrot.lane.b32.xlu0 %v1679, 40
  %v1827 = vpop.permute.xlu0 %1826
  %1828 = vrot.lane.b32.xlu0 %v1681, 40
  %v1829 = vpop.permute.xlu0 %1828
  %1830 = vrot.lane.b32.xlu0 %v1683, 40
  %v1831 = vpop.permute.xlu0 %1830
  %1832 = vrot.lane.b32.xlu0 %v1685, 40
  %v1833 = vpop.permute.xlu0 %1832
  %1834 = vrot.lane.b32.xlu0 %v1687, 40
  %v1835 = vpop.permute.xlu0 %1834
  %1853 = vrot.lane.b32.xlu0 %v1690, 124
  %v1854 = vpop.permute.xlu0 %1853
  %1855 = vrot.lane.b32.xlu0 %v1692, 124
  %v1856 = vpop.permute.xlu0 %1855
  %1857 = vrot.lane.b32.xlu0 %v1694, 124
  %v1858 = vpop.permute.xlu0 %1857
  %1859 = vrot.lane.b32.xlu0 %v1696, 124
  %v1860 = vpop.permute.xlu0 %1859
  %1861 = vrot.lane.b32.xlu0 %v1698, 124
  %v1862 = vpop.permute.xlu0 %1861
  %1863 = vrot.lane.b32.xlu0 %v1700, 124
  %v1864 = vpop.permute.xlu0 %1863
  %1865 = vrot.lane.b32.xlu0 %v1702, 124
  %v1866 = vpop.permute.xlu0 %1865
  %1867 = vrot.lane.b32.xlu0 %v1704, 124
  %v1868 = vpop.permute.xlu0 %1867
  %1869 = vrot.lane.b32.xlu0 %v1706, 124
  %v1870 = vpop.permute.xlu0 %1869
  %1871 = vrot.lane.b32.xlu0 %v1708, 124
  %v1872 = vpop.permute.xlu0 %1871
  %1873 = vrot.lane.b32.xlu0 %v1710, 124
  %v1874 = vpop.permute.xlu0 %1873
  %1875 = vrot.lane.b32.xlu0 %v1712, 124
  %v1876 = vpop.permute.xlu0 %1875
  %1877 = vrot.lane.b32.xlu0 %v1714, 124
  %v1878 = vpop.permute.xlu0 %1877
  %1879 = vrot.lane.b32.xlu0 %v1716, 124
  %v1880 = vpop.permute.xlu0 %1879
  %1881 = vrot.lane.b32.xlu0 %v1718, 124
  %v1882 = vpop.permute.xlu0 %1881
  %1883 = vrot.lane.b32.xlu0 %v1720, 124
  %v1884 = vpop.permute.xlu0 %1883
  %1902 = vrot.lane.b32.xlu0 %v1723, 80
  %v1903 = vpop.permute.xlu0 %1902
  %1904 = vrot.lane.b32.xlu0 %v1725, 80
  %v1905 = vpop.permute.xlu0 %1904
  %1906 = vrot.lane.b32.xlu0 %v1727, 80
  %v1907 = vpop.permute.xlu0 %1906
  %1908 = vrot.lane.b32.xlu0 %v1729, 80
  %v1909 = vpop.permute.xlu0 %1908
  %1910 = vrot.lane.b32.xlu0 %v1731, 80
  %v1911 = vpop.permute.xlu0 %1910
  %1912 = vrot.lane.b32.xlu0 %v1733, 80
  %v1913 = vpop.permute.xlu0 %1912
  %1914 = vrot.lane.b32.xlu0 %v1735, 80
  %v1915 = vpop.permute.xlu0 %1914
  %1916 = vrot.lane.b32.xlu0 %v1737, 80
  %v1917 = vpop.permute.xlu0 %1916
  %1918 = vrot.lane.b32.xlu0 %v1739, 80
  %v1919 = vpop.permute.xlu0 %1918
  %1920 = vrot.lane.b32.xlu0 %v1741, 80
  %v1921 = vpop.permute.xlu0 %1920
  %1922 = vrot.lane.b32.xlu0 %v1743, 80
  %v1923 = vpop.permute.xlu0 %1922
  %1924 = vrot.lane.b32.xlu0 %v1745, 80
  %v1925 = vpop.permute.xlu0 %1924
  %1926 = vrot.lane.b32.xlu0 %v1747, 80
  %v1927 = vpop.permute.xlu0 %1926
  %1928 = vrot.lane.b32.xlu0 %v1749, 80
  %v1929 = vpop.permute.xlu0 %1928
  %1930 = vrot.lane.b32.xlu0 %v1751, 80
  %v1931 = vpop.permute.xlu0 %1930
  %1932 = vrot.lane.b32.xlu0 %v1753, 80
  %v1933 = vpop.permute.xlu0 %1932
  %v1950 = vsel %vm1407, %v1590, %v1756
  %v1951 = vsel %vm1407, %v1591, %v1758
  %v1952 = vsel %vm1407, %v1592, %v1760
  %v1953 = vsel %vm1407, %v1593, %v1762
  %v1954 = vsel %vm1407, %v1594, %v1764
  %v1955 = vsel %vm1407, %v1595, %v1766
  %v1956 = vsel %vm1407, %v1596, %v1768
  %v1957 = vsel %vm1407, %v1597, %v1770
  %v1958 = vsel %vm1407, %v1598, %v1772
  %v1959 = vsel %vm1407, %v1599, %v1774
  %v1960 = vsel %vm1407, %v1600, %v1776
  %v1961 = vsel %vm1407, %v1601, %v1778
  %v1962 = vsel %vm1407, %v1602, %v1780
  %v1963 = vsel %vm1407, %v1603, %v1782
  %v1964 = vsel %vm1407, %v1604, %v1784
  %v1965 = vsel %vm1407, %v1605, %v1786
  %vm1966 = vcmask 326656
  %v1967 = vsel %vm1966, %v1756, %v1805
  %v1968 = vsel %vm1966, %v1758, %v1807
  %v1969 = vsel %vm1966, %v1760, %v1809
  %v1970 = vsel %vm1966, %v1762, %v1811
  %v1971 = vsel %vm1966, %v1764, %v1813
  %v1972 = vsel %vm1966, %v1766, %v1815
  %v1973 = vsel %vm1966, %v1768, %v1817
  %v1974 = vsel %vm1966, %v1770, %v1819
  %v1975 = vsel %vm1966, %v1772, %v1821
  %v1976 = vsel %vm1966, %v1774, %v1823
  %v1977 = vsel %vm1966, %v1776, %v1825
  %v1978 = vsel %vm1966, %v1778, %v1827
  %v1979 = vsel %vm1966, %v1780, %v1829
  %v1980 = vsel %vm1966, %v1782, %v1831
  %v1981 = vsel %vm1966, %v1784, %v1833
  %v1982 = vsel %vm1966, %v1786, %v1835
  %vm1983 = vcmask 1014784
  %v1984 = vsel %vm1983, %v1967, %v1854
  %v1985 = vsel %vm1983, %v1968, %v1856
  %v1986 = vsel %vm1983, %v1969, %v1858
  %v1987 = vsel %vm1983, %v1970, %v1860
  %v1988 = vsel %vm1983, %v1971, %v1862
  %v1989 = vsel %vm1983, %v1972, %v1864
  %v1990 = vsel %vm1983, %v1973, %v1866
  %v1991 = vsel %vm1983, %v1974, %v1868
  %v1992 = vsel %vm1983, %v1975, %v1870
  %v1993 = vsel %vm1983, %v1976, %v1872
  %v1994 = vsel %vm1983, %v1977, %v1874
  %v1995 = vsel %vm1983, %v1978, %v1876
  %v1996 = vsel %vm1983, %v1979, %v1878
  %v1997 = vsel %vm1983, %v1980, %v1880
  %v1998 = vsel %vm1983, %v1981, %v1882
  %v1999 = vsel %vm1983, %v1982, %v1884
  %vm2000 = vcmask 654336
  %v2001 = vsel %vm2000, %v1854, %v1903
  %v2002 = vsel %vm2000, %v1856, %v1905
  %v2003 = vsel %vm2000, %v1858, %v1907
  %v2004 = vsel %vm2000, %v1860, %v1909
  %v2005 = vsel %vm2000, %v1862, %v1911
  %v2006 = vsel %vm2000, %v1864, %v1913
  %v2007 = vsel %vm2000, %v1866, %v1915
  %v2008 = vsel %vm2000, %v1868, %v1917
  %v2009 = vsel %vm2000, %v1870, %v1919
  %v2010 = vsel %vm2000, %v1872, %v1921
  %v2011 = vsel %vm2000, %v1874, %v1923
  %v2012 = vsel %vm2000, %v1876, %v1925
  %v2013 = vsel %vm2000, %v1878, %v1927
  %v2014 = vsel %vm2000, %v1880, %v1929
  %v2015 = vsel %vm2000, %v1882, %v1931
  %v2016 = vsel %vm2000, %v1884, %v1933
  %v2017 = vld [vmem:[%s3] sm:$0xff]
  %v2018 = vld [vmem:[%s3 + $0x8] sm:$0xff]
  %v2019 = vld [vmem:[%s3 + $0x10] sm:$0xff]
  %v2020 = vld [vmem:[%s3 + $0x18] sm:$0xff]
  %v2021 = vld [vmem:[%s3 + $0x20] sm:$0xff]
  %v2022 = vld [vmem:[%s3 + $0x28] sm:$0xff]
  %v2023 = vld [vmem:[%s3 + $0x30] sm:$0xff]
  %v2024 = vld [vmem:[%s3 + $0x38] sm:$0xff]
  %v2025 = vld [vmem:[%s3 + $0x40] sm:$0xff]
  %v2026 = vld [vmem:[%s3 + $0x48] sm:$0xff]
  %v2027 = vld [vmem:[%s3 + $0x50] sm:$0xff]
  %v2028 = vld [vmem:[%s3 + $0x58] sm:$0xff]
  %v2029 = vld [vmem:[%s3 + $0x60] sm:$0xff]
  %v2030 = vld [vmem:[%s3 + $0x68] sm:$0xff]
  %v2031 = vld [vmem:[%s3 + $0x70] sm:$0xff]
  %v2032 = vld [vmem:[%s3 + $0x78] sm:$0xff]
  %v2033 = vld [vmem:[%s3 + $0x80] sm:$0xff]
  %v2034 = vld [vmem:[%s3 + $0x88] sm:$0xff]
  %v2035 = vld [vmem:[%s3 + $0x90] sm:$0xff]
  %v2036 = vld [vmem:[%s3 + $0x98] sm:$0xff]
  %v2037 = vld [vmem:[%s3 + $0xa0] sm:$0xff]
  %v2038 = vld [vmem:[%s3 + $0xa8] sm:$0xff]
  %v2039 = vld [vmem:[%s3 + $0xb0] sm:$0xff]
  %v2040 = vld [vmem:[%s3 + $0xb8] sm:$0xff]
  %v2041 = vld [vmem:[%s3 + $0xc0] sm:$0xff]
  %v2042 = vld [vmem:[%s3 + $0xc8] sm:$0xff]
  %v2043 = vld [vmem:[%s3 + $0xd0] sm:$0xff]
  %v2044 = vld [vmem:[%s3 + $0xd8] sm:$0xff]
  %v2045 = vld [vmem:[%s3 + $0xe0] sm:$0xff]
  %v2046 = vld [vmem:[%s3 + $0xe8] sm:$0xff]
  %v2047 = vld [vmem:[%s3 + $0xf0] sm:$0xff]
  %v2048 = vld [vmem:[%s3 + $0xf8] sm:$0xff]
  %v2049 = vld [vmem:[%s3 + $0x100] sm:$0xff]
  %v2050 = vld [vmem:[%s3 + $0x108] sm:$0xff]
  %v2051 = vld [vmem:[%s3 + $0x110] sm:$0xff]
  %v2052 = vld [vmem:[%s3 + $0x118] sm:$0xff]
  %v2053 = vld [vmem:[%s3 + $0x120] sm:$0xff]
  %v2054 = vld [vmem:[%s3 + $0x128] sm:$0xff]
  %v2055 = vld [vmem:[%s3 + $0x130] sm:$0xff]
  %v2056 = vld [vmem:[%s3 + $0x138] sm:$0xff]
  %v2057 = vld [vmem:[%s3 + $0x140] sm:$0xff]
  %v2058 = vld [vmem:[%s3 + $0x148] sm:$0xff]
  %v2059 = vld [vmem:[%s3 + $0x150] sm:$0xff]
  %v2060 = vld [vmem:[%s3 + $0x158] sm:$0xff]
  %v2061 = vld [vmem:[%s3 + $0x160] sm:$0xff]
  %v2062 = vld [vmem:[%s3 + $0x168] sm:$0xff]
  %v2063 = vld [vmem:[%s3 + $0x170] sm:$0xff]
  %v2064 = vld [vmem:[%s3 + $0x178] sm:$0xff]
  %v2065 = vld [vmem:[%s3 + $0x180] sm:$0xff]
  %v2066 = vld [vmem:[%s3 + $0x188] sm:$0xff]
  %v2067 = vld [vmem:[%s3 + $0x190] sm:$0xff]
  %v2068 = vld [vmem:[%s3 + $0x198] sm:$0xff]
  %v2069 = vld [vmem:[%s3 + $0x1a0] sm:$0xff]
  %v2070 = vld [vmem:[%s3 + $0x1a8] sm:$0xff]
  %v2071 = vld [vmem:[%s3 + $0x1b0] sm:$0xff]
  %v2072 = vld [vmem:[%s3 + $0x1b8] sm:$0xff]
  %v2073 = vld [vmem:[%s3 + $0x1c0] sm:$0xff]
  %v2074 = vld [vmem:[%s3 + $0x1c8] sm:$0xff]
  %v2075 = vld [vmem:[%s3 + $0x1d0] sm:$0xff]
  %v2076 = vld [vmem:[%s3 + $0x1d8] sm:$0xff]
  %v2077 = vld [vmem:[%s3 + $0x1e0] sm:$0xff]
  %v2078 = vld [vmem:[%s3 + $0x1e8] sm:$0xff]
  %v2079 = vld [vmem:[%s3 + $0x1f0] sm:$0xff]
  %v2080 = vld [vmem:[%s3 + $0x1f8] sm:$0xff]
  %v2081 = vld [vmem:[%s3 + $0x200] sm:$0xff]
  %v2082 = vld [vmem:[%s3 + $0x208] sm:$0xff]
  %v2083 = vld [vmem:[%s3 + $0x210] sm:$0xff]
  %v2084 = vld [vmem:[%s3 + $0x218] sm:$0xff]
  %v2085 = vld [vmem:[%s3 + $0x220] sm:$0xff]
  %v2086 = vld [vmem:[%s3 + $0x228] sm:$0xff]
  %v2087 = vld [vmem:[%s3 + $0x230] sm:$0xff]
  %v2088 = vld [vmem:[%s3 + $0x238] sm:$0xff]
  %v2089 = vld [vmem:[%s3 + $0x240] sm:$0xff]
  %v2090 = vld [vmem:[%s3 + $0x248] sm:$0xff]
  %v2091 = vld [vmem:[%s3 + $0x250] sm:$0xff]
  %v2092 = vld [vmem:[%s3 + $0x258] sm:$0xff]
  %v2093 = vld [vmem:[%s3 + $0x260] sm:$0xff]
  %v2094 = vld [vmem:[%s3 + $0x268] sm:$0xff]
  %v2095 = vld [vmem:[%s3 + $0x270] sm:$0xff]
  %v2096 = vld [vmem:[%s3 + $0x278] sm:$0xff]
  %v2097 = vld [vmem:[%s3 + $0x280] sm:$0xff]
  %v2098 = vld [vmem:[%s3 + $0x288] sm:$0xff]
  %v2099 = vld [vmem:[%s3 + $0x290] sm:$0xff]
  %v2100 = vld [vmem:[%s3 + $0x298] sm:$0xff]
  %v2101 = vld [vmem:[%s3 + $0x2a0] sm:$0xff]
  %v2102 = vld [vmem:[%s3 + $0x2a8] sm:$0xff]
  %v2103 = vld [vmem:[%s3 + $0x2b0] sm:$0xff]
  %v2104 = vld [vmem:[%s3 + $0x2b8] sm:$0xff]
  %v2105 = vld [vmem:[%s3 + $0x2c0] sm:$0xff]
  %v2106 = vld [vmem:[%s3 + $0x2c8] sm:$0xff]
  %v2107 = vld [vmem:[%s3 + $0x2d0] sm:$0xff]
  %v2108 = vld [vmem:[%s3 + $0x2d8] sm:$0xff]
  %v2109 = vld [vmem:[%s3 + $0x2e0] sm:$0xff]
  %v2110 = vld [vmem:[%s3 + $0x2e8] sm:$0xff]
  %v2111 = vld [vmem:[%s3 + $0x2f0] sm:$0xff]
  %v2112 = vld [vmem:[%s3 + $0x2f8] sm:$0xff]
  %v2113 = vld [vmem:[%s3 + $0x300] sm:$0xff]
  %v2114 = vld [vmem:[%s3 + $0x308] sm:$0xff]
  %v2115 = vld [vmem:[%s3 + $0x310] sm:$0xff]
  %v2116 = vld [vmem:[%s3 + $0x318] sm:$0xff]
  %v2117 = vld [vmem:[%s3 + $0x320] sm:$0xff]
  %v2118 = vld [vmem:[%s3 + $0x328] sm:$0xff]
  %v2119 = vld [vmem:[%s3 + $0x330] sm:$0xff]
  %v2120 = vld [vmem:[%s3 + $0x338] sm:$0xff]
  %v2121 = vld [vmem:[%s3 + $0x340] sm:$0xf]
  %v2122 = vld [vmem:[%s3 + $0x348] sm:$0xf]
  %vm2123 = vcmask 293888
  %v2124 = vsel %vm2123, %v1903, 0
  %v2126 = vsel %vm2123, %v1905, 0
  %v2128 = vsel %vm2123, %v1907, 0
  %v2130 = vsel %vm2123, %v1909, 0
  %v2132 = vsel %vm2123, %v1911, 0
  %v2134 = vsel %vm2123, %v1913, 0
  %v2136 = vsel %vm2123, %v1915, 0
  %v2138 = vsel %vm2123, %v1917, 0
  %v2140 = vsel %vm2123, %v1919, 0
  %v2142 = vsel %vm2123, %v1921, 0
  %v2144 = vsel %vm2123, %v1923, 0
  %v2146 = vsel %vm2123, %v1925, 0
  %v2148 = vsel %vm2123, %v1927, 0
  %v2150 = vsel %vm2123, %v1929, 0
  %v2152 = vsel %vm2123, %v1931, 0
  %v2154 = vsel %vm2123, %v1933, 0
  %v2157 = vsel %vm300, %v2121, 0
  %v2160 = vsel %vm300, %v2122, 0
  %2162 = vmatprep.subr.mxu0 %v2018
  %2163 = vmatpush1.msra.mxu0 %v2017
  %2164 = vmatprep.subr.mxu0 %v2020
  %2165 = vmatpush1.msra.mxu0 %v2019
  %2166 = vmatprep.subr.mxu0 %v2022
  %2167 = vmatpush1.msra.mxu0 %v2021
  %2168 = vmatprep.subr.mxu0 %v2024
  %2169 = vmatpush1.msra.mxu0 %v2023
  %2170 = vmatprep.subr.mxu0 %v2026
  %2171 = vmatpush1.msra.mxu0 %v2025
  %2172 = vmatprep.subr.mxu0 %v2028
  %2173 = vmatpush1.msra.mxu0 %v2027
  %2174 = vmatprep.subr.mxu0 %v2030
  %2175 = vmatpush1.msra.mxu0 %v2029
  %2176 = vmatprep.subr.mxu0 %v2032
  %2177 = vmatpush1.msra.mxu0 %v2031
  %2178 = vmatprep.subr.mxu0 %v2034
  %2179 = vmatpush1.msra.mxu0 %v2033
  %2180 = vmatprep.subr.mxu0 %v2036
  %2181 = vmatpush1.msra.mxu0 %v2035
  %2182 = vmatprep.subr.mxu0 %v2038
  %2183 = vmatpush1.msra.mxu0 %v2037
  %2184 = vmatprep.subr.mxu0 %v2040
  %2185 = vmatpush1.msra.mxu0 %v2039
  %2186 = vmatprep.subr.mxu0 %v2042
  %2187 = vmatpush1.msra.mxu0 %v2041
  %2188 = vmatprep.subr.mxu0 %v2044
  %2189 = vmatpush1.msra.mxu0 %v2043
  %2190 = vmatprep.subr.mxu0 %v2046
  %2191 = vmatpush1.msra.mxu0 %v2045
  %2192 = vmatprep.subr.mxu0 %v2048
  %2193 = vmatpush1.msra.mxu0 %v2047
  %2194 = vmatprep.subr.mxu0 %v2050
  %2195 = vmatpush1.msra.mxu0 %v2049
  %2196 = vmatprep.subr.mxu0 %v2052
  %2197 = vmatpush1.msra.mxu0 %v2051
  %2198 = vmatprep.subr.mxu0 %v2054
  %2199 = vmatpush1.msra.mxu0 %v2053
  %2200 = vmatprep.subr.mxu0 %v2056
  %2201 = vmatpush1.msra.mxu0 %v2055
  %2202 = vmatprep.subr.mxu0 %v2058
  %2203 = vmatpush1.msra.mxu0 %v2057
  %2204 = vmatprep.subr.mxu0 %v2060
  %2205 = vmatpush1.msra.mxu0 %v2059
  %2206 = vmatprep.subr.mxu0 %v2062
  %2207 = vmatpush1.msra.mxu0 %v2061
  %2208 = vmatprep.subr.mxu0 %v2064
  %2209 = vmatpush1.msra.mxu0 %v2063
  %2210 = vmatprep.subr.mxu0 %v2066
  %2211 = vmatpush1.msra.mxu0 %v2065
  %2212 = vmatprep.subr.mxu0 %v2068
  %2213 = vmatpush1.msra.mxu0 %v2067
  %2214 = vmatprep.subr.mxu0 %v2070
  %2215 = vmatpush1.msra.mxu0 %v2069
  %2216 = vmatprep.subr.mxu0 %v2072
  %2217 = vmatpush1.msra.mxu0 %v2071
  %2218 = vmatprep.subr.mxu0 %v2074
  %2219 = vmatpush1.msra.mxu0 %v2073
  %2220 = vmatprep.subr.mxu0 %v2076
  %2221 = vmatpush1.msra.mxu0 %v2075
  %2222 = vmatprep.subr.mxu0 %v2078
  %2223 = vmatpush1.msra.mxu0 %v2077
  %2224 = vmatprep.subr.mxu0 %v2080
  %2225 = vmatpush1.msra.mxu0 %v2079
  %2226 = vmatprep.mubr.f32.mxu0 %v1984
  %2227 = vmatmul.mubr.f32.gmra.mrb[0].mxu0 %v1950
  %v2228 = vpop.f32.mrb[0].mxu0
  %v2229 = vadd.f32 0.0, %v2228
  %v2230 = vpop.f32.mrb[0].mxu0
  %v2231 = vadd.f32 0.0, %v2230
  %2232 = vmatprep.mubr.f32.mxu0 %v1985
  %2233 = vmatmul.mubr.f32.gmra.mrb[0].mxu0 %v1951
  %v2234 = vpop.f32.mrb[0].mxu0
  %v2235 = vadd.f32 0.0, %v2234
  %v2236 = vpop.f32.mrb[0].mxu0
  %v2237 = vadd.f32 0.0, %v2236
  %2238 = vmatprep.mubr.f32.mxu0 %v1986
  %2239 = vmatmul.mubr.f32.gmra.mrb[0].mxu0 %v1952
  %v2240 = vpop.f32.mrb[0].mxu0
  %v2241 = vadd.f32 0.0, %v2240
  %v2242 = vpop.f32.mrb[0].mxu0
  %v2243 = vadd.f32 0.0, %v2242
  %2244 = vmatprep.mubr.f32.mxu0 %v1987
  %2245 = vmatmul.mubr.f32.gmra.mrb[0].mxu0 %v1953
  %v2246 = vpop.f32.mrb[0].mxu0
  %v2247 = vadd.f32 0.0, %v2246
  %v2248 = vpop.f32.mrb[0].mxu0
  %v2249 = vadd.f32 0.0, %v2248
  %2250 = vmatprep.mubr.f32.mxu0 %v1988
  %2251 = vmatmul.mubr.f32.gmra.mrb[0].mxu0 %v1954
  %v2252 = vpop.f32.mrb[0].mxu0
  %v2253 = vadd.f32 0.0, %v2252
  %v2254 = vpop.f32.mrb[0].mxu0
  %v2255 = vadd.f32 0.0, %v2254
  %2256 = vmatprep.mubr.f32.mxu0 %v1989
  %2257 = vmatmul.mubr.f32.gmra.mrb[0].mxu0 %v1955
  %v2258 = vpop.f32.mrb[0].mxu0
  %v2259 = vadd.f32 0.0, %v2258
  %v2260 = vpop.f32.mrb[0].mxu0
  %v2261 = vadd.f32 0.0, %v2260
  %2262 = vmatprep.mubr.f32.mxu0 %v1990
  %2263 = vmatmul.mubr.f32.gmra.mrb[0].mxu0 %v1956
  %v2264 = vpop.f32.mrb[0].mxu0
  %v2265 = vadd.f32 0.0, %v2264
  %v2266 = vpop.f32.mrb[0].mxu0
  %v2267 = vadd.f32 0.0, %v2266
  %2268 = vmatprep.mubr.f32.mxu0 %v1991
  %2269 = vmatmul.mubr.f32.gmra.mrb[0].mxu0 %v1957
  %v2270 = vpop.f32.mrb[0].mxu0
  %v2271 = vadd.f32 0.0, %v2270
  %v2272 = vpop.f32.mrb[0].mxu0
  %v2273 = vadd.f32 0.0, %v2272
  %2274 = vmatprep.mubr.f32.mxu0 %v1992
  %2275 = vmatmul.mubr.f32.gmra.mrb[0].mxu0 %v1958
  %v2276 = vpop.f32.mrb[0].mxu0
  %v2277 = vadd.f32 0.0, %v2276
  %v2278 = vpop.f32.mrb[0].mxu0
  %v2279 = vadd.f32 0.0, %v2278
  %2280 = vmatprep.mubr.f32.mxu0 %v1993
  %2281 = vmatmul.mubr.f32.gmra.mrb[0].mxu0 %v1959
  %v2282 = vpop.f32.mrb[0].mxu0
  %v2283 = vadd.f32 0.0, %v2282
  %v2284 = vpop.f32.mrb[0].mxu0
  %v2285 = vadd.f32 0.0, %v2284
  %2286 = vmatprep.mubr.f32.mxu0 %v1994
  %2287 = vmatmul.mubr.f32.gmra.mrb[0].mxu0 %v1960
  %v2288 = vpop.f32.mrb[0].mxu0
  %v2289 = vadd.f32 0.0, %v2288
  %v2290 = vpop.f32.mrb[0].mxu0
  %v2291 = vadd.f32 0.0, %v2290
  %2292 = vmatprep.mubr.f32.mxu0 %v1995
  %2293 = vmatmul.mubr.f32.gmra.mrb[0].mxu0 %v1961
  %v2294 = vpop.f32.mrb[0].mxu0
  %v2295 = vadd.f32 0.0, %v2294
  %v2296 = vpop.f32.mrb[0].mxu0
  %v2297 = vadd.f32 0.0, %v2296
  %2298 = vmatprep.mubr.f32.mxu0 %v1996
  %2299 = vmatmul.mubr.f32.gmra.mrb[0].mxu0 %v1962
  %v2300 = vpop.f32.mrb[0].mxu0
  %v2301 = vadd.f32 0.0, %v2300
  %v2302 = vpop.f32.mrb[0].mxu0
  %v2303 = vadd.f32 0.0, %v2302
  %2304 = vmatprep.mubr.f32.mxu0 %v1997
  %2305 = vmatmul.mubr.f32.gmra.mrb[0].mxu0 %v1963
  %v2306 = vpop.f32.mrb[0].mxu0
  %v2307 = vadd.f32 0.0, %v2306
  %v2308 = vpop.f32.mrb[0].mxu0
  %v2309 = vadd.f32 0.0, %v2308
  %2310 = vmatprep.mubr.f32.mxu0 %v1998
  %2311 = vmatmul.mubr.f32.gmra.mrb[0].mxu0 %v1964
  %v2312 = vpop.f32.mrb[0].mxu0
  %v2313 = vadd.f32 0.0, %v2312
  %v2314 = vpop.f32.mrb[0].mxu0
  %v2315 = vadd.f32 0.0, %v2314
  %2316 = vmatprep.mubr.f32.mxu0 %v1999
  %2317 = vmatmul.mubr.f32.gmra.mrb[0].mxu0 %v1965
  %v2318 = vpop.f32.mrb[0].mxu0
  %v2319 = vadd.f32 0.0, %v2318
  %v2320 = vpop.f32.mrb[0].mxu0
  %v2321 = vadd.f32 0.0, %v2320
  %2322 = vdwg.mxu0
  %2323 = vmatprep.subr.mxu0 %v2082
  %2324 = vmatpush1.msra.mxu0 %v2081
  %2325 = vmatprep.subr.mxu0 %v2084
  %2326 = vmatpush1.msra.mxu0 %v2083
  %2327 = vmatprep.subr.mxu0 %v2086
  %2328 = vmatpush1.msra.mxu0 %v2085
  %2329 = vmatprep.subr.mxu0 %v2088
  %2330 = vmatpush1.msra.mxu0 %v2087
  %2331 = vmatprep.subr.mxu0 %v2090
  %2332 = vmatpush1.msra.mxu0 %v2089
  %2333 = vmatprep.subr.mxu0 %v2092
  %2334 = vmatpush1.msra.mxu0 %v2091
  %2335 = vmatprep.subr.mxu0 %v2094
  %2336 = vmatpush1.msra.mxu0 %v2093
  %2337 = vmatprep.subr.mxu0 %v2096
  %2338 = vmatpush1.msra.mxu0 %v2095
  %2339 = vmatprep.subr.mxu0 %v2098
  %2340 = vmatpush1.msra.mxu0 %v2097
  %2341 = vmatprep.subr.mxu0 %v2100
  %2342 = vmatpush1.msra.mxu0 %v2099
  %2343 = vmatprep.subr.mxu0 %v2102
  %2344 = vmatpush1.msra.mxu0 %v2101
  %2345 = vmatprep.subr.mxu0 %v2104
  %2346 = vmatpush1.msra.mxu0 %v2103
  %2347 = vmatprep.subr.mxu0 %v2106
  %2348 = vmatpush1.msra.mxu0 %v2105
  %2349 = vmatprep.subr.mxu0 %v2108
  %2350 = vmatpush1.msra.mxu0 %v2107
  %2351 = vmatprep.subr.mxu0 %v2110
  %2352 = vmatpush1.msra.mxu0 %v2109
  %2353 = vmatprep.subr.mxu0 %v2112
  %2354 = vmatpush1.msra.mxu0 %v2111
  %2355 = vmatprep.subr.mxu0 %v2114
  %2356 = vmatpush1.msra.mxu0 %v2113
  %2357 = vmatprep.subr.mxu0 %v2116
  %2358 = vmatpush1.msra.mxu0 %v2115
  %2359 = vmatprep.subr.mxu0 %v2118
  %2360 = vmatpush1.msra.mxu0 %v2117
  %2361 = vmatprep.subr.mxu0 %v2120
  %2362 = vmatpush1.msra.mxu0 %v2119
  %2363 = vmatprep.subr.mxu0 %v2160
  %2364 = vmatpush1.msra.mxu0 %v2157
  %2365 = vmatprep.subr.mxu0 0.0
  %2366 = vmatpush1.msra.mxu0 0.0
  %2367 = vmatprep.subr.mxu0 0.0
  %2368 = vmatpush1.msra.mxu0 0.0
  %2369 = vmatprep.subr.mxu0 0.0
  %2370 = vmatpush1.msra.mxu0 0.0
  %2371 = vmatprep.subr.mxu0 0.0
  %2372 = vmatpush1.msra.mxu0 0.0
  %2373 = vmatprep.subr.mxu0 0.0
  %2374 = vmatpush1.msra.mxu0 0.0
  %2375 = vmatprep.subr.mxu0 0.0
  %2376 = vmatpush1.msra.mxu0 0.0
  %2377 = vmatprep.subr.mxu0 0.0
  %2378 = vmatpush1.msra.mxu0 0.0
  %2379 = vmatprep.subr.mxu0 0.0
  %2380 = vmatpush1.msra.mxu0 0.0
  %2381 = vmatprep.subr.mxu0 0.0
  %2382 = vmatpush1.msra.mxu0 0.0
  %2383 = vmatprep.subr.mxu0 0.0
  %2384 = vmatpush1.msra.mxu0 0.0
  %2385 = vmatprep.subr.mxu0 0.0
  %2386 = vmatpush1.msra.mxu0 0.0
  %2387 = vmatprep.mubr.f32.mxu0 %v2124
  %2388 = vmatmul.mubr.f32.gmra.mrb[0].mxu0 %v2001
  %v2389 = vpop.f32.mrb[0].mxu0
  %v2390 = vadd.f32 %v2229, %v2389
  %v2391 = vpop.f32.mrb[0].mxu0
  %v2392 = vadd.f32 %v2231, %v2391
  %2393 = vmatprep.mubr.f32.mxu0 %v2126
  %2394 = vmatmul.mubr.f32.gmra.mrb[0].mxu0 %v2002
  %v2395 = vpop.f32.mrb[0].mxu0
  %v2396 = vadd.f32 %v2235, %v2395
  %v2397 = vpop.f32.mrb[0].mxu0
  %v2398 = vadd.f32 %v2237, %v2397
  %2399 = vmatprep.mubr.f32.mxu0 %v2128
  %2400 = vmatmul.mubr.f32.gmra.mrb[0].mxu0 %v2003
  %v2401 = vpop.f32.mrb[0].mxu0
  %v2402 = vadd.f32 %v2241, %v2401
  %v2403 = vpop.f32.mrb[0].mxu0
  %v2404 = vadd.f32 %v2243, %v2403
  %2405 = vmatprep.mubr.f32.mxu0 %v2130
  %2406 = vmatmul.mubr.f32.gmra.mrb[0].mxu0 %v2004
  %v2407 = vpop.f32.mrb[0].mxu0
  %v2408 = vadd.f32 %v2247, %v2407
  %v2409 = vpop.f32.mrb[0].mxu0
  %v2410 = vadd.f32 %v2249, %v2409
  %2411 = vmatprep.mubr.f32.mxu0 %v2132
  %2412 = vmatmul.mubr.f32.gmra.mrb[0].mxu0 %v2005
  %v2413 = vpop.f32.mrb[0].mxu0
  %v2414 = vadd.f32 %v2253, %v2413
  %v2415 = vpop.f32.mrb[0].mxu0
  %v2416 = vadd.f32 %v2255, %v2415
  %2417 = vmatprep.mubr.f32.mxu0 %v2134
  %2418 = vmatmul.mubr.f32.gmra.mrb[0].mxu0 %v2006
  %v2419 = vpop.f32.mrb[0].mxu0
  %v2420 = vadd.f32 %v2259, %v2419
  %v2421 = vpop.f32.mrb[0].mxu0
  %v2422 = vadd.f32 %v2261, %v2421
  %2423 = vmatprep.mubr.f32.mxu0 %v2136
  %2424 = vmatmul.mubr.f32.gmra.mrb[0].mxu0 %v2007
  %v2425 = vpop.f32.mrb[0].mxu0
  %v2426 = vadd.f32 %v2265, %v2425
  %v2427 = vpop.f32.mrb[0].mxu0
  %v2428 = vadd.f32 %v2267, %v2427
  %2429 = vmatprep.mubr.f32.mxu0 %v2138
  %2430 = vmatmul.mubr.f32.gmra.mrb[0].mxu0 %v2008
  %v2431 = vpop.f32.mrb[0].mxu0
  %v2432 = vadd.f32 %v2271, %v2431
  %v2433 = vpop.f32.mrb[0].mxu0
  %v2434 = vadd.f32 %v2273, %v2433
  %2435 = vmatprep.mubr.f32.mxu0 %v2140
  %2436 = vmatmul.mubr.f32.gmra.mrb[0].mxu0 %v2009
  %v2437 = vpop.f32.mrb[0].mxu0
  %v2438 = vadd.f32 %v2277, %v2437
  %v2439 = vpop.f32.mrb[0].mxu0
  %v2440 = vadd.f32 %v2279, %v2439
  %2441 = vmatprep.mubr.f32.mxu0 %v2142
  %2442 = vmatmul.mubr.f32.gmra.mrb[0].mxu0 %v2010
  %v2443 = vpop.f32.mrb[0].mxu0
  %v2444 = vadd.f32 %v2283, %v2443
  %v2445 = vpop.f32.mrb[0].mxu0
  %v2446 = vadd.f32 %v2285, %v2445
  %2447 = vmatprep.mubr.f32.mxu0 %v2144
  %2448 = vmatmul.mubr.f32.gmra.mrb[0].mxu0 %v2011
  %v2449 = vpop.f32.mrb[0].mxu0
  %v2450 = vadd.f32 %v2289, %v2449
  %v2451 = vpop.f32.mrb[0].mxu0
  %v2452 = vadd.f32 %v2291, %v2451
  %2453 = vmatprep.mubr.f32.mxu0 %v2146
  %2454 = vmatmul.mubr.f32.gmra.mrb[0].mxu0 %v2012
  %v2455 = vpop.f32.mrb[0].mxu0
  %v2456 = vadd.f32 %v2295, %v2455
  %v2457 = vpop.f32.mrb[0].mxu0
  %v2458 = vadd.f32 %v2297, %v2457
  %2459 = vmatprep.mubr.f32.mxu0 %v2148
  %2460 = vmatmul.mubr.f32.gmra.mrb[0].mxu0 %v2013
  %v2461 = vpop.f32.mrb[0].mxu0
  %v2462 = vadd.f32 %v2301, %v2461
  %v2463 = vpop.f32.mrb[0].mxu0
  %v2464 = vadd.f32 %v2303, %v2463
  %2465 = vmatprep.mubr.f32.mxu0 %v2150
  %2466 = vmatmul.mubr.f32.gmra.mrb[0].mxu0 %v2014
  %v2467 = vpop.f32.mrb[0].mxu0
  %v2468 = vadd.f32 %v2307, %v2467
  %v2469 = vpop.f32.mrb[0].mxu0
  %v2470 = vadd.f32 %v2309, %v2469
  %2471 = vmatprep.mubr.f32.mxu0 %v2152
  %2472 = vmatmul.mubr.f32.gmra.mrb[0].mxu0 %v2015
  %v2473 = vpop.f32.mrb[0].mxu0
  %v2474 = vadd.f32 %v2313, %v2473
  %v2475 = vpop.f32.mrb[0].mxu0
  %v2476 = vadd.f32 %v2315, %v2475
  %2477 = vmatprep.mubr.f32.mxu0 %v2154
  %2478 = vmatmul.mubr.f32.gmra.mrb[0].mxu0 %v2016
  %v2479 = vpop.f32.mrb[0].mxu0
  %v2480 = vadd.f32 %v2319, %v2479
  %v2481 = vpop.f32.mrb[0].mxu0
  %v2482 = vadd.f32 %v2321, %v2481
  %2483 = vdwg.mxu0
  %2516 = vrot.lane.b32.xlu0 %v2390, 48
  %v2517 = vpop.permute.xlu0 %2516
  %2518 = vrot.lane.b32.xlu0 %v2392, 48
  %v2519 = vpop.permute.xlu0 %2518
  %2520 = vrot.lane.b32.xlu0 %v2396, 48
  %v2521 = vpop.permute.xlu0 %2520
  %2522 = vrot.lane.b32.xlu0 %v2398, 48
  %v2523 = vpop.permute.xlu0 %2522
  %2524 = vrot.lane.b32.xlu0 %v2402, 48
  %v2525 = vpop.permute.xlu0 %2524
  %2526 = vrot.lane.b32.xlu0 %v2404, 48
  %v2527 = vpop.permute.xlu0 %2526
  %2528 = vrot.lane.b32.xlu0 %v2408, 48
  %v2529 = vpop.permute.xlu0 %2528
  %2530 = vrot.lane.b32.xlu0 %v2410, 48
  %v2531 = vpop.permute.xlu0 %2530
  %2532 = vrot.lane.b32.xlu0 %v2414, 48
  %v2533 = vpop.permute.xlu0 %2532
  %2534 = vrot.lane.b32.xlu0 %v2416, 48
  %v2535 = vpop.permute.xlu0 %2534
  %2536 = vrot.lane.b32.xlu0 %v2420, 48
  %v2537 = vpop.permute.xlu0 %2536
  %2538 = vrot.lane.b32.xlu0 %v2422, 48
  %v2539 = vpop.permute.xlu0 %2538
  %2540 = vrot.lane.b32.xlu0 %v2426, 48
  %v2541 = vpop.permute.xlu0 %2540
  %2542 = vrot.lane.b32.xlu0 %v2428, 48
  %v2543 = vpop.permute.xlu0 %2542
  %2544 = vrot.lane.b32.xlu0 %v2432, 48
  %v2545 = vpop.permute.xlu0 %2544
  %2546 = vrot.lane.b32.xlu0 %v2434, 48
  %v2547 = vpop.permute.xlu0 %2546
  %2548 = vrot.lane.b32.xlu0 %v2438, 48
  %v2549 = vpop.permute.xlu0 %2548
  %2550 = vrot.lane.b32.xlu0 %v2440, 48
  %v2551 = vpop.permute.xlu0 %2550
  %2552 = vrot.lane.b32.xlu0 %v2444, 48
  %v2553 = vpop.permute.xlu0 %2552
  %2554 = vrot.lane.b32.xlu0 %v2446, 48
  %v2555 = vpop.permute.xlu0 %2554
  %2556 = vrot.lane.b32.xlu0 %v2450, 48
  %v2557 = vpop.permute.xlu0 %2556
  %2558 = vrot.lane.b32.xlu0 %v2452, 48
  %v2559 = vpop.permute.xlu0 %2558
  %2560 = vrot.lane.b32.xlu0 %v2456, 48
  %v2561 = vpop.permute.xlu0 %2560
  %2562 = vrot.lane.b32.xlu0 %v2458, 48
  %v2563 = vpop.permute.xlu0 %2562
  %2564 = vrot.lane.b32.xlu0 %v2462, 48
  %v2565 = vpop.permute.xlu0 %2564
  %2566 = vrot.lane.b32.xlu0 %v2464, 48
  %v2567 = vpop.permute.xlu0 %2566
  %2568 = vrot.lane.b32.xlu0 %v2468, 48
  %v2569 = vpop.permute.xlu0 %2568
  %2570 = vrot.lane.b32.xlu0 %v2470, 48
  %v2571 = vpop.permute.xlu0 %2570
  %2572 = vrot.lane.b32.xlu0 %v2474, 48
  %v2573 = vpop.permute.xlu0 %2572
  %2574 = vrot.lane.b32.xlu0 %v2476, 48
  %v2575 = vpop.permute.xlu0 %2574
  %2576 = vrot.lane.b32.xlu0 %v2480, 48
  %v2577 = vpop.permute.xlu0 %2576
  %2578 = vrot.lane.b32.xlu0 %v2482, 48
  %v2579 = vpop.permute.xlu0 %2578
  %vm2580 = vcmask 392192
  %v2581 = vsel %vm2580, %v2517, %v2519
  %v2582 = vsel %vm2580, %v2521, %v2523
  %v2583 = vsel %vm2580, %v2525, %v2527
  %v2584 = vsel %vm2580, %v2529, %v2531
  %v2585 = vsel %vm2580, %v2533, %v2535
  %v2586 = vsel %vm2580, %v2537, %v2539
  %v2587 = vsel %vm2580, %v2541, %v2543
  %v2588 = vsel %vm2580, %v2545, %v2547
  %v2589 = vsel %vm2580, %v2549, %v2551
  %v2590 = vsel %vm2580, %v2553, %v2555
  %v2591 = vsel %vm2580, %v2557, %v2559
  %v2592 = vsel %vm2580, %v2561, %v2563
  %v2593 = vsel %vm2580, %v2565, %v2567
  %v2594 = vsel %vm2580, %v2569, %v2571
  %v2595 = vsel %vm2580, %v2573, %v2575
  %v2596 = vsel %vm2580, %v2577, %v2579
  %v2613 = vmax.f32 %v2390, %v2581
  %v2614 = vmax.f32 %v2396, %v2582
  %v2615 = vmax.f32 %v2402, %v2583
  %v2616 = vmax.f32 %v2408, %v2584
  %v2617 = vmax.f32 %v2414, %v2585
  %v2618 = vmax.f32 %v2420, %v2586
  %v2619 = vmax.f32 %v2426, %v2587
  %v2620 = vmax.f32 %v2432, %v2588
  %v2621 = vmax.f32 %v2438, %v2589
  %v2622 = vmax.f32 %v2444, %v2590
  %v2623 = vmax.f32 %v2450, %v2591
  %v2624 = vmax.f32 %v2456, %v2592
  %v2625 = vmax.f32 %v2462, %v2593
  %v2626 = vmax.f32 %v2468, %v2594
  %v2627 = vmax.f32 %v2474, %v2595
  %v2628 = vmax.f32 %v2480, %v2596
  %2629 = vst.msk [vmem:[#allocation3] sm:$0xff] %vm2000, %v2613
  %2630 = vst.msk [vmem:[#allocation3 + $0x8] sm:$0xff] %vm2000, %v2614
  %2631 = vst.msk [vmem:[#allocation3 + $0x10] sm:$0xff] %vm2000, %v2615
  %2632 = vst.msk [vmem:[#allocation3 + $0x18] sm:$0xff] %vm2000, %v2616
  %2633 = vst.msk [vmem:[#allocation3 + $0x20] sm:$0xff] %vm2000, %v2617
  %2634 = vst.msk [vmem:[#allocation3 + $0x28] sm:$0xff] %vm2000, %v2618
  %2635 = vst.msk [vmem:[#allocation3 + $0x30] sm:$0xff] %vm2000, %v2619
  %2636 = vst.msk [vmem:[#allocation3 + $0x38] sm:$0xff] %vm2000, %v2620
  %2637 = vst.msk [vmem:[#allocation3 + $0x40] sm:$0xff] %vm2000, %v2621
  %2638 = vst.msk [vmem:[#allocation3 + $0x48] sm:$0xff] %vm2000, %v2622
  %2639 = vst.msk [vmem:[#allocation3 + $0x50] sm:$0xff] %vm2000, %v2623
  %2640 = vst.msk [vmem:[#allocation3 + $0x58] sm:$0xff] %vm2000, %v2624
  %2641 = vst.msk [vmem:[#allocation3 + $0x60] sm:$0xff] %vm2000, %v2625
  %2642 = vst.msk [vmem:[#allocation3 + $0x68] sm:$0xff] %vm2000, %v2626
  %2643 = vst.msk [vmem:[#allocation3 + $0x70] sm:$0xff] %vm2000, %v2627
  %2644 = vst.msk [vmem:[#allocation3 + $0x78] sm:$0xff] %vm2000, %v2628
  %v2645 = vld [vmem:[#allocation3] ss:$16 sm:$0x3]
  %v2646 = vld [vmem:[#allocation3] ss:$16 sm:$0xc]
  %v2647 = vor.u32 %v2645, %v2646
  %v2648 = vld [vmem:[#allocation3] ss:$16 sm:$0x30]
  %v2649 = vor.u32 %v2647, %v2648
  %v2650 = vld [vmem:[#allocation3] ss:$16 sm:$0xc0]
  %v2651 = vor.u32 %v2649, %v2650
  %s2652 = scalar_lea.vmem [#allocation3], 1
  %v2653 = vld [vmem:[%s2652] ss:$16 sm:$0x3]
  %v2654 = vld [vmem:[%s2652] ss:$16 sm:$0xc]
  %v2655 = vor.u32 %v2653, %v2654
  %v2656 = vld [vmem:[%s2652] ss:$16 sm:$0x30]
  %v2657 = vor.u32 %v2655, %v2656
  %v2658 = vld [vmem:[%s2652] ss:$16 sm:$0xc0]
  %v2659 = vor.u32 %v2657, %v2658
  %v2660 = vmax.f32 %v2651, %v2659
  %v2661 = vld [vmem:[%s4] sm:$0x1]
  %v2663 = vlaneseq
  %v2664 = vshrl.u32 %v2663, 7
  %v2665 = vsub.s32 0, %v2664
  %v2666 = vrot.slane %v2661, %v2665
  %v2668 = vadd.f32 %v2660, %v2666
  %v2669 = vmul.f32 %v2668, 0.5
  %v2670 = vtanh.pop %v2669
  %v2671 = vmul.f32 %v2670, 0.5
  %v2672 = vadd.f32 %v2671, 0.5
  %s2673 = scalar_lea.vmem [#allocation3], 2
  %v2674 = vld [vmem:[%s2673] ss:$16 sm:$0x3]
  %v2675 = vld [vmem:[%s2673] ss:$16 sm:$0xc]
  %v2676 = vor.u32 %v2674, %v2675
  %v2677 = vld [vmem:[%s2673] ss:$16 sm:$0x30]
  %v2678 = vor.u32 %v2676, %v2677
  %v2679 = vld [vmem:[%s2673] ss:$16 sm:$0xc0]
  %v2680 = vor.u32 %v2678, %v2679
  %s2681 = scalar_lea.vmem [#allocation3], 3
  %v2682 = vld [vmem:[%s2681] ss:$16 sm:$0x3]
  %v2683 = vld [vmem:[%s2681] ss:$16 sm:$0xc]
  %v2684 = vor.u32 %v2682, %v2683
  %v2685 = vld [vmem:[%s2681] ss:$16 sm:$0x30]
  %v2686 = vor.u32 %v2684, %v2685
  %v2687 = vld [vmem:[%s2681] ss:$16 sm:$0xc0]
  %v2688 = vor.u32 %v2686, %v2687
  %v2689 = vmax.f32 %v2680, %v2688
  %v2690 = vadd.f32 %v2689, %v2666
  %v2691 = vmul.f32 %v2690, 0.5
  %v2692 = vtanh.pop %v2691
  %v2693 = vmul.f32 %v2692, 0.5
  %v2694 = vadd.f32 %v2693, 0.5
  %s2695 = scalar_lea.vmem [#allocation3], 4
  %v2696 = vld [vmem:[%s2695] ss:$16 sm:$0x3]
  %v2697 = vld [vmem:[%s2695] ss:$16 sm:$0xc]
  %v2698 = vor.u32 %v2696, %v2697
  %v2699 = vld [vmem:[%s2695] ss:$16 sm:$0x30]
  %v2700 = vor.u32 %v2698, %v2699
  %v2701 = vld [vmem:[%s2695] ss:$16 sm:$0xc0]
  %v2702 = vor.u32 %v2700, %v2701
  %s2703 = scalar_lea.vmem [#allocation3], 5
  %v2704 = vld [vmem:[%s2703] ss:$16 sm:$0x3]
  %v2705 = vld [vmem:[%s2703] ss:$16 sm:$0xc]
  %v2706 = vor.u32 %v2704, %v2705
  %v2707 = vld [vmem:[%s2703] ss:$16 sm:$0x30]
  %v2708 = vor.u32 %v2706, %v2707
  %v2709 = vld [vmem:[%s2703] ss:$16 sm:$0xc0]
  %v2710 = vor.u32 %v2708, %v2709
  %v2711 = vmax.f32 %v2702, %v2710
  %v2712 = vadd.f32 %v2711, %v2666
  %v2713 = vmul.f32 %v2712, 0.5
  %v2714 = vtanh.pop %v2713
  %v2715 = vmul.f32 %v2714, 0.5
  %v2716 = vadd.f32 %v2715, 0.5
  %s2717 = scalar_lea.vmem [#allocation3], 6
  %v2718 = vld [vmem:[%s2717] ss:$16 sm:$0x3]
  %v2719 = vld [vmem:[%s2717] ss:$16 sm:$0xc]
  %v2720 = vor.u32 %v2718, %v2719
  %v2721 = vld [vmem:[%s2717] ss:$16 sm:$0x30]
  %v2722 = vor.u32 %v2720, %v2721
  %v2723 = vld [vmem:[%s2717] ss:$16 sm:$0xc0]
  %v2724 = vor.u32 %v2722, %v2723
  %s2725 = scalar_lea.vmem [#allocation3], 7
  %v2726 = vld [vmem:[%s2725] ss:$16 sm:$0x3]
  %v2727 = vld [vmem:[%s2725] ss:$16 sm:$0xc]
  %v2728 = vor.u32 %v2726, %v2727
  %v2729 = vld [vmem:[%s2725] ss:$16 sm:$0x30]
  %v2730 = vor.u32 %v2728, %v2729
  %v2731 = vld [vmem:[%s2725] ss:$16 sm:$0xc0]
  %v2732 = vor.u32 %v2730, %v2731
  %v2733 = vmax.f32 %v2724, %v2732
  %v2734 = vadd.f32 %v2733, %v2666
  %v2735 = vmul.f32 %v2734, 0.5
  %v2736 = vtanh.pop %v2735
  %v2737 = vmul.f32 %v2736, 0.5
  %v2738 = vadd.f32 %v2737, 0.5
  %s2739 = scalar_lea.vmem [#allocation3], 8
  %v2740 = vld [vmem:[%s2739] ss:$16 sm:$0x3]
  %v2741 = vld [vmem:[%s2739] ss:$16 sm:$0xc]
  %v2742 = vor.u32 %v2740, %v2741
  %v2743 = vld [vmem:[%s2739] ss:$16 sm:$0x30]
  %v2744 = vor.u32 %v2742, %v2743
  %v2745 = vld [vmem:[%s2739] ss:$16 sm:$0xc0]
  %v2746 = vor.u32 %v2744, %v2745
  %s2747 = scalar_lea.vmem [#allocation3], 9
  %v2748 = vld [vmem:[%s2747] ss:$16 sm:$0x3]
  %v2749 = vld [vmem:[%s2747] ss:$16 sm:$0xc]
  %v2750 = vor.u32 %v2748, %v2749
  %v2751 = vld [vmem:[%s2747] ss:$16 sm:$0x30]
  %v2752 = vor.u32 %v2750, %v2751
  %v2753 = vld [vmem:[%s2747] ss:$16 sm:$0xc0]
  %v2754 = vor.u32 %v2752, %v2753
  %v2755 = vmax.f32 %v2746, %v2754
  %v2756 = vadd.f32 %v2755, %v2666
  %v2757 = vmul.f32 %v2756, 0.5
  %v2758 = vtanh.pop %v2757
  %v2759 = vmul.f32 %v2758, 0.5
  %v2760 = vadd.f32 %v2759, 0.5
  %2762 = vrot.lane.b32.xlu0 %v2694, 80
  %v2763 = vpop.permute.xlu0 %2762
  %2766 = vrot.lane.b32.xlu0 %v2716, 32
  %v2767 = vpop.permute.xlu0 %2766
  %2770 = vrot.lane.b32.xlu0 %v2738, 112
  %v2771 = vpop.permute.xlu0 %2770
  %2774 = vrot.lane.b32.xlu0 %v2760, 64
  %v2775 = vpop.permute.xlu0 %2774
  %v2777 = vsel %vm2000, %v2672, %v2763
  %v2778 = vsel %vm657, %v2763, %v2767
  %vm2779 = vcmask 916480
  %v2780 = vsel %vm2779, %v2778, %v2771
  %v2781 = vsel %vm690, %v2771, %v2775
  %v2782 = vld [vmem:[%s5] sm:$0xff]
  %v2783 = vld [vmem:[%s5 + $0x8] sm:$0xff]
  %v2784 = vld [vmem:[%s5 + $0x10] sm:$0xff]
  %v2785 = vld [vmem:[%s5 + $0x18] sm:$0xff]
  %v2786 = vld [vmem:[%s5 + $0x20] sm:$0xff]
  %v2787 = vld [vmem:[%s5 + $0x28] sm:$0xff]
  %v2788 = vld [vmem:[%s5 + $0x30] sm:$0xff]
  %v2789 = vld [vmem:[%s5 + $0x38] sm:$0xff]
  %v2790 = vld [vmem:[%s5 + $0x40] sm:$0xff]
  %v2791 = vld [vmem:[%s5 + $0x48] sm:$0xff]
  %v2792 = vld [vmem:[%s5 + $0x50] sm:$0xff]
  %v2793 = vld [vmem:[%s5 + $0x58] sm:$0xff]
  %v2794 = vld [vmem:[%s5 + $0x60] sm:$0xff]
  %v2795 = vld [vmem:[%s5 + $0x68] sm:$0xff]
  %v2796 = vld [vmem:[%s5 + $0x70] sm:$0xff]
  %v2797 = vld [vmem:[%s5 + $0x78] sm:$0xff]
  %v2798 = vld [vmem:[%s5 + $0x80] sm:$0xff]
  %v2799 = vld [vmem:[%s5 + $0x88] sm:$0xff]
  %v2800 = vld [vmem:[%s5 + $0x90] sm:$0xff]
  %v2801 = vld [vmem:[%s5 + $0x98] sm:$0xff]
  %v2802 = vld [vmem:[%s5 + $0xa0] sm:$0xff]
  %v2803 = vld [vmem:[%s5 + $0xa8] sm:$0xff]
  %v2804 = vld [vmem:[%s5 + $0xb0] sm:$0xff]
  %v2805 = vld [vmem:[%s5 + $0xb8] sm:$0xff]
  %v2806 = vld [vmem:[%s5 + $0xc0] sm:$0xff]
  %v2807 = vld [vmem:[%s5 + $0xc8] sm:$0xff]
  %v2808 = vld [vmem:[%s5 + $0xd0] sm:$0xff]
  %v2809 = vld [vmem:[%s5 + $0xd8] sm:$0xff]
  %v2810 = vld [vmem:[%s5 + $0xe0] sm:$0xff]
  %v2811 = vld [vmem:[%s5 + $0xe8] sm:$0xff]
  %v2812 = vld [vmem:[%s5 + $0xf0] sm:$0xff]
  %v2813 = vld [vmem:[%s5 + $0xf8] sm:$0xff]
  %v2814 = vld [vmem:[%s5 + $0x100] sm:$0xff]
  %v2815 = vld [vmem:[%s5 + $0x108] sm:$0xff]
  %v2816 = vld [vmem:[%s5 + $0x110] sm:$0xff]
  %v2817 = vld [vmem:[%s5 + $0x118] sm:$0xff]
  %v2818 = vld [vmem:[%s5 + $0x120] sm:$0xff]
  %v2819 = vld [vmem:[%s5 + $0x128] sm:$0xff]
  %v2820 = vld [vmem:[%s5 + $0x130] sm:$0xff]
  %v2821 = vld [vmem:[%s5 + $0x138] sm:$0xff]
  %v2822 = vld [vmem:[%s5 + $0x140] sm:$0xff]
  %v2823 = vld [vmem:[%s5 + $0x148] sm:$0xff]
  %v2824 = vld [vmem:[%s5 + $0x150] sm:$0xff]
  %v2825 = vld [vmem:[%s5 + $0x158] sm:$0xff]
  %v2826 = vld [vmem:[%s5 + $0x160] sm:$0xff]
  %v2827 = vld [vmem:[%s5 + $0x168] sm:$0xff]
  %v2828 = vld [vmem:[%s5 + $0x170] sm:$0xff]
  %v2829 = vld [vmem:[%s5 + $0x178] sm:$0xff]
  %v2830 = vld [vmem:[%s5 + $0x180] sm:$0xff]
  %v2831 = vld [vmem:[%s5 + $0x188] sm:$0xff]
  %v2832 = vld [vmem:[%s6] sm:$0x1]
  %v2834 = vlaneseq
  %v2835 = vshrl.u32 %v2834, 7
  %v2836 = vsub.s32 0, %v2835
  %v2837 = vrot.slane %v2832, %v2836
  %vm2839 = vcmask 130048
  %v2840 = vsel %vm2839, %v2775, 0
  %2842 = vmatprep.subr.mxu0 0.0
  %2843 = vmatpush1.msra.mxu0 %v2782
  %2844 = vmatprep.subr.mxu0 0.0
  %2845 = vmatpush1.msra.mxu0 %v2783
  %2846 = vmatprep.subr.mxu0 0.0
  %2847 = vmatpush1.msra.mxu0 %v2784
  %2848 = vmatprep.subr.mxu0 0.0
  %2849 = vmatpush1.msra.mxu0 %v2785
  %2850 = vmatprep.subr.mxu0 0.0
  %2851 = vmatpush1.msra.mxu0 %v2786
  %2852 = vmatprep.subr.mxu0 0.0
  %2853 = vmatpush1.msra.mxu0 %v2787
  %2854 = vmatprep.subr.mxu0 0.0
  %2855 = vmatpush1.msra.mxu0 %v2788
  %2856 = vmatprep.subr.mxu0 0.0
  %2857 = vmatpush1.msra.mxu0 %v2789
  %2858 = vmatprep.subr.mxu0 0.0
  %2859 = vmatpush1.msra.mxu0 %v2790
  %2860 = vmatprep.subr.mxu0 0.0
  %2861 = vmatpush1.msra.mxu0 %v2791
  %2862 = vmatprep.subr.mxu0 0.0
  %2863 = vmatpush1.msra.mxu0 %v2792
  %2864 = vmatprep.subr.mxu0 0.0
  %2865 = vmatpush1.msra.mxu0 %v2793
  %2866 = vmatprep.subr.mxu0 0.0
  %2867 = vmatpush1.msra.mxu0 %v2794
  %2868 = vmatprep.subr.mxu0 0.0
  %2869 = vmatpush1.msra.mxu0 %v2795
  %2870 = vmatprep.subr.mxu0 0.0
  %2871 = vmatpush1.msra.mxu0 %v2796
  %2872 = vmatprep.subr.mxu0 0.0
  %2873 = vmatpush1.msra.mxu0 %v2797
  %2874 = vmatprep.subr.mxu0 0.0
  %2875 = vmatpush1.msra.mxu0 %v2798
  %2876 = vmatprep.subr.mxu0 0.0
  %2877 = vmatpush1.msra.mxu0 %v2799
  %2878 = vmatprep.subr.mxu0 0.0
  %2879 = vmatpush1.msra.mxu0 %v2800
  %2880 = vmatprep.subr.mxu0 0.0
  %2881 = vmatpush1.msra.mxu0 %v2801
  %2882 = vmatprep.subr.mxu0 0.0
  %2883 = vmatpush1.msra.mxu0 %v2802
  %2884 = vmatprep.subr.mxu0 0.0
  %2885 = vmatpush1.msra.mxu0 %v2803
  %2886 = vmatprep.subr.mxu0 0.0
  %2887 = vmatpush1.msra.mxu0 %v2804
  %2888 = vmatprep.subr.mxu0 0.0
  %2889 = vmatpush1.msra.mxu0 %v2805
  %2890 = vmatprep.subr.mxu0 0.0
  %2891 = vmatpush1.msra.mxu0 %v2806
  %2892 = vmatprep.subr.mxu0 0.0
  %2893 = vmatpush1.msra.mxu0 %v2807
  %2894 = vmatprep.subr.mxu0 0.0
  %2895 = vmatpush1.msra.mxu0 %v2808
  %2896 = vmatprep.subr.mxu0 0.0
  %2897 = vmatpush1.msra.mxu0 %v2809
  %2898 = vmatprep.subr.mxu0 0.0
  %2899 = vmatpush1.msra.mxu0 %v2810
  %2900 = vmatprep.subr.mxu0 0.0
  %2901 = vmatpush1.msra.mxu0 %v2811
  %2902 = vmatprep.subr.mxu0 0.0
  %2903 = vmatpush1.msra.mxu0 %v2812
  %2904 = vmatprep.subr.mxu0 0.0
  %2905 = vmatpush1.msra.mxu0 %v2813
  %2906 = vmatprep.mubr.f32.mxu0 %v2780
  %2907 = vmatmul.mubr.f32.gmra.mrb[0].mxu0 %v2777
  %v2908 = vpop.f32.mrb[0].mxu0
  %v2909 = vadd.f32 %v2837, %v2908
  %v2910 = vpop.f32.mrb[0].mxu0
  %2911 = vdwg.mxu0
  %2912 = vmatprep.subr.mxu0 0.0
  %2913 = vmatpush1.msra.mxu0 %v2814
  %2914 = vmatprep.subr.mxu0 0.0
  %2915 = vmatpush1.msra.mxu0 %v2815
  %2916 = vmatprep.subr.mxu0 0.0
  %2917 = vmatpush1.msra.mxu0 %v2816
  %2918 = vmatprep.subr.mxu0 0.0
  %2919 = vmatpush1.msra.mxu0 %v2817
  %2920 = vmatprep.subr.mxu0 0.0
  %2921 = vmatpush1.msra.mxu0 %v2818
  %2922 = vmatprep.subr.mxu0 0.0
  %2923 = vmatpush1.msra.mxu0 %v2819
  %2924 = vmatprep.subr.mxu0 0.0
  %2925 = vmatpush1.msra.mxu0 %v2820
  %2926 = vmatprep.subr.mxu0 0.0
  %2927 = vmatpush1.msra.mxu0 %v2821
  %2928 = vmatprep.subr.mxu0 0.0
  %2929 = vmatpush1.msra.mxu0 %v2822
  %2930 = vmatprep.subr.mxu0 0.0
  %2931 = vmatpush1.msra.mxu0 %v2823
  %2932 = vmatprep.subr.mxu0 0.0
  %2933 = vmatpush1.msra.mxu0 %v2824
  %2934 = vmatprep.subr.mxu0 0.0
  %2935 = vmatpush1.msra.mxu0 %v2825
  %2936 = vmatprep.subr.mxu0 0.0
  %2937 = vmatpush1.msra.mxu0 %v2826
  %2938 = vmatprep.subr.mxu0 0.0
  %2939 = vmatpush1.msra.mxu0 %v2827
  %2940 = vmatprep.subr.mxu0 0.0
  %2941 = vmatpush1.msra.mxu0 %v2828
  %2942 = vmatprep.subr.mxu0 0.0
  %2943 = vmatpush1.msra.mxu0 %v2829
  %2944 = vmatprep.subr.mxu0 0.0
  %2945 = vmatpush1.msra.mxu0 %v2830
  %2946 = vmatprep.subr.mxu0 0.0
  %2947 = vmatpush1.msra.mxu0 %v2831
  %2948 = vmatprep.subr.mxu0 0.0
  %2949 = vmatpush1.msra.mxu0 0.0
  %2950 = vmatprep.subr.mxu0 0.0
  %2951 = vmatpush1.msra.mxu0 0.0
  %2952 = vmatprep.subr.mxu0 0.0
  %2953 = vmatpush1.msra.mxu0 0.0
  %2954 = vmatprep.subr.mxu0 0.0
  %2955 = vmatpush1.msra.mxu0 0.0
  %2956 = vmatprep.subr.mxu0 0.0
  %2957 = vmatpush1.msra.mxu0 0.0
  %2958 = vmatprep.subr.mxu0 0.0
  %2959 = vmatpush1.msra.mxu0 0.0
  %2960 = vmatprep.subr.mxu0 0.0
  %2961 = vmatpush1.msra.mxu0 0.0
  %2962 = vmatprep.subr.mxu0 0.0
  %2963 = vmatpush1.msra.mxu0 0.0
  %2964 = vmatprep.subr.mxu0 0.0
  %2965 = vmatpush1.msra.mxu0 0.0
  %2966 = vmatprep.subr.mxu0 0.0
  %2967 = vmatpush1.msra.mxu0 0.0
  %2968 = vmatprep.subr.mxu0 0.0
  %2969 = vmatpush1.msra.mxu0 0.0
  %2970 = vmatprep.subr.mxu0 0.0
  %2971 = vmatpush1.msra.mxu0 0.0
  %2972 = vmatprep.subr.mxu0 0.0
  %2973 = vmatpush1.msra.mxu0 0.0
  %2974 = vmatprep.subr.mxu0 0.0
  %2975 = vmatpush1.msra.mxu0 0.0
  %2976 = vmatprep.mubr.f32.mxu0 %v2840
  %2977 = vmatmul.mubr.f32.gmra.mrb[0].mxu0 %v2781
  %v2978 = vpop.f32.mrb[0].mxu0
  %v2979 = vadd.f32 %v2909, %v2978
  %v2980 = vpop.f32.mrb[0].mxu0
  %2981 = vdwg.mxu0
  %v2982 = vmul.f32 %v2979, 0.5
  %v2983 = vtanh.pop %v2982
  %v2984 = vmul.f32 %v2983, 0.5
  %v2985 = vadd.f32 %v2984, 0.5
  %v2986 = vld [vmem:[%s7] sm:$0xff]
  %v2987 = vld [vmem:[%s7 + $0x8] sm:$0xff]
  %v2988 = vld [vmem:[%s7 + $0x10] sm:$0xff]
  %v2989 = vld [vmem:[%s7 + $0x18] sm:$0xff]
  %v2990 = vld [vmem:[%s7 + $0x20] sm:$0xff]
  %v2991 = vld [vmem:[%s7 + $0x28] sm:$0xff]
  %v2992 = vld [vmem:[%s7 + $0x30] sm:$0xff]
  %v2993 = vld [vmem:[%s7 + $0x38] sm:$0xff]
  %v2994 = vld [vmem:[%s7 + $0x40] sm:$0xff]
  %v2995 = vld [vmem:[%s7 + $0x48] sm:$0xff]
  %v2996 = vld [vmem:[%s7 + $0x50] sm:$0xff]
  %v2997 = vld [vmem:[%s7 + $0x58] sm:$0xff]
  %v2998 = vld [vmem:[%s7 + $0x60] sm:$0xff]
  %v2999 = vld [vmem:[%s7 + $0x68] sm:$0xff]
  %v3000 = vld [vmem:[%s7 + $0x70] sm:$0xff]
  %v3001 = vld [vmem:[%s7 + $0x78] sm:$0xff]
  %v3002 = vld [vmem:[%s8] sm:$0x1]
  %v3004 = vlaneseq
  %v3005 = vshrl.u32 %v3004, 7
  %v3006 = vsub.s32 0, %v3005
  %v3007 = vrot.slane %v3002, %v3006
  %3009 = vmatprep.subr.mxu0 0.0
  %3010 = vmatpush1.msra.mxu0 %v2986
  %3011 = vmatprep.subr.mxu0 0.0
  %3012 = vmatpush1.msra.mxu0 %v2987
  %3013 = vmatprep.subr.mxu0 0.0
  %3014 = vmatpush1.msra.mxu0 %v2988
  %3015 = vmatprep.subr.mxu0 0.0
  %3016 = vmatpush1.msra.mxu0 %v2989
  %3017 = vmatprep.subr.mxu0 0.0
  %3018 = vmatpush1.msra.mxu0 %v2990
  %3019 = vmatprep.subr.mxu0 0.0
  %3020 = vmatpush1.msra.mxu0 %v2991
  %3021 = vmatprep.subr.mxu0 0.0
  %3022 = vmatpush1.msra.mxu0 %v2992
  %3023 = vmatprep.subr.mxu0 0.0
  %3024 = vmatpush1.msra.mxu0 %v2993
  %3025 = vmatprep.subr.mxu0 0.0
  %3026 = vmatpush1.msra.mxu0 %v2994
  %3027 = vmatprep.subr.mxu0 0.0
  %3028 = vmatpush1.msra.mxu0 %v2995
  %3029 = vmatprep.subr.mxu0 0.0
  %3030 = vmatpush1.msra.mxu0 %v2996
  %3031 = vmatprep.subr.mxu0 0.0
  %3032 = vmatpush1.msra.mxu0 %v2997
  %3033 = vmatprep.subr.mxu0 0.0
  %3034 = vmatpush1.msra.mxu0 %v2998
  %3035 = vmatprep.subr.mxu0 0.0
  %3036 = vmatpush1.msra.mxu0 %v2999
  %3037 = vmatprep.subr.mxu0 0.0
  %3038 = vmatpush1.msra.mxu0 %v3000
  %3039 = vmatprep.subr.mxu0 0.0
  %3040 = vmatpush1.msra.mxu0 %v3001
  %3041 = vmatprep.subr.mxu0 0.0
  %3042 = vmatpush1.msra.mxu0 0.0
  %3043 = vmatprep.subr.mxu0 0.0
  %3044 = vmatpush1.msra.mxu0 0.0
  %3045 = vmatprep.subr.mxu0 0.0
  %3046 = vmatpush1.msra.mxu0 0.0
  %3047 = vmatprep.subr.mxu0 0.0
  %3048 = vmatpush1.msra.mxu0 0.0
  %3049 = vmatprep.subr.mxu0 0.0
  %3050 = vmatpush1.msra.mxu0 0.0
  %3051 = vmatprep.subr.mxu0 0.0
  %3052 = vmatpush1.msra.mxu0 0.0
  %3053 = vmatprep.subr.mxu0 0.0
  %3054 = vmatpush1.msra.mxu0 0.0
  %3055 = vmatprep.subr.mxu0 0.0
  %3056 = vmatpush1.msra.mxu0 0.0
  %3057 = vmatprep.subr.mxu0 0.0
  %3058 = vmatpush1.msra.mxu0 0.0
  %3059 = vmatprep.subr.mxu0 0.0
  %3060 = vmatpush1.msra.mxu0 0.0
  %3061 = vmatprep.subr.mxu0 0.0
  %3062 = vmatpush1.msra.mxu0 0.0
  %3063 = vmatprep.subr.mxu0 0.0
  %3064 = vmatpush1.msra.mxu0 0.0
  %3065 = vmatprep.subr.mxu0 0.0
  %3066 = vmatpush1.msra.mxu0 0.0
  %3067 = vmatprep.subr.mxu0 0.0
  %3068 = vmatpush1.msra.mxu0 0.0
  %3069 = vmatprep.subr.mxu0 0.0
  %3070 = vmatpush1.msra.mxu0 0.0
  %3071 = vmatprep.subr.mxu0 0.0
  %3072 = vmatpush1.msra.mxu0 0.0
  %3073 = vmatprep.mubr.f32.mxu0 0.0
  %3074 = vmatmul.mubr.f32.gmra.mrb[0].mxu0 %v2985
  %v3075 = vpop.f32.mrb[0].mxu0
  %v3076 = vadd.f32 %v3007, %v3075
  %v3077 = vpop.f32.mrb[0].mxu0
  %3078 = vdwg.mxu0
  %v3079 = vmul.f32 %v3076, 0.5
  %v3080 = vtanh.pop %v3079
  %v3081 = vmul.f32 %v3080, 0.5
  %v3082 = vadd.f32 %v3081, 0.5
  %v3083 = vld [vmem:[%s9] sm:$0xff]
  %v3084 = vld [vmem:[%s9 + $0x8] sm:$0xff]
  %v3085 = vld [vmem:[%s9 + $0x10] sm:$0xff]
  %v3086 = vld [vmem:[%s9 + $0x18] sm:$0xff]
  %v3087 = vld [vmem:[%s9 + $0x20] sm:$0xff]
  %v3088 = vld [vmem:[%s9 + $0x28] sm:$0xff]
  %v3089 = vld [vmem:[%s9 + $0x30] sm:$0xff]
  %v3090 = vld [vmem:[%s9 + $0x38] sm:$0xff]
  %v3091 = vld [vmem:[%s9 + $0x40] sm:$0xff]
  %v3092 = vld [vmem:[%s9 + $0x48] sm:$0xff]
  %v3093 = vld [vmem:[%s9 + $0x50] sm:$0xff]
  %v3094 = vld [vmem:[%s9 + $0x58] sm:$0xff]
  %v3095 = vld [vmem:[%s9 + $0x60] sm:$0xff]
  %v3096 = vld [vmem:[%s9 + $0x68] sm:$0xff]
  %v3097 = vld [vmem:[%s9 + $0x70] sm:$0xff]
  %v3098 = vld [vmem:[%s9 + $0x78] sm:$0xff]
  %v3099 = vld [vmem:[%s10] sm:$0x1]
  %v3101 = vlaneseq
  %v3102 = vshrl.u32 %v3101, 7
  %v3103 = vsub.s32 0, %v3102
  %v3104 = vrot.slane %v3099, %v3103
  %3106 = vmatprep.subr.mxu0 0.0
  %3107 = vmatpush1.msra.mxu0 %v3083
  %3108 = vmatprep.subr.mxu0 0.0
  %3109 = vmatpush1.msra.mxu0 %v3084
  %3110 = vmatprep.subr.mxu0 0.0
  %3111 = vmatpush1.msra.mxu0 %v3085
  %3112 = vmatprep.subr.mxu0 0.0
  %3113 = vmatpush1.msra.mxu0 %v3086
  %3114 = vmatprep.subr.mxu0 0.0
  %3115 = vmatpush1.msra.mxu0 %v3087
  %3116 = vmatprep.subr.mxu0 0.0
  %3117 = vmatpush1.msra.mxu0 %v3088
  %3118 = vmatprep.subr.mxu0 0.0
  %3119 = vmatpush1.msra.mxu0 %v3089
  %3120 = vmatprep.subr.mxu0 0.0
  %3121 = vmatpush1.msra.mxu0 %v3090
  %3122 = vmatprep.subr.mxu0 0.0
  %3123 = vmatpush1.msra.mxu0 %v3091
  %3124 = vmatprep.subr.mxu0 0.0
  %3125 = vmatpush1.msra.mxu0 %v3092
  %3126 = vmatprep.subr.mxu0 0.0
  %3127 = vmatpush1.msra.mxu0 %v3093
  %3128 = vmatprep.subr.mxu0 0.0
  %3129 = vmatpush1.msra.mxu0 %v3094
  %3130 = vmatprep.subr.mxu0 0.0
  %3131 = vmatpush1.msra.mxu0 %v3095
  %3132 = vmatprep.subr.mxu0 0.0
  %3133 = vmatpush1.msra.mxu0 %v3096
  %3134 = vmatprep.subr.mxu0 0.0
  %3135 = vmatpush1.msra.mxu0 %v3097
  %3136 = vmatprep.subr.mxu0 0.0
  %3137 = vmatpush1.msra.mxu0 %v3098
  %3138 = vmatprep.subr.mxu0 0.0
  %3139 = vmatpush1.msra.mxu0 0.0
  %3140 = vmatprep.subr.mxu0 0.0
  %3141 = vmatpush1.msra.mxu0 0.0
  %3142 = vmatprep.subr.mxu0 0.0
  %3143 = vmatpush1.msra.mxu0 0.0
  %3144 = vmatprep.subr.mxu0 0.0
  %3145 = vmatpush1.msra.mxu0 0.0
  %3146 = vmatprep.subr.mxu0 0.0
  %3147 = vmatpush1.msra.mxu0 0.0
  %3148 = vmatprep.subr.mxu0 0.0
  %3149 = vmatpush1.msra.mxu0 0.0
  %3150 = vmatprep.subr.mxu0 0.0
  %3151 = vmatpush1.msra.mxu0 0.0
  %3152 = vmatprep.subr.mxu0 0.0
  %3153 = vmatpush1.msra.mxu0 0.0
  %3154 = vmatprep.subr.mxu0 0.0
  %3155 = vmatpush1.msra.mxu0 0.0
  %3156 = vmatprep.subr.mxu0 0.0
  %3157 = vmatpush1.msra.mxu0 0.0
  %3158 = vmatprep.subr.mxu0 0.0
  %3159 = vmatpush1.msra.mxu0 0.0
  %3160 = vmatprep.subr.mxu0 0.0
  %3161 = vmatpush1.msra.mxu0 0.0
  %3162 = vmatprep.subr.mxu0 0.0
  %3163 = vmatpush1.msra.mxu0 0.0
  %3164 = vmatprep.subr.mxu0 0.0
  %3165 = vmatpush1.msra.mxu0 0.0
  %3166 = vmatprep.subr.mxu0 0.0
  %3167 = vmatpush1.msra.mxu0 0.0
  %3168 = vmatprep.subr.mxu0 0.0
  %3169 = vmatpush1.msra.mxu0 0.0
  %3170 = vmatprep.mubr.f32.mxu0 0.0
  %3171 = vmatmul.mubr.f32.gmra.mrb[0].mxu0 %v3082
  %v3172 = vpop.f32.mrb[0].mxu0
  %v3173 = vadd.f32 %v3104, %v3172
  %v3174 = vpop.f32.mrb[0].mxu0
  %3175 = vdwg.mxu0
  %3176 = vst [vmem:[%s11] sm:$0xff] %v3173
  // Predicated region
  $region46: #{lenet_forward.1} parent=0 // pred_check
    _
  $region47: #{lenet_forward.1} parent=0 // pred_check_branch
    %3178 = sbr.rel (0) target = $region49
  $region48: #{lenet_forward.1} parent=0 // pred_region
    _
  $region49: #{lenet_forward.1} parent=0 // pred_fallthru
    _
  // Predicated region
  $region50: #{lenet_forward.1} parent=0 // pred_check
    _
  $region51: #{lenet_forward.1} parent=0 // pred_check_branch
    %3180 = sbr.rel (0) target = $region53
  $region52: #{lenet_forward.1} parent=0 // pred_region
    _
  $region53: #{lenet_forward.1} parent=0 // pred_fallthru
    _

</llo_original>
